<compile_context>
chip_gen: v5e
topology: v5e:2x2
jax: 0.10.0
libtpu: 0.0.40
codegen_flags: <defaults>
</compile_context>

<pallas_src>
import functools

import numpy as np
import jax
import jax.numpy as jnp
from jax.experimental import pallas as pl
from jax.experimental.pallas import tpu as pltpu

D_MODEL = 128      # lang_od == pc_od in the reference block
REL_RAW = 10       # geometric relation feature dim in the PyTorch module
REL_PAD = 16       # padded to a bf16 sublane tile so slab offsets stay aligned


# ------------------------------ Pallas kernel ------------------------------

def _build_block_kernel(w1_offs, w1_dins, kp1):
    """Fused 3-layer TARelationConv block kernel.

    w1_offs / w1_dins are static Python ints describing where each encoder's
    first-layer weight lives inside the packed w1 slab.  Slab order is
    layer-major with encoders (feat, lang, rel); every offset/length is a
    multiple of 16 (the bf16 sublane tile), the rel block being zero-padded
    from 10 to 16 input rows.
    """

    def kernel(feat_ref, lang_ref, rel_ref, onehot_ref, mask_ref,
               w1_ref, w2_ref, b1_ref, b2_ref, ffnw_ref, ffnb_ref,
               feat_out_ref, score_ref):
        bblk, n_obj, _ = feat_ref.shape
        rows = onehot_ref.shape[1]          # kp1 * n_obj, neighbor-major
        n_lang = lang_ref.shape[1]

        def mlp(x2d, layer, enc):
            """Linear -> ReLU -> Linear; bf16 MXU operands, f32 accum/bias."""
            idx = layer * 3 + enc
            din = w1_dins[idx]
            w1 = w1_ref[w1_offs[idx]:w1_offs[idx] + din, :]          # bf16
            w2 = w2_ref[idx * D_MODEL:(idx + 1) * D_MODEL, :]        # bf16
            h = jnp.dot(x2d.astype(jnp.bfloat16), w1,
                        preferred_element_type=jnp.float32)
            h = jnp.maximum(h + b1_ref[idx:idx + 1, :], 0.0)
            out = jnp.dot(h.astype(jnp.bfloat16), w2,
                          preferred_element_type=jnp.float32)
            return out + b2_ref[idx:idx + 1, :]

        lang2d = lang_ref[...].reshape(bblk * n_lang, lang_ref.shape[2])
        rel2d = rel_ref[...].reshape(bblk * rows, rel_ref.shape[2])
        onehot = onehot_ref[...]                                     # bf16 0/1
        mask = mask_ref[...]                                         # (b,1,L)

        feat = feat_ref[...]                                         # f32
        for layer in range(3):                       # fused conv/conv1/conv2
            din = feat.shape[-1]
            feat_e = mlp(feat.reshape(bblk * n_obj, din), layer, 0
                         ).reshape(bblk, n_obj, D_MODEL)
            lang_e = mlp(lang2d, layer, 1).reshape(bblk, n_lang, D_MODEL)
            rel_e = mlp(rel2d, layer, 2).reshape(bblk, rows, D_MODEL)

            # Neighbor gather as a one-hot matmul on the MXU.  feat_e is split
            # into exact bf16 hi/lo halves so the gather reproduces the f32
            # values to <= 2^-17 (a plain f32 dot would round through a single
            # bf16 MXU pass and is not a faithful gather).
            fe_hi = feat_e.astype(jnp.bfloat16)
            fe_lo = (feat_e - fe_hi.astype(jnp.float32)).astype(jnp.bfloat16)
            fnb = (jnp.einsum('brn,bnd->brd', onehot, fe_hi,
                              preferred_element_type=jnp.float32)
                   + jnp.einsum('brn,bnd->brd', onehot, fe_lo,
                                preferred_element_type=jnp.float32))

            # Language attention with fused-epsilon masked softmax:
            #   softmax(s)*mask / (sum(softmax(s)*mask) + 1e-7)
            #     == e*mask / (sum(e*mask) + 1e-7 * sum(e))
            lang_bf = lang_e.astype(jnp.bfloat16)
            logits = jnp.einsum('brd,bld->brl', fnb.astype(jnp.bfloat16),
                                lang_bf, preferred_element_type=jnp.float32)
            m = jnp.max(logits, axis=-1, keepdims=True)
            e = jnp.exp(logits - m)
            z = jnp.sum(e, axis=-1, keepdims=True)
            em = e * mask
            sm = jnp.sum(em, axis=-1, keepdims=True)
            # Exact reciprocal (approx=True EUP variant is free but the exact
            # one lets the parity check run at 5e-3 instead of 2e-2).
            attn = em * pl.reciprocal(sm + 1e-7 * z, approx=False)

            ins = jnp.einsum('brl,bld->brd', attn.astype(jnp.bfloat16),
                             lang_bf, preferred_element_type=jnp.float32)

            contrib = fnb * ins * rel_e                              # f32

            acc = feat_e                                             # residual
            for j in range(kp1):      # static unrolled k+1 neighbor reduction
                acc = acc + contrib[:, j * n_obj:(j + 1) * n_obj, :]
            feat = jnp.maximum(acc, 0.0)                             # block ReLU

        feat_out_ref[...] = feat
        # ffn score head, final layer only (VPU multiply + lane reduce, f32).
        score = jnp.sum(feat * ffnw_ref[...], axis=-1)               # (b, N)
        score_ref[...] = score.reshape(bblk, 1, n_obj) + ffnb_ref[...]

    return kernel


# ------------------------- host-side packing / glue ------------------------

def _pack_weights(weights):
    """Pack the 9 encoder MLPs into 4 aligned slabs (bf16 weights, f32 bias).

    Order is layer-major, encoders (feat, lang, rel).  rel first-layer weights
    are zero-padded 10 -> 16 input rows (the rel features are zero-padded to
    match) so every slab offset is a multiple of the bf16 sublane tile.
    """
    w1_parts, w2_parts, b1_parts, b2_parts = [], [], [], []
    w1_offs, w1_dins = [], []
    off = 0
    for lname in ('conv', 'conv1', 'conv2'):
        for ename in ('feat', 'lang', 'rel'):
            p = weights[lname][ename]
            w1 = p['w1']
            if ename == 'rel':
                w1 = jnp.pad(w1, ((0, REL_PAD - REL_RAW), (0, 0)))
            w1_offs.append(off)
            w1_dins.append(w1.shape[0])
            off += w1.shape[0]
            w1_parts.append(w1)
            w2_parts.append(p['w2'])
            b1_parts.append(p['b1'])
            b2_parts.append(p['b2'])
    w1_all = jnp.concatenate(w1_parts, axis=0).astype(jnp.bfloat16)
    w2_all = jnp.concatenate(w2_parts, axis=0).astype(jnp.bfloat16)  # (9*128,128)
    b1_all = jnp.concatenate(b1_parts, axis=0)                       # (9,128) f32
    b2_all = jnp.concatenate(b2_parts, axis=0)                       # (9,128) f32
    return w1_all, w2_all, b1_all, b2_all, tuple(w1_offs), tuple(w1_dins)


def _block_geometry(coord, lang_len, max_len, k):
    """kNN, relation features, one-hot gather matrix and language mask.

    Depends only on coord / lang_len, so it is computed ONCE per block call
    and shared by the three fused layers (neighbor-major layout: row j*N+i).
    """
    B, N, _ = coord.shape
    kp1 = min(k, N - 1) + 1
    d2 = jnp.sum((coord[:, :, None, :] - coord[:, None, :, :]) ** 2, axis=-1)
    _, idx = jax.lax.top_k(-d2, kp1)                        # (B, N, kp1)
    bidx = jnp.arange(B)[:, None, None]
    coord_nb = coord[bidx, idx]                             # (B, N, kp1, 3)
    coord_c = jnp.broadcast_to(coord[:, :, None, :], coord_nb.shape)
    rel_coord = coord_nb - coord_c
    dist = jnp.sqrt(jnp.sum(rel_coord ** 2, axis=-1, keepdims=True))
    rel = jnp.concatenate([coord_nb, coord_c, rel_coord, dist], axis=-1)

    rel_nm = jnp.transpose(rel, (0, 2, 1, 3)).reshape(B, kp1 * N, REL_RAW)
    rel_nm = jnp.pad(rel_nm, ((0, 0), (0, 0), (0, REL_PAD - REL_RAW)))
    idx_nm = jnp.transpose(idx, (0, 2, 1)).reshape(B, kp1 * N)
    onehot = (idx_nm[..., None] == jnp.arange(N)[None, None, :]
              ).astype(jnp.bfloat16)                        # exact 0/1 in bf16
    mask = (jnp.arange(max_len)[None, :] < lang_len[:, None]
            ).astype(jnp.float32)[:, None, :]               # (B, 1, L)
    return rel_nm.astype(jnp.bfloat16), onehot, mask, kp1


@functools.partial(jax.jit, static_argnames=('k', 'sen_per_step'))
def _block_forward(weights, feat, coord, lang_feat, lang_len, *, k,
                   sen_per_step):
    B, N, _ = feat.shape
    L = lang_feat.shape[1]
    assert B % sen_per_step == 0, "sen_per_step must divide num_sen"

    w1_all, w2_all, b1_all, b2_all, w1_offs, w1_dins = _pack_weights(weights)
    rel_nm, onehot, mask, kp1 = _block_geometry(coord, lang_len, L, k)
    lang_bf = lang_feat.astype(jnp.bfloat16)                # MXU operand only
    ffn_w, ffn_b = weights['ffn_w'], weights['ffn_b']       # f32 (elementwise)

    kernel = _build_block_kernel(w1_offs, w1_dins, kp1)

    bblk = sen_per_step
    grid = (B // bblk,)

    def data_spec(shape):
        nd = len(shape)
        return pl.BlockSpec((bblk,) + tuple(shape[1:]),
                            lambda g, _n=nd: (g,) + (0,) * (_n - 1))

    def const_spec(arr):
        nd = arr.ndim
        return pl.BlockSpec(arr.shape, lambda g, _n=nd: (0,) * _n)

    in_arrays = (feat, lang_bf, rel_nm, onehot, mask,
                 w1_all, w2_all, b1_all, b2_all, ffn_w, ffn_b)
    in_specs = ([data_spec(a.shape) for a in in_arrays[:5]]
                + [const_spec(a) for a in in_arrays[5:]])

    out_shape = (jax.ShapeDtypeStruct((B, N, D_MODEL), jnp.float32),
                 jax.ShapeDtypeStruct((B, 1, N), jnp.float32))
    out_specs = (pl.BlockSpec((bblk, N, D_MODEL), lambda g: (g, 0, 0)),
                 pl.BlockSpec((bblk, 1, N), lambda g: (g, 0, 0)))

    out_feat, score3 = pl.pallas_call(
        kernel,
        out_shape=out_shape,
        grid_spec=pltpu.PrefetchScalarGridSpec(
            num_scalar_prefetch=0,
            grid=grid,
            in_specs=in_specs,
            out_specs=out_specs),
        compiler_params=pltpu.CompilerParams(
            dimension_semantics=("parallel",)),
    )(*in_arrays)
    return out_feat, score3[:, 0, :]


def ta_relation_conv_block(params, feat, coord, lang_feat, lang_len,
                           sen_per_step=None):
    B = feat.shape[0]
    if sen_per_step is None:
        # >= 2 grid steps keeps both v7x TensorCores busy; on single-TC
        # v5e/v6e pass sen_per_step=B to amortize per-step overhead.
        sen_per_step = 1 if B > 1 else B
    weights = {n: params[n] for n in
               ('conv', 'conv1', 'conv2', 'ffn_w', 'ffn_b')}
    return _block_forward(weights, feat, coord, lang_feat, lang_len,
                          k=params['k'], sen_per_step=sen_per_step)


# ------------------------- parameter initialization ------------------------

def init_linear(key, din, dout):
    k1, k2 = jax.random.split(key)
    lim = 1.0 / np.sqrt(din)
    w = jax.random.uniform(k1, (din, dout), jnp.float32, -lim, lim)
    b = jax.random.uniform(k2, (1, dout), jnp.float32, -lim, lim)
    return w, b


def init_mlp(key, din, dh, dout):
    k1, k2 = jax.random.split(key)
    w1, b1 = init_linear(k1, din, dh)
    w2, b2 = init_linear(k2, dh, dout)
    return dict(w1=w1, b1=b1, w2=w2, b2=b2)


def init_taconv(key, lang_id, lang_od, pc_id, pc_od):
    k1, k2, k3 = jax.random.split(key, 3)
    return dict(
        rel=init_mlp(k1, 10, lang_od, lang_od),
        lang=init_mlp(k2, lang_id, lang_od, lang_od),
        feat=init_mlp(k3, pc_id, pc_od, pc_od),
    )


def init_block(key, k):
    k1, k2, k3, k4 = jax.random.split(key, 4)
    wf, bf = init_linear(k4, 128, 1)
    return dict(
        conv=init_taconv(k1, 256, 128, 32, 128),
        conv1=init_taconv(k2, 256, 128, 128, 128),
        conv2=init_taconv(k3, 256, 128, 128, 128),
        ffn_w=wf.T,     # (1, 128)
        ffn_b=bf,       # (1, 1)
        k=k,
    )


# ------------------------- pure-JAX reference (check) ----------------------
# The reference uses the SAME MXU operand policy (bf16 operands, f32
# accumulate) as the kernel so the parity check isolates kernel-structure
# errors from the dtype policy; the gather and reciprocal in the kernel are
# (near-)exact, which is what allows the 5e-3 tolerance.

def _bf16_dot(x, w):
    return jnp.dot(x.astype(jnp.bfloat16), w.astype(jnp.bfloat16),
                   preferred_element_type=jnp.float32)


def _mlp_ref(p, x):
    h = jnp.maximum(_bf16_dot(x, p['w1']) + p['b1'], 0.0)
    return _bf16_dot(h, p['w2']) + p['b2']


def _layer_ref(p, feat, coord, lang_feat, lang_len, k):
    B, N, _ = feat.shape
    L = lang_feat.shape[1]
    kp1 = min(k, N - 1) + 1
    d2 = jnp.sum((coord[:, :, None, :] - coord[:, None, :, :]) ** 2, axis=-1)
    _, idx = jax.lax.top_k(-d2, kp1)
    bidx = jnp.arange(B)[:, None, None]
    coord_nb = coord[bidx, idx]
    coord_c = jnp.broadcast_to(coord[:, :, None, :], coord_nb.shape)
    rel_coord = coord_nb - coord_c
    dist = jnp.sqrt(jnp.sum(rel_coord ** 2, axis=-1, keepdims=True))
    rel = jnp.concatenate([coord_nb, coord_c, rel_coord, dist], axis=-1)
    rel_e = _mlp_ref(p['rel'], rel)                           # (B,N,kp1,D)
    mask = (jnp.arange(L)[None, :] < lang_len[:, None]
            ).astype(jnp.float32)[:, None, :]
    lang_e = _mlp_ref(p['lang'], lang_feat)                   # (B,L,D)
    feat_e = _mlp_ref(p['feat'], feat)                        # (B,N,D)
    fnb = feat_e[bidx, idx]                                   # exact gather
    fnb_flat = fnb.reshape(B, N * kp1, -1)
    logits = jnp.einsum('brd,bld->brl', fnb_flat.astype(jnp.bfloat16),
                        lang_e.astype(jnp.bfloat16),
                        preferred_element_type=jnp.float32)
    attn = jax.nn.softmax(logits, axis=-1) * mask
    attn = attn / (attn.sum(-1, keepdims=True) + 1e-7)
    ins = jnp.einsum('brl,bld->brd', attn.astype(jnp.bfloat16),
                     lang_e.astype(jnp.bfloat16),
                     preferred_element_type=jnp.float32).reshape(B, N, kp1, -1)
    return (fnb * ins * rel_e).sum(2) + feat_e


def _block_ref(params, feat, coord, lang_feat, lang_len):
    f = feat
    for name in ('conv', 'conv1', 'conv2'):
        f = jnp.maximum(_layer_ref(params[name], f, coord, lang_feat,
                                   lang_len, params['k']), 0.0)
    score = jnp.sum(f * params['ffn_w'], axis=-1) + params['ffn_b'][0, 0]
    return f, score


# ----------------------------------- main ----------------------------------

if __name__ == "__main__":
    key = jax.random.PRNGKey(0)
    kp, kf, kc, kl = jax.random.split(key, 4)

    B, N, L, K = 2, 16, 8, 4          # sentences, objects, max_len, k
    params = init_block(kp, K)

    feat = jax.random.normal(kf, (B, N, 32), jnp.float32)
    coord = jax.random.normal(kc, (B, N, 3), jnp.float32)
    lang_feat = jax.random.normal(kl, (B, L, 256), jnp.float32)
    lang_len = jnp.array([5, 8], dtype=jnp.int32)

    # Default path: 1 sentence per grid step (keeps both v7x TCs busy).
    out_feat, out_score = ta_relation_conv_block(params, feat, coord,
                                                 lang_feat, lang_len)
    jax.block_until_ready((out_feat, out_score))

    ref_feat, ref_score = _block_ref(params, feat, coord, lang_feat, lang_len)
    assert out_feat.shape == (B, N, 128) and out_score.shape == (B, N)
    # Kernel and reference share the bf16 MXU operand policy; the gather and
    # reciprocal are exact, so 5e-3 only needs to absorb rare 1-ulp bf16 cast
    # flips cascading through the three fused layers.
    assert jnp.allclose(out_feat, ref_feat, rtol=5e-3, atol=5e-3)
    assert jnp.allclose(out_score, ref_score, rtol=5e-3, atol=5e-3)

    # Multi-sentence-per-step path (single-TC v5e/v6e configuration).
    out_feat2, out_score2 = ta_relation_conv_block(params, feat, coord,
                                                   lang_feat, lang_len,
                                                   sen_per_step=B)
    jax.block_until_ready((out_feat2, out_score2))
    assert jnp.allclose(out_feat2, ref_feat, rtol=5e-3, atol=5e-3)
    assert jnp.allclose(out_score2, ref_score, rtol=5e-3, atol=5e-3)

    print("KERNEL_OK")
</pallas_src>

<mosaic_0001>
module attributes {stable_mosaic.version = 11 : i64} {
  func.func @kernel(%arg0: i32, %arg1: memref<1x16x32xf32, #tpu.memory_space<vmem>>, %arg2: memref<1x8x256xbf16, #tpu.memory_space<vmem>>, %arg3: memref<1x80x16xbf16, #tpu.memory_space<vmem>>, %arg4: memref<1x80x16xbf16, #tpu.memory_space<vmem>>, %arg5: memref<1x1x8xf32, #tpu.memory_space<vmem>>, %arg6: memref<1104x128xbf16, #tpu.memory_space<vmem>>, %arg7: memref<1152x128xbf16, #tpu.memory_space<vmem>>, %arg8: memref<9x128xf32, #tpu.memory_space<vmem>>, %arg9: memref<9x128xf32, #tpu.memory_space<vmem>>, %arg10: memref<1x128xf32, #tpu.memory_space<vmem>>, %arg11: memref<1x1xf32, #tpu.memory_space<vmem>>, %arg12: memref<1x16x128xf32, #tpu.memory_space<vmem>>, %arg13: memref<1x1x16xf32, #tpu.memory_space<vmem>>) attributes {dimension_semantics = [#tpu.dimension_semantics<parallel>], iteration_bounds = array<i64: 2>, scalar_prefetch = 0 : i64, scratch_operands = 0 : i64, tpu.core_type = #tpu.core_type<tc>, window_params = [{transform_indices = @transform_0, window_bounds = array<i64: 1, 16, 32>}, {transform_indices = @transform_1, window_bounds = array<i64: 1, 8, 256>}, {transform_indices = @transform_2, window_bounds = array<i64: 1, 80, 16>}, {transform_indices = @transform_3, window_bounds = array<i64: 1, 80, 16>}, {transform_indices = @transform_4, window_bounds = array<i64: 1, 1, 8>}, {pipeline_mode = #tpu.pipeline_mode<synchronous>, transform_indices = @transform_5, window_bounds = array<i64: 1104, 128>}, {pipeline_mode = #tpu.pipeline_mode<synchronous>, transform_indices = @transform_6, window_bounds = array<i64: 1152, 128>}, {pipeline_mode = #tpu.pipeline_mode<synchronous>, transform_indices = @transform_7, window_bounds = array<i64: 9, 128>}, {pipeline_mode = #tpu.pipeline_mode<synchronous>, transform_indices = @transform_8, window_bounds = array<i64: 9, 128>}, {pipeline_mode = #tpu.pipeline_mode<synchronous>, transform_indices = @transform_9, window_bounds = array<i64: 1, 128>}, {pipeline_mode = #tpu.pipeline_mode<synchronous>, transform_indices = @transform_10, window_bounds = array<i64: 1, 1>}, {transform_indices = @transform_11, window_bounds = array<i64: 1, 16, 128>}, {transform_indices = @transform_12, window_bounds = array<i64: 1, 1, 16>}]} {
    %c0 = arith.constant 0 : index
    %c0_0 = arith.constant 0 : index
    %c0_1 = arith.constant 0 : index
    %0 = vector.load %arg2[%c0, %c0_0, %c0_1] : memref<1x8x256xbf16, #tpu.memory_space<vmem>>, vector<1x8x256xbf16>
    %1 = vector.shape_cast %0 : vector<1x8x256xbf16> to vector<8x256xbf16>
    %c0_2 = arith.constant 0 : index
    %c0_3 = arith.constant 0 : index
    %c0_4 = arith.constant 0 : index
    %2 = vector.load %arg3[%c0_2, %c0_3, %c0_4] : memref<1x80x16xbf16, #tpu.memory_space<vmem>>, vector<1x80x16xbf16>
    %3 = vector.shape_cast %2 : vector<1x80x16xbf16> to vector<80x16xbf16>
    %c0_5 = arith.constant 0 : index
    %c0_6 = arith.constant 0 : index
    %c0_7 = arith.constant 0 : index
    %4 = vector.load %arg4[%c0_5, %c0_6, %c0_7] : memref<1x80x16xbf16, #tpu.memory_space<vmem>>, vector<1x80x16xbf16>
    %c0_8 = arith.constant 0 : index
    %c0_9 = arith.constant 0 : index
    %c0_10 = arith.constant 0 : index
    %5 = vector.load %arg5[%c0_8, %c0_9, %c0_10] : memref<1x1x8xf32, #tpu.memory_space<vmem>>, vector<1x1x8xf32>
    %c0_11 = arith.constant 0 : index
    %c0_12 = arith.constant 0 : index
    %c0_13 = arith.constant 0 : index
    %6 = vector.load %arg1[%c0_11, %c0_12, %c0_13] : memref<1x16x32xf32, #tpu.memory_space<vmem>>, vector<1x16x32xf32>
    %7 = vector.shape_cast %6 : vector<1x16x32xf32> to vector<16x32xf32>
    %c0_14 = arith.constant 0 : index
    %c0_15 = arith.constant 0 : index
    %8 = vector.load %arg6[%c0_14, %c0_15] : memref<1104x128xbf16, #tpu.memory_space<vmem>>, vector<32x128xbf16>
    %c0_16 = arith.constant 0 : index
    %c0_17 = arith.constant 0 : index
    %9 = vector.load %arg7[%c0_16, %c0_17] : memref<1152x128xbf16, #tpu.memory_space<vmem>>, vector<128x128xbf16>
    %10 = arith.truncf %7 : vector<16x32xf32> to vector<16x32xbf16>
    %cst = arith.constant dense<0.000000e+00> : vector<16x128xf32>
    %11 = tpu.matmul %10, %8, %cst {dimension_numbers = #tpu.dot_dimension_numbers<[1], [0], [0], [1], [0, 0, 1, 1], [], []>} : vector<16x32xbf16>, vector<32x128xbf16>, vector<16x128xf32> -> vector<16x128xf32>
    %c0_18 = arith.constant 0 : index
    %c0_19 = arith.constant 0 : index
    %12 = vector.load %arg8[%c0_18, %c0_19] : memref<9x128xf32, #tpu.memory_space<vmem>>, vector<1x128xf32>
    %13 = vector.broadcast %12 : vector<1x128xf32> to vector<16x128xf32>
    %14 = arith.addf %11, %13 : vector<16x128xf32>
    %cst_20 = arith.constant 0.000000e+00 : f32
    %15 = vector.broadcast %cst_20 : f32 to vector<16x128xf32>
    %16 = arith.maximumf %14, %15 : vector<16x128xf32>
    %17 = arith.truncf %16 : vector<16x128xf32> to vector<16x128xbf16>
    %cst_21 = arith.constant dense<0.000000e+00> : vector<16x128xf32>
    %18 = tpu.matmul %17, %9, %cst_21 {dimension_numbers = #tpu.dot_dimension_numbers<[1], [0], [0], [1], [0, 0, 1, 1], [], []>} : vector<16x128xbf16>, vector<128x128xbf16>, vector<16x128xf32> -> vector<16x128xf32>
    %c0_22 = arith.constant 0 : index
    %c0_23 = arith.constant 0 : index
    %19 = vector.load %arg9[%c0_22, %c0_23] : memref<9x128xf32, #tpu.memory_space<vmem>>, vector<1x128xf32>
    %20 = vector.broadcast %19 : vector<1x128xf32> to vector<16x128xf32>
    %21 = arith.addf %18, %20 : vector<16x128xf32>
    %22 = vector.shape_cast %21 : vector<16x128xf32> to vector<1x16x128xf32>
    %c32 = arith.constant 32 : index
    %c0_24 = arith.constant 0 : index
    %23 = vector.load %arg6[%c32, %c0_24] : memref<1104x128xbf16, #tpu.memory_space<vmem>>, vector<256x128xbf16>
    %c128 = arith.constant 128 : index
    %c0_25 = arith.constant 0 : index
    %24 = vector.load %arg7[%c128, %c0_25] : memref<1152x128xbf16, #tpu.memory_space<vmem>>, vector<128x128xbf16>
    %cst_26 = arith.constant dense<0.000000e+00> : vector<8x128xf32>
    %25 = tpu.matmul %1, %23, %cst_26 {dimension_numbers = #tpu.dot_dimension_numbers<[1], [0], [0], [1], [0, 0, 1, 1], [], []>} : vector<8x256xbf16>, vector<256x128xbf16>, vector<8x128xf32> -> vector<8x128xf32>
    %c1 = arith.constant 1 : index
    %c0_27 = arith.constant 0 : index
    %26 = vector.load %arg8[%c1, %c0_27] : memref<9x128xf32, #tpu.memory_space<vmem>>, vector<1x128xf32>
    %27 = vector.broadcast %26 : vector<1x128xf32> to vector<8x128xf32>
    %28 = arith.addf %25, %27 : vector<8x128xf32>
    %cst_28 = arith.constant 0.000000e+00 : f32
    %29 = vector.broadcast %cst_28 : f32 to vector<8x128xf32>
    %30 = arith.maximumf %28, %29 : vector<8x128xf32>
    %31 = arith.truncf %30 : vector<8x128xf32> to vector<8x128xbf16>
    %cst_29 = arith.constant dense<0.000000e+00> : vector<8x128xf32>
    %32 = tpu.matmul %31, %24, %cst_29 {dimension_numbers = #tpu.dot_dimension_numbers<[1], [0], [0], [1], [0, 0, 1, 1], [], []>} : vector<8x128xbf16>, vector<128x128xbf16>, vector<8x128xf32> -> vector<8x128xf32>
    %c1_30 = arith.constant 1 : index
    %c0_31 = arith.constant 0 : index
    %33 = vector.load %arg9[%c1_30, %c0_31] : memref<9x128xf32, #tpu.memory_space<vmem>>, vector<1x128xf32>
    %34 = vector.broadcast %33 : vector<1x128xf32> to vector<8x128xf32>
    %35 = arith.addf %32, %34 : vector<8x128xf32>
    %36 = vector.shape_cast %35 : vector<8x128xf32> to vector<1x8x128xf32>
    %c288 = arith.constant 288 : index
    %c0_32 = arith.constant 0 : index
    %37 = vector.load %arg6[%c288, %c0_32] : memref<1104x128xbf16, #tpu.memory_space<vmem>>, vector<16x128xbf16>
    %c256 = arith.constant 256 : index
    %c0_33 = arith.constant 0 : index
    %38 = vector.load %arg7[%c256, %c0_33] : memref<1152x128xbf16, #tpu.memory_space<vmem>>, vector<128x128xbf16>
    %cst_34 = arith.constant dense<0.000000e+00> : vector<80x128xf32>
    %39 = tpu.matmul %3, %37, %cst_34 {dimension_numbers = #tpu.dot_dimension_numbers<[1], [0], [0], [1], [0, 0, 1, 1], [], []>} : vector<80x16xbf16>, vector<16x128xbf16>, vector<80x128xf32> -> vector<80x128xf32>
    %c2 = arith.constant 2 : index
    %c0_35 = arith.constant 0 : index
    %40 = vector.load %arg8[%c2, %c0_35] : memref<9x128xf32, #tpu.memory_space<vmem>>, vector<1x128xf32>
    %41 = vector.broadcast %40 : vector<1x128xf32> to vector<80x128xf32>
    %42 = arith.addf %39, %41 : vector<80x128xf32>
    %cst_36 = arith.constant 0.000000e+00 : f32
    %43 = vector.broadcast %cst_36 : f32 to vector<80x128xf32>
    %44 = arith.maximumf %42, %43 : vector<80x128xf32>
    %45 = arith.truncf %44 : vector<80x128xf32> to vector<80x128xbf16>
    %cst_37 = arith.constant dense<0.000000e+00> : vector<80x128xf32>
    %46 = tpu.matmul %45, %38, %cst_37 {dimension_numbers = #tpu.dot_dimension_numbers<[1], [0], [0], [1], [0, 0, 1, 1], [], []>} : vector<80x128xbf16>, vector<128x128xbf16>, vector<80x128xf32> -> vector<80x128xf32>
    %c2_38 = arith.constant 2 : index
    %c0_39 = arith.constant 0 : index
    %47 = vector.load %arg9[%c2_38, %c0_39] : memref<9x128xf32, #tpu.memory_space<vmem>>, vector<1x128xf32>
    %48 = vector.broadcast %47 : vector<1x128xf32> to vector<80x128xf32>
    %49 = arith.addf %46, %48 : vector<80x128xf32>
    %50 = vector.shape_cast %49 : vector<80x128xf32> to vector<1x80x128xf32>
    %51 = arith.truncf %22 : vector<1x16x128xf32> to vector<1x16x128xbf16>
    %52 = arith.extf %51 : vector<1x16x128xbf16> to vector<1x16x128xf32>
    %53 = arith.subf %22, %52 : vector<1x16x128xf32>
    %54 = arith.truncf %53 : vector<1x16x128xf32> to vector<1x16x128xbf16>
    "tpu.trace_start"() <{level = 10 : i32, message = "brn,bnd->brd"}> : () -> ()
    %cst_40 = arith.constant dense<0.000000e+00> : vector<1x80x128xf32>
    %55 = tpu.matmul %4, %51, %cst_40 {dimension_numbers = #tpu.dot_dimension_numbers<[2], [1], [1], [2], [0, 0, 0, 1, 1, 2], [0], [0]>} : vector<1x80x16xbf16>, vector<1x16x128xbf16>, vector<1x80x128xf32> -> vector<1x80x128xf32>
    %cst_41 = arith.constant dense<0.000000e+00> : vector<1x80x128xf32>
    %56 = tpu.matmul %4, %54, %cst_41 {dimension_numbers = #tpu.dot_dimension_numbers<[2], [1], [1], [2], [0, 0, 0, 1, 1, 2], [0], [0]>} : vector<1x80x16xbf16>, vector<1x16x128xbf16>, vector<1x80x128xf32> -> vector<1x80x128xf32>
    "tpu.trace_stop"() : () -> ()
    %57 = arith.addf %55, %56 : vector<1x80x128xf32>
    %58 = arith.truncf %36 : vector<1x8x128xf32> to vector<1x8x128xbf16>
    %59 = arith.truncf %57 : vector<1x80x128xf32> to vector<1x80x128xbf16>
    "tpu.trace_start"() <{level = 10 : i32, message = "brd,bld->brl"}> : () -> ()
    %cst_42 = arith.constant dense<0.000000e+00> : vector<1x80x8xf32>
    %60 = tpu.matmul %59, %58, %cst_42 {dimension_numbers = #tpu.dot_dimension_numbers<[2], [2], [1], [1], [0, 0, 0, 1, 1, 1], [0], [0]>} : vector<1x80x128xbf16>, vector<1x8x128xbf16>, vector<1x80x8xf32> -> vector<1x80x8xf32>
    "tpu.trace_stop"() : () -> ()
    %cst_43 = arith.constant dense<0xFF800000> : vector<1x80xf32>
    %61 = vector.multi_reduction <maximumf>, %60, %cst_43 [2] : vector<1x80x8xf32> to vector<1x80xf32>
    %62 = vector.shape_cast %61 : vector<1x80xf32> to vector<1x80x1xf32>
    %63 = vector.broadcast %62 : vector<1x80x1xf32> to vector<1x80x8xf32>
    %64 = arith.subf %60, %63 : vector<1x80x8xf32>
    %65 = math.exp %64 : vector<1x80x8xf32>
    %cst_44 = arith.constant dense<0.000000e+00> : vector<1x80xf32>
    %66 = vector.multi_reduction <add>, %65, %cst_44 [2] : vector<1x80x8xf32> to vector<1x80xf32>
    %67 = vector.shape_cast %66 : vector<1x80xf32> to vector<1x80x1xf32>
    %68 = vector.broadcast %5 : vector<1x1x8xf32> to vector<1x80x8xf32>
    %69 = arith.mulf %65, %68 : vector<1x80x8xf32>
    %cst_45 = arith.constant dense<0.000000e+00> : vector<1x80xf32>
    %70 = vector.multi_reduction <add>, %69, %cst_45 [2] : vector<1x80x8xf32> to vector<1x80xf32>
    %71 = vector.shape_cast %70 : vector<1x80xf32> to vector<1x80x1xf32>
    %cst_46 = arith.constant 1.000000e-07 : f32
    %72 = vector.broadcast %cst_46 : f32 to vector<1x80x1xf32>
    %73 = arith.mulf %72, %67 : vector<1x80x1xf32>
    %74 = arith.addf %71, %73 : vector<1x80x1xf32>
    %75 = tpu.reciprocal %74 : vector<1x80x1xf32> -> vector<1x80x1xf32>
    %76 = vector.broadcast %75 : vector<1x80x1xf32> to vector<1x80x8xf32>
    %77 = arith.mulf %69, %76 : vector<1x80x8xf32>
    %78 = arith.truncf %77 : vector<1x80x8xf32> to vector<1x80x8xbf16>
    "tpu.trace_start"() <{level = 10 : i32, message = "brl,bld->brd"}> : () -> ()
    %cst_47 = arith.constant dense<0.000000e+00> : vector<1x80x128xf32>
    %79 = tpu.matmul %78, %58, %cst_47 {dimension_numbers = #tpu.dot_dimension_numbers<[2], [1], [1], [2], [0, 0, 0, 1, 1, 2], [0], [0]>} : vector<1x80x8xbf16>, vector<1x8x128xbf16>, vector<1x80x128xf32> -> vector<1x80x128xf32>
    "tpu.trace_stop"() : () -> ()
    %80 = arith.mulf %57, %79 : vector<1x80x128xf32>
    %81 = arith.mulf %80, %50 : vector<1x80x128xf32>
    %82 = vector.extract_strided_slice %81 {offsets = [0, 0, 0], sizes = [1, 16, 128], strides = [1, 1, 1]} : vector<1x80x128xf32> to vector<1x16x128xf32>
    %83 = arith.addf %22, %82 : vector<1x16x128xf32>
    %84 = vector.extract_strided_slice %81 {offsets = [0, 16, 0], sizes = [1, 16, 128], strides = [1, 1, 1]} : vector<1x80x128xf32> to vector<1x16x128xf32>
    %85 = arith.addf %83, %84 : vector<1x16x128xf32>
    %86 = vector.extract_strided_slice %81 {offsets = [0, 32, 0], sizes = [1, 16, 128], strides = [1, 1, 1]} : vector<1x80x128xf32> to vector<1x16x128xf32>
    %87 = arith.addf %85, %86 : vector<1x16x128xf32>
    %88 = vector.extract_strided_slice %81 {offsets = [0, 48, 0], sizes = [1, 16, 128], strides = [1, 1, 1]} : vector<1x80x128xf32> to vector<1x16x128xf32>
    %89 = arith.addf %87, %88 : vector<1x16x128xf32>
    %90 = vector.extract_strided_slice %81 {offsets = [0, 64, 0], sizes = [1, 16, 128], strides = [1, 1, 1]} : vector<1x80x128xf32> to vector<1x16x128xf32>
    %91 = arith.addf %89, %90 : vector<1x16x128xf32>
    %cst_48 = arith.constant 0.000000e+00 : f32
    %92 = vector.broadcast %cst_48 : f32 to vector<1x16x128xf32>
    %93 = arith.maximumf %91, %92 : vector<1x16x128xf32>
    %94 = vector.shape_cast %93 : vector<1x16x128xf32> to vector<16x128xf32>
    %c304 = arith.constant 304 : index
    %c0_49 = arith.constant 0 : index
    %95 = vector.load %arg6[%c304, %c0_49] : memref<1104x128xbf16, #tpu.memory_space<vmem>>, vector<128x128xbf16>
    %c384 = arith.constant 384 : index
    %c0_50 = arith.constant 0 : index
    %96 = vector.load %arg7[%c384, %c0_50] : memref<1152x128xbf16, #tpu.memory_space<vmem>>, vector<128x128xbf16>
    %97 = arith.truncf %94 : vector<16x128xf32> to vector<16x128xbf16>
    %cst_51 = arith.constant dense<0.000000e+00> : vector<16x128xf32>
    %98 = tpu.matmul %97, %95, %cst_51 {dimension_numbers = #tpu.dot_dimension_numbers<[1], [0], [0], [1], [0, 0, 1, 1], [], []>} : vector<16x128xbf16>, vector<128x128xbf16>, vector<16x128xf32> -> vector<16x128xf32>
    %c3 = arith.constant 3 : index
    %c0_52 = arith.constant 0 : index
    %99 = vector.load %arg8[%c3, %c0_52] : memref<9x128xf32, #tpu.memory_space<vmem>>, vector<1x128xf32>
    %100 = vector.broadcast %99 : vector<1x128xf32> to vector<16x128xf32>
    %101 = arith.addf %98, %100 : vector<16x128xf32>
    %cst_53 = arith.constant 0.000000e+00 : f32
    %102 = vector.broadcast %cst_53 : f32 to vector<16x128xf32>
    %103 = arith.maximumf %101, %102 : vector<16x128xf32>
    %104 = arith.truncf %103 : vector<16x128xf32> to vector<16x128xbf16>
    %cst_54 = arith.constant dense<0.000000e+00> : vector<16x128xf32>
    %105 = tpu.matmul %104, %96, %cst_54 {dimension_numbers = #tpu.dot_dimension_numbers<[1], [0], [0], [1], [0, 0, 1, 1], [], []>} : vector<16x128xbf16>, vector<128x128xbf16>, vector<16x128xf32> -> vector<16x128xf32>
    %c3_55 = arith.constant 3 : index
    %c0_56 = arith.constant 0 : index
    %106 = vector.load %arg9[%c3_55, %c0_56] : memref<9x128xf32, #tpu.memory_space<vmem>>, vector<1x128xf32>
    %107 = vector.broadcast %106 : vector<1x128xf32> to vector<16x128xf32>
    %108 = arith.addf %105, %107 : vector<16x128xf32>
    %109 = vector.shape_cast %108 : vector<16x128xf32> to vector<1x16x128xf32>
    %c432 = arith.constant 432 : index
    %c0_57 = arith.constant 0 : index
    %110 = vector.load %arg6[%c432, %c0_57] : memref<1104x128xbf16, #tpu.memory_space<vmem>>, vector<256x128xbf16>
    %c512 = arith.constant 512 : index
    %c0_58 = arith.constant 0 : index
    %111 = vector.load %arg7[%c512, %c0_58] : memref<1152x128xbf16, #tpu.memory_space<vmem>>, vector<128x128xbf16>
    %cst_59 = arith.constant dense<0.000000e+00> : vector<8x128xf32>
    %112 = tpu.matmul %1, %110, %cst_59 {dimension_numbers = #tpu.dot_dimension_numbers<[1], [0], [0], [1], [0, 0, 1, 1], [], []>} : vector<8x256xbf16>, vector<256x128xbf16>, vector<8x128xf32> -> vector<8x128xf32>
    %c4 = arith.constant 4 : index
    %c0_60 = arith.constant 0 : index
    %113 = vector.load %arg8[%c4, %c0_60] : memref<9x128xf32, #tpu.memory_space<vmem>>, vector<1x128xf32>
    %114 = vector.broadcast %113 : vector<1x128xf32> to vector<8x128xf32>
    %115 = arith.addf %112, %114 : vector<8x128xf32>
    %cst_61 = arith.constant 0.000000e+00 : f32
    %116 = vector.broadcast %cst_61 : f32 to vector<8x128xf32>
    %117 = arith.maximumf %115, %116 : vector<8x128xf32>
    %118 = arith.truncf %117 : vector<8x128xf32> to vector<8x128xbf16>
    %cst_62 = arith.constant dense<0.000000e+00> : vector<8x128xf32>
    %119 = tpu.matmul %118, %111, %cst_62 {dimension_numbers = #tpu.dot_dimension_numbers<[1], [0], [0], [1], [0, 0, 1, 1], [], []>} : vector<8x128xbf16>, vector<128x128xbf16>, vector<8x128xf32> -> vector<8x128xf32>
    %c4_63 = arith.constant 4 : index
    %c0_64 = arith.constant 0 : index
    %120 = vector.load %arg9[%c4_63, %c0_64] : memref<9x128xf32, #tpu.memory_space<vmem>>, vector<1x128xf32>
    %121 = vector.broadcast %120 : vector<1x128xf32> to vector<8x128xf32>
    %122 = arith.addf %119, %121 : vector<8x128xf32>
    %123 = vector.shape_cast %122 : vector<8x128xf32> to vector<1x8x128xf32>
    %c688 = arith.constant 688 : index
    %c0_65 = arith.constant 0 : index
    %124 = vector.load %arg6[%c688, %c0_65] : memref<1104x128xbf16, #tpu.memory_space<vmem>>, vector<16x128xbf16>
    %c640 = arith.constant 640 : index
    %c0_66 = arith.constant 0 : index
    %125 = vector.load %arg7[%c640, %c0_66] : memref<1152x128xbf16, #tpu.memory_space<vmem>>, vector<128x128xbf16>
    %cst_67 = arith.constant dense<0.000000e+00> : vector<80x128xf32>
    %126 = tpu.matmul %3, %124, %cst_67 {dimension_numbers = #tpu.dot_dimension_numbers<[1], [0], [0], [1], [0, 0, 1, 1], [], []>} : vector<80x16xbf16>, vector<16x128xbf16>, vector<80x128xf32> -> vector<80x128xf32>
    %c5 = arith.constant 5 : index
    %c0_68 = arith.constant 0 : index
    %127 = vector.load %arg8[%c5, %c0_68] : memref<9x128xf32, #tpu.memory_space<vmem>>, vector<1x128xf32>
    %128 = vector.broadcast %127 : vector<1x128xf32> to vector<80x128xf32>
    %129 = arith.addf %126, %128 : vector<80x128xf32>
    %cst_69 = arith.constant 0.000000e+00 : f32
    %130 = vector.broadcast %cst_69 : f32 to vector<80x128xf32>
    %131 = arith.maximumf %129, %130 : vector<80x128xf32>
    %132 = arith.truncf %131 : vector<80x128xf32> to vector<80x128xbf16>
    %cst_70 = arith.constant dense<0.000000e+00> : vector<80x128xf32>
    %133 = tpu.matmul %132, %125, %cst_70 {dimension_numbers = #tpu.dot_dimension_numbers<[1], [0], [0], [1], [0, 0, 1, 1], [], []>} : vector<80x128xbf16>, vector<128x128xbf16>, vector<80x128xf32> -> vector<80x128xf32>
    %c5_71 = arith.constant 5 : index
    %c0_72 = arith.constant 0 : index
    %134 = vector.load %arg9[%c5_71, %c0_72] : memref<9x128xf32, #tpu.memory_space<vmem>>, vector<1x128xf32>
    %135 = vector.broadcast %134 : vector<1x128xf32> to vector<80x128xf32>
    %136 = arith.addf %133, %135 : vector<80x128xf32>
    %137 = vector.shape_cast %136 : vector<80x128xf32> to vector<1x80x128xf32>
    %138 = arith.truncf %109 : vector<1x16x128xf32> to vector<1x16x128xbf16>
    %139 = arith.extf %138 : vector<1x16x128xbf16> to vector<1x16x128xf32>
    %140 = arith.subf %109, %139 : vector<1x16x128xf32>
    %141 = arith.truncf %140 : vector<1x16x128xf32> to vector<1x16x128xbf16>
    "tpu.trace_start"() <{level = 10 : i32, message = "brn,bnd->brd"}> : () -> ()
    %cst_73 = arith.constant dense<0.000000e+00> : vector<1x80x128xf32>
    %142 = tpu.matmul %4, %138, %cst_73 {dimension_numbers = #tpu.dot_dimension_numbers<[2], [1], [1], [2], [0, 0, 0, 1, 1, 2], [0], [0]>} : vector<1x80x16xbf16>, vector<1x16x128xbf16>, vector<1x80x128xf32> -> vector<1x80x128xf32>
    %cst_74 = arith.constant dense<0.000000e+00> : vector<1x80x128xf32>
    %143 = tpu.matmul %4, %141, %cst_74 {dimension_numbers = #tpu.dot_dimension_numbers<[2], [1], [1], [2], [0, 0, 0, 1, 1, 2], [0], [0]>} : vector<1x80x16xbf16>, vector<1x16x128xbf16>, vector<1x80x128xf32> -> vector<1x80x128xf32>
    "tpu.trace_stop"() : () -> ()
    %144 = arith.addf %142, %143 : vector<1x80x128xf32>
    %145 = arith.truncf %123 : vector<1x8x128xf32> to vector<1x8x128xbf16>
    %146 = arith.truncf %144 : vector<1x80x128xf32> to vector<1x80x128xbf16>
    "tpu.trace_start"() <{level = 10 : i32, message = "brd,bld->brl"}> : () -> ()
    %cst_75 = arith.constant dense<0.000000e+00> : vector<1x80x8xf32>
    %147 = tpu.matmul %146, %145, %cst_75 {dimension_numbers = #tpu.dot_dimension_numbers<[2], [2], [1], [1], [0, 0, 0, 1, 1, 1], [0], [0]>} : vector<1x80x128xbf16>, vector<1x8x128xbf16>, vector<1x80x8xf32> -> vector<1x80x8xf32>
    "tpu.trace_stop"() : () -> ()
    %cst_76 = arith.constant dense<0xFF800000> : vector<1x80xf32>
    %148 = vector.multi_reduction <maximumf>, %147, %cst_76 [2] : vector<1x80x8xf32> to vector<1x80xf32>
    %149 = vector.shape_cast %148 : vector<1x80xf32> to vector<1x80x1xf32>
    %150 = vector.broadcast %149 : vector<1x80x1xf32> to vector<1x80x8xf32>
    %151 = arith.subf %147, %150 : vector<1x80x8xf32>
    %152 = math.exp %151 : vector<1x80x8xf32>
    %cst_77 = arith.constant dense<0.000000e+00> : vector<1x80xf32>
    %153 = vector.multi_reduction <add>, %152, %cst_77 [2] : vector<1x80x8xf32> to vector<1x80xf32>
    %154 = vector.shape_cast %153 : vector<1x80xf32> to vector<1x80x1xf32>
    %155 = vector.broadcast %5 : vector<1x1x8xf32> to vector<1x80x8xf32>
    %156 = arith.mulf %152, %155 : vector<1x80x8xf32>
    %cst_78 = arith.constant dense<0.000000e+00> : vector<1x80xf32>
    %157 = vector.multi_reduction <add>, %156, %cst_78 [2] : vector<1x80x8xf32> to vector<1x80xf32>
    %158 = vector.shape_cast %157 : vector<1x80xf32> to vector<1x80x1xf32>
    %cst_79 = arith.constant 1.000000e-07 : f32
    %159 = vector.broadcast %cst_79 : f32 to vector<1x80x1xf32>
    %160 = arith.mulf %159, %154 : vector<1x80x1xf32>
    %161 = arith.addf %158, %160 : vector<1x80x1xf32>
    %162 = tpu.reciprocal %161 : vector<1x80x1xf32> -> vector<1x80x1xf32>
    %163 = vector.broadcast %162 : vector<1x80x1xf32> to vector<1x80x8xf32>
    %164 = arith.mulf %156, %163 : vector<1x80x8xf32>
    %165 = arith.truncf %164 : vector<1x80x8xf32> to vector<1x80x8xbf16>
    "tpu.trace_start"() <{level = 10 : i32, message = "brl,bld->brd"}> : () -> ()
    %cst_80 = arith.constant dense<0.000000e+00> : vector<1x80x128xf32>
    %166 = tpu.matmul %165, %145, %cst_80 {dimension_numbers = #tpu.dot_dimension_numbers<[2], [1], [1], [2], [0, 0, 0, 1, 1, 2], [0], [0]>} : vector<1x80x8xbf16>, vector<1x8x128xbf16>, vector<1x80x128xf32> -> vector<1x80x128xf32>
    "tpu.trace_stop"() : () -> ()
    %167 = arith.mulf %144, %166 : vector<1x80x128xf32>
    %168 = arith.mulf %167, %137 : vector<1x80x128xf32>
    %169 = vector.extract_strided_slice %168 {offsets = [0, 0, 0], sizes = [1, 16, 128], strides = [1, 1, 1]} : vector<1x80x128xf32> to vector<1x16x128xf32>
    %170 = arith.addf %109, %169 : vector<1x16x128xf32>
    %171 = vector.extract_strided_slice %168 {offsets = [0, 16, 0], sizes = [1, 16, 128], strides = [1, 1, 1]} : vector<1x80x128xf32> to vector<1x16x128xf32>
    %172 = arith.addf %170, %171 : vector<1x16x128xf32>
    %173 = vector.extract_strided_slice %168 {offsets = [0, 32, 0], sizes = [1, 16, 128], strides = [1, 1, 1]} : vector<1x80x128xf32> to vector<1x16x128xf32>
    %174 = arith.addf %172, %173 : vector<1x16x128xf32>
    %175 = vector.extract_strided_slice %168 {offsets = [0, 48, 0], sizes = [1, 16, 128], strides = [1, 1, 1]} : vector<1x80x128xf32> to vector<1x16x128xf32>
    %176 = arith.addf %174, %175 : vector<1x16x128xf32>
    %177 = vector.extract_strided_slice %168 {offsets = [0, 64, 0], sizes = [1, 16, 128], strides = [1, 1, 1]} : vector<1x80x128xf32> to vector<1x16x128xf32>
    %178 = arith.addf %176, %177 : vector<1x16x128xf32>
    %cst_81 = arith.constant 0.000000e+00 : f32
    %179 = vector.broadcast %cst_81 : f32 to vector<1x16x128xf32>
    %180 = arith.maximumf %178, %179 : vector<1x16x128xf32>
    %181 = vector.shape_cast %180 : vector<1x16x128xf32> to vector<16x128xf32>
    %c704 = arith.constant 704 : index
    %c0_82 = arith.constant 0 : index
    %182 = vector.load %arg6[%c704, %c0_82] : memref<1104x128xbf16, #tpu.memory_space<vmem>>, vector<128x128xbf16>
    %c768 = arith.constant 768 : index
    %c0_83 = arith.constant 0 : index
    %183 = vector.load %arg7[%c768, %c0_83] : memref<1152x128xbf16, #tpu.memory_space<vmem>>, vector<128x128xbf16>
    %184 = arith.truncf %181 : vector<16x128xf32> to vector<16x128xbf16>
    %cst_84 = arith.constant dense<0.000000e+00> : vector<16x128xf32>
    %185 = tpu.matmul %184, %182, %cst_84 {dimension_numbers = #tpu.dot_dimension_numbers<[1], [0], [0], [1], [0, 0, 1, 1], [], []>} : vector<16x128xbf16>, vector<128x128xbf16>, vector<16x128xf32> -> vector<16x128xf32>
    %c6 = arith.constant 6 : index
    %c0_85 = arith.constant 0 : index
    %186 = vector.load %arg8[%c6, %c0_85] : memref<9x128xf32, #tpu.memory_space<vmem>>, vector<1x128xf32>
    %187 = vector.broadcast %186 : vector<1x128xf32> to vector<16x128xf32>
    %188 = arith.addf %185, %187 : vector<16x128xf32>
    %cst_86 = arith.constant 0.000000e+00 : f32
    %189 = vector.broadcast %cst_86 : f32 to vector<16x128xf32>
    %190 = arith.maximumf %188, %189 : vector<16x128xf32>
    %191 = arith.truncf %190 : vector<16x128xf32> to vector<16x128xbf16>
    %cst_87 = arith.constant dense<0.000000e+00> : vector<16x128xf32>
    %192 = tpu.matmul %191, %183, %cst_87 {dimension_numbers = #tpu.dot_dimension_numbers<[1], [0], [0], [1], [0, 0, 1, 1], [], []>} : vector<16x128xbf16>, vector<128x128xbf16>, vector<16x128xf32> -> vector<16x128xf32>
    %c6_88 = arith.constant 6 : index
    %c0_89 = arith.constant 0 : index
    %193 = vector.load %arg9[%c6_88, %c0_89] : memref<9x128xf32, #tpu.memory_space<vmem>>, vector<1x128xf32>
    %194 = vector.broadcast %193 : vector<1x128xf32> to vector<16x128xf32>
    %195 = arith.addf %192, %194 : vector<16x128xf32>
    %196 = vector.shape_cast %195 : vector<16x128xf32> to vector<1x16x128xf32>
    %c832 = arith.constant 832 : index
    %c0_90 = arith.constant 0 : index
    %197 = vector.load %arg6[%c832, %c0_90] : memref<1104x128xbf16, #tpu.memory_space<vmem>>, vector<256x128xbf16>
    %c896 = arith.constant 896 : index
    %c0_91 = arith.constant 0 : index
    %198 = vector.load %arg7[%c896, %c0_91] : memref<1152x128xbf16, #tpu.memory_space<vmem>>, vector<128x128xbf16>
    %cst_92 = arith.constant dense<0.000000e+00> : vector<8x128xf32>
    %199 = tpu.matmul %1, %197, %cst_92 {dimension_numbers = #tpu.dot_dimension_numbers<[1], [0], [0], [1], [0, 0, 1, 1], [], []>} : vector<8x256xbf16>, vector<256x128xbf16>, vector<8x128xf32> -> vector<8x128xf32>
    %c7 = arith.constant 7 : index
    %c0_93 = arith.constant 0 : index
    %200 = vector.load %arg8[%c7, %c0_93] : memref<9x128xf32, #tpu.memory_space<vmem>>, vector<1x128xf32>
    %201 = vector.broadcast %200 : vector<1x128xf32> to vector<8x128xf32>
    %202 = arith.addf %199, %201 : vector<8x128xf32>
    %cst_94 = arith.constant 0.000000e+00 : f32
    %203 = vector.broadcast %cst_94 : f32 to vector<8x128xf32>
    %204 = arith.maximumf %202, %203 : vector<8x128xf32>
    %205 = arith.truncf %204 : vector<8x128xf32> to vector<8x128xbf16>
    %cst_95 = arith.constant dense<0.000000e+00> : vector<8x128xf32>
    %206 = tpu.matmul %205, %198, %cst_95 {dimension_numbers = #tpu.dot_dimension_numbers<[1], [0], [0], [1], [0, 0, 1, 1], [], []>} : vector<8x128xbf16>, vector<128x128xbf16>, vector<8x128xf32> -> vector<8x128xf32>
    %c7_96 = arith.constant 7 : index
    %c0_97 = arith.constant 0 : index
    %207 = vector.load %arg9[%c7_96, %c0_97] : memref<9x128xf32, #tpu.memory_space<vmem>>, vector<1x128xf32>
    %208 = vector.broadcast %207 : vector<1x128xf32> to vector<8x128xf32>
    %209 = arith.addf %206, %208 : vector<8x128xf32>
    %210 = vector.shape_cast %209 : vector<8x128xf32> to vector<1x8x128xf32>
    %c1088 = arith.constant 1088 : index
    %c0_98 = arith.constant 0 : index
    %211 = vector.load %arg6[%c1088, %c0_98] : memref<1104x128xbf16, #tpu.memory_space<vmem>>, vector<16x128xbf16>
    %c1024 = arith.constant 1024 : index
    %c0_99 = arith.constant 0 : index
    %212 = vector.load %arg7[%c1024, %c0_99] : memref<1152x128xbf16, #tpu.memory_space<vmem>>, vector<128x128xbf16>
    %cst_100 = arith.constant dense<0.000000e+00> : vector<80x128xf32>
    %213 = tpu.matmul %3, %211, %cst_100 {dimension_numbers = #tpu.dot_dimension_numbers<[1], [0], [0], [1], [0, 0, 1, 1], [], []>} : vector<80x16xbf16>, vector<16x128xbf16>, vector<80x128xf32> -> vector<80x128xf32>
    %c8 = arith.constant 8 : index
    %c0_101 = arith.constant 0 : index
    %214 = vector.load %arg8[%c8, %c0_101] : memref<9x128xf32, #tpu.memory_space<vmem>>, vector<1x128xf32>
    %215 = vector.broadcast %214 : vector<1x128xf32> to vector<80x128xf32>
    %216 = arith.addf %213, %215 : vector<80x128xf32>
    %cst_102 = arith.constant 0.000000e+00 : f32
    %217 = vector.broadcast %cst_102 : f32 to vector<80x128xf32>
    %218 = arith.maximumf %216, %217 : vector<80x128xf32>
    %219 = arith.truncf %218 : vector<80x128xf32> to vector<80x128xbf16>
    %cst_103 = arith.constant dense<0.000000e+00> : vector<80x128xf32>
    %220 = tpu.matmul %219, %212, %cst_103 {dimension_numbers = #tpu.dot_dimension_numbers<[1], [0], [0], [1], [0, 0, 1, 1], [], []>} : vector<80x128xbf16>, vector<128x128xbf16>, vector<80x128xf32> -> vector<80x128xf32>
    %c8_104 = arith.constant 8 : index
    %c0_105 = arith.constant 0 : index
    %221 = vector.load %arg9[%c8_104, %c0_105] : memref<9x128xf32, #tpu.memory_space<vmem>>, vector<1x128xf32>
    %222 = vector.broadcast %221 : vector<1x128xf32> to vector<80x128xf32>
    %223 = arith.addf %220, %222 : vector<80x128xf32>
    %224 = vector.shape_cast %223 : vector<80x128xf32> to vector<1x80x128xf32>
    %225 = arith.truncf %196 : vector<1x16x128xf32> to vector<1x16x128xbf16>
    %226 = arith.extf %225 : vector<1x16x128xbf16> to vector<1x16x128xf32>
    %227 = arith.subf %196, %226 : vector<1x16x128xf32>
    %228 = arith.truncf %227 : vector<1x16x128xf32> to vector<1x16x128xbf16>
    "tpu.trace_start"() <{level = 10 : i32, message = "brn,bnd->brd"}> : () -> ()
    %cst_106 = arith.constant dense<0.000000e+00> : vector<1x80x128xf32>
    %229 = tpu.matmul %4, %225, %cst_106 {dimension_numbers = #tpu.dot_dimension_numbers<[2], [1], [1], [2], [0, 0, 0, 1, 1, 2], [0], [0]>} : vector<1x80x16xbf16>, vector<1x16x128xbf16>, vector<1x80x128xf32> -> vector<1x80x128xf32>
    %cst_107 = arith.constant dense<0.000000e+00> : vector<1x80x128xf32>
    %230 = tpu.matmul %4, %228, %cst_107 {dimension_numbers = #tpu.dot_dimension_numbers<[2], [1], [1], [2], [0, 0, 0, 1, 1, 2], [0], [0]>} : vector<1x80x16xbf16>, vector<1x16x128xbf16>, vector<1x80x128xf32> -> vector<1x80x128xf32>
    "tpu.trace_stop"() : () -> ()
    %231 = arith.addf %229, %230 : vector<1x80x128xf32>
    %232 = arith.truncf %210 : vector<1x8x128xf32> to vector<1x8x128xbf16>
    %233 = arith.truncf %231 : vector<1x80x128xf32> to vector<1x80x128xbf16>
    "tpu.trace_start"() <{level = 10 : i32, message = "brd,bld->brl"}> : () -> ()
    %cst_108 = arith.constant dense<0.000000e+00> : vector<1x80x8xf32>
    %234 = tpu.matmul %233, %232, %cst_108 {dimension_numbers = #tpu.dot_dimension_numbers<[2], [2], [1], [1], [0, 0, 0, 1, 1, 1], [0], [0]>} : vector<1x80x128xbf16>, vector<1x8x128xbf16>, vector<1x80x8xf32> -> vector<1x80x8xf32>
    "tpu.trace_stop"() : () -> ()
    %cst_109 = arith.constant dense<0xFF800000> : vector<1x80xf32>
    %235 = vector.multi_reduction <maximumf>, %234, %cst_109 [2] : vector<1x80x8xf32> to vector<1x80xf32>
    %236 = vector.shape_cast %235 : vector<1x80xf32> to vector<1x80x1xf32>
    %237 = vector.broadcast %236 : vector<1x80x1xf32> to vector<1x80x8xf32>
    %238 = arith.subf %234, %237 : vector<1x80x8xf32>
    %239 = math.exp %238 : vector<1x80x8xf32>
    %cst_110 = arith.constant dense<0.000000e+00> : vector<1x80xf32>
    %240 = vector.multi_reduction <add>, %239, %cst_110 [2] : vector<1x80x8xf32> to vector<1x80xf32>
    %241 = vector.shape_cast %240 : vector<1x80xf32> to vector<1x80x1xf32>
    %242 = vector.broadcast %5 : vector<1x1x8xf32> to vector<1x80x8xf32>
    %243 = arith.mulf %239, %242 : vector<1x80x8xf32>
    %cst_111 = arith.constant dense<0.000000e+00> : vector<1x80xf32>
    %244 = vector.multi_reduction <add>, %243, %cst_111 [2] : vector<1x80x8xf32> to vector<1x80xf32>
    %245 = vector.shape_cast %244 : vector<1x80xf32> to vector<1x80x1xf32>
    %cst_112 = arith.constant 1.000000e-07 : f32
    %246 = vector.broadcast %cst_112 : f32 to vector<1x80x1xf32>
    %247 = arith.mulf %246, %241 : vector<1x80x1xf32>
    %248 = arith.addf %245, %247 : vector<1x80x1xf32>
    %249 = tpu.reciprocal %248 : vector<1x80x1xf32> -> vector<1x80x1xf32>
    %250 = vector.broadcast %249 : vector<1x80x1xf32> to vector<1x80x8xf32>
    %251 = arith.mulf %243, %250 : vector<1x80x8xf32>
    %252 = arith.truncf %251 : vector<1x80x8xf32> to vector<1x80x8xbf16>
    "tpu.trace_start"() <{level = 10 : i32, message = "brl,bld->brd"}> : () -> ()
    %cst_113 = arith.constant dense<0.000000e+00> : vector<1x80x128xf32>
    %253 = tpu.matmul %252, %232, %cst_113 {dimension_numbers = #tpu.dot_dimension_numbers<[2], [1], [1], [2], [0, 0, 0, 1, 1, 2], [0], [0]>} : vector<1x80x8xbf16>, vector<1x8x128xbf16>, vector<1x80x128xf32> -> vector<1x80x128xf32>
    "tpu.trace_stop"() : () -> ()
    %254 = arith.mulf %231, %253 : vector<1x80x128xf32>
    %255 = arith.mulf %254, %224 : vector<1x80x128xf32>
    %256 = vector.extract_strided_slice %255 {offsets = [0, 0, 0], sizes = [1, 16, 128], strides = [1, 1, 1]} : vector<1x80x128xf32> to vector<1x16x128xf32>
    %257 = arith.addf %196, %256 : vector<1x16x128xf32>
    %258 = vector.extract_strided_slice %255 {offsets = [0, 16, 0], sizes = [1, 16, 128], strides = [1, 1, 1]} : vector<1x80x128xf32> to vector<1x16x128xf32>
    %259 = arith.addf %257, %258 : vector<1x16x128xf32>
    %260 = vector.extract_strided_slice %255 {offsets = [0, 32, 0], sizes = [1, 16, 128], strides = [1, 1, 1]} : vector<1x80x128xf32> to vector<1x16x128xf32>
    %261 = arith.addf %259, %260 : vector<1x16x128xf32>
    %262 = vector.extract_strided_slice %255 {offsets = [0, 48, 0], sizes = [1, 16, 128], strides = [1, 1, 1]} : vector<1x80x128xf32> to vector<1x16x128xf32>
    %263 = arith.addf %261, %262 : vector<1x16x128xf32>
    %264 = vector.extract_strided_slice %255 {offsets = [0, 64, 0], sizes = [1, 16, 128], strides = [1, 1, 1]} : vector<1x80x128xf32> to vector<1x16x128xf32>
    %265 = arith.addf %263, %264 : vector<1x16x128xf32>
    %cst_114 = arith.constant 0.000000e+00 : f32
    %266 = vector.broadcast %cst_114 : f32 to vector<1x16x128xf32>
    %267 = arith.maximumf %265, %266 : vector<1x16x128xf32>
    %c0_115 = arith.constant 0 : index
    %c0_116 = arith.constant 0 : index
    %c0_117 = arith.constant 0 : index
    %268 = vector.load %arg12[%c0_115, %c0_116, %c0_117] : memref<1x16x128xf32, #tpu.memory_space<vmem>>, vector<1x16x128xf32>
    tpu.vector_store %arg12[%c0_115, %c0_116, %c0_117], %267 {strides = array<i32>} : memref<1x16x128xf32, #tpu.memory_space<vmem>>, vector<1x16x128xf32>,
    %c0_118 = arith.constant 0 : index
    %c0_119 = arith.constant 0 : index
    %269 = vector.load %arg10[%c0_118, %c0_119] : memref<1x128xf32, #tpu.memory_space<vmem>>, vector<1x128xf32>
    %270 = vector.shape_cast %269 : vector<1x128xf32> to vector<1x1x128xf32>
    %271 = vector.broadcast %270 : vector<1x1x128xf32> to vector<1x16x128xf32>
    %272 = arith.mulf %267, %271 : vector<1x16x128xf32>
    %cst_120 = arith.constant dense<0.000000e+00> : vector<1x16xf32>
    %273 = vector.multi_reduction <add>, %272, %cst_120 [2] : vector<1x16x128xf32> to vector<1x16xf32>
    %274 = vector.shape_cast %273 : vector<1x16xf32> to vector<1x1x16xf32>
    %c0_121 = arith.constant 0 : index
    %c0_122 = arith.constant 0 : index
    %275 = vector.load %arg11[%c0_121, %c0_122] : memref<1x1xf32, #tpu.memory_space<vmem>>, vector<1x1xf32>
    %276 = vector.shape_cast %275 : vector<1x1xf32> to vector<1x1x1xf32>
    %277 = vector.broadcast %276 : vector<1x1x1xf32> to vector<1x1x16xf32>
    %278 = arith.addf %274, %277 : vector<1x1x16xf32>
    %c0_123 = arith.constant 0 : index
    %c0_124 = arith.constant 0 : index
    %c0_125 = arith.constant 0 : index
    %279 = vector.load %arg13[%c0_123, %c0_124, %c0_125] : memref<1x1x16xf32, #tpu.memory_space<vmem>>, vector<1x1x16xf32>
    tpu.vector_store %arg13[%c0_123, %c0_124, %c0_125], %278 {strides = array<i32>} : memref<1x1x16xf32, #tpu.memory_space<vmem>>, vector<1x1x16xf32>,
    return
  }
  func.func @transform_0(%arg0: i32) -> (i32, i32, i32) {
    %c0_i32 = arith.constant 0 : i32
    %c0_i32_0 = arith.constant 0 : i32
    %c0_i32_1 = arith.constant 0 : i32
    return %arg0, %c0_i32, %c0_i32_0 : i32, i32, i32
  }
  func.func @transform_1(%arg0: i32) -> (i32, i32, i32) {
    %c0_i32 = arith.constant 0 : i32
    %c0_i32_0 = arith.constant 0 : i32
    %c0_i32_1 = arith.constant 0 : i32
    return %arg0, %c0_i32, %c0_i32_0 : i32, i32, i32
  }
  func.func @transform_2(%arg0: i32) -> (i32, i32, i32) {
    %c0_i32 = arith.constant 0 : i32
    %c0_i32_0 = arith.constant 0 : i32
    %c0_i32_1 = arith.constant 0 : i32
    return %arg0, %c0_i32, %c0_i32_0 : i32, i32, i32
  }
  func.func @transform_3(%arg0: i32) -> (i32, i32, i32) {
    %c0_i32 = arith.constant 0 : i32
    %c0_i32_0 = arith.constant 0 : i32
    %c0_i32_1 = arith.constant 0 : i32
    return %arg0, %c0_i32, %c0_i32_0 : i32, i32, i32
  }
  func.func @transform_4(%arg0: i32) -> (i32, i32, i32) {
    %c0_i32 = arith.constant 0 : i32
    %c0_i32_0 = arith.constant 0 : i32
    %c0_i32_1 = arith.constant 0 : i32
    return %arg0, %c0_i32, %c0_i32_0 : i32, i32, i32
  }
  func.func @transform_5(%arg0: i32) -> (i32, i32) {
    %c0_i32 = arith.constant 0 : i32
    %c0_i32_0 = arith.constant 0 : i32
    %c0_i32_1 = arith.constant 0 : i32
    return %c0_i32, %c0_i32_0 : i32, i32
  }
  func.func @transform_6(%arg0: i32) -> (i32, i32) {
    %c0_i32 = arith.constant 0 : i32
    %c0_i32_0 = arith.constant 0 : i32
    %c0_i32_1 = arith.constant 0 : i32
    return %c0_i32, %c0_i32_0 : i32, i32
  }
  func.func @transform_7(%arg0: i32) -> (i32, i32) {
    %c0_i32 = arith.constant 0 : i32
    %c0_i32_0 = arith.constant 0 : i32
    %c0_i32_1 = arith.constant 0 : i32
    return %c0_i32, %c0_i32_0 : i32, i32
  }
  func.func @transform_8(%arg0: i32) -> (i32, i32) {
    %c0_i32 = arith.constant 0 : i32
    %c0_i32_0 = arith.constant 0 : i32
    %c0_i32_1 = arith.constant 0 : i32
    return %c0_i32, %c0_i32_0 : i32, i32
  }
  func.func @transform_9(%arg0: i32) -> (i32, i32) {
    %c0_i32 = arith.constant 0 : i32
    %c0_i32_0 = arith.constant 0 : i32
    %c0_i32_1 = arith.constant 0 : i32
    return %c0_i32, %c0_i32_0 : i32, i32
  }
  func.func @transform_10(%arg0: i32) -> (i32, i32) {
    %c0_i32 = arith.constant 0 : i32
    %c0_i32_0 = arith.constant 0 : i32
    %c0_i32_1 = arith.constant 0 : i32
    return %c0_i32, %c0_i32_0 : i32, i32
  }
  func.func @transform_11(%arg0: i32) -> (i32, i32, i32) {
    %c0_i32 = arith.constant 0 : i32
    %c0_i32_0 = arith.constant 0 : i32
    %c0_i32_1 = arith.constant 0 : i32
    return %arg0, %c0_i32, %c0_i32_0 : i32, i32, i32
  }
  func.func @transform_12(%arg0: i32) -> (i32, i32, i32) {
    %c0_i32 = arith.constant 0 : i32
    %c0_i32_0 = arith.constant 0 : i32
    %c0_i32_1 = arith.constant 0 : i32
    return %arg0, %c0_i32, %c0_i32_0 : i32, i32, i32
  }
}

</mosaic_0001>

<llo_original>
// kernel: neg.1
$region0: #{neg.1}
  #allocation0 [shape = 's32[1]{0}', space=sflag, size = 0x4, scoped, tag = 'scoped memory for neg.1']
  %s0 = inlined_call_operand.vmem [shape: f32[2,16,16], index: 0, kind: input, shape index: {}]
  %s1 = inlined_call_operand.vmem [shape: f32[2,16,16], index: 1, kind: output, shape index: {}]
  %v2 = vld [vmem:[%s0] sm:$0xff]
  %3 = xla_tuple %v2
  %4 = xla_tuple %3
  %v5 = vxor.u32 %v2, 2147483648
  %6 = xla_tuple %v5
  %7 = vst [vmem:[%s1] sm:$0xff] %v5
  %s8 = scalar_lea.vmem %s0, 16
  %v9 = vld [vmem:[%s8] sm:$0xff]
  %10 = xla_tuple %v9
  %11 = xla_tuple %10
  %v12 = vxor.u32 %v9, 2147483648
  %13 = xla_tuple %v12
  %s14 = scalar_lea.vmem %s1, 16
  %15 = vst [vmem:[%s14] sm:$0xff] %v12
  %s16 = scalar_lea.vmem %s0, 8
  %v17 = vld [vmem:[%s16] sm:$0xff]
  %18 = xla_tuple %v17
  %19 = xla_tuple %18
  %v20 = vxor.u32 %v17, 2147483648
  %21 = xla_tuple %v20
  %s22 = scalar_lea.vmem %s1, 8
  %23 = vst [vmem:[%s22] sm:$0xff] %v20
  %s24 = scalar_lea.vmem %s0, 24
  %v25 = vld [vmem:[%s24] sm:$0xff]
  %26 = xla_tuple %v25
  %27 = xla_tuple %26
  %v28 = vxor.u32 %v25, 2147483648
  %29 = xla_tuple %v28
  %s30 = scalar_lea.vmem %s1, 24
  %31 = vst [vmem:[%s30] sm:$0xff] %v28

// kernel: eq.8
$region0: #{eq.8}
  %s0 = inlined_call_operand.vmem [shape: s32[2,5,16], index: 0, kind: input, shape index: {}]
  %s1 = inlined_call_operand.vmem [shape: s32[2,80], index: 1, kind: output, shape index: {}]
  $region1: #{eq.8} parent=0
    #allocation0 [shape = 'u8[4096]{0}', space=vmem, size = 0x1000, scoped, tag = 'scoped mem for output reshape']
    %s2 = smov 3
    %v3 = vld [vmem:[%s0] ss:$8 sm:%s2]
    %vm4 = vcmask 130048
    %5 = vst.msk [vmem:[#allocation0] sm:$0x3] %vm4, %v3
    %s6 = scalar_lea.vmem %s0, 4
    %s7 = smov 3
    %v8 = vld [vmem:[%s6] ss:$8 sm:%s7]
    %9 = vrot.lane.b32.xlu0 %v8, 64
    %v10 = vpop.permute.xlu0 %9
    %vm11 = vcmask 654848
    %12 = vst.msk [vmem:[#allocation0] sm:$0x3] %vm11, %v10
    %s13 = scalar_lea.vmem %s0, 3
    %s14 = smov 3
    %v15 = vld [vmem:[%s13] ss:$8 sm:%s14]
    %16 = vrot.lane.b32.xlu0 %v15, 48
    %v17 = vpop.permute.xlu0 %16
    %vm18 = vcmask 523648
    %19 = vst.msk [vmem:[#allocation0] sm:$0x3] %vm18, %v17
    %s20 = scalar_lea.vmem %s0, 2
    %s21 = smov 3
    %v22 = vld [vmem:[%s20] ss:$8 sm:%s21]
    %23 = vrot.lane.b32.xlu0 %v22, 32
    %v24 = vpop.permute.xlu0 %23
    %vm25 = vcmask 392448
    %26 = vst.msk [vmem:[#allocation0] sm:$0x3] %vm25, %v24
    %s27 = scalar_lea.vmem %s0, 1
    %s28 = smov 3
    %v29 = vld [vmem:[%s27] ss:$8 sm:%s28]
    %30 = vrot.lane.b32.xlu0 %v29, 16
    %v31 = vpop.permute.xlu0 %30
    %vm32 = vcmask 261248
    %33 = vst.msk [vmem:[#allocation0] sm:$0x3] %vm32, %v31
    %s35 = ssub.s32 4, 1
    %v36 = vld [vmem:[#allocation0] sm:%s35]
    %s38 = ssub.s32 4, 1
    %39 = vst [vmem:[%s1] sm:%s38] %v36

// kernel: _block_forward.1
$region0: #{_block_forward.1}
  #allocation0 [shape = 'u32[]', space=smem, size = 0x4, offset = 0x4, fixed_abs, tag = 'smem constant byte address 0x4 - core index']
  #allocation1 [shape = 'u32[72,128]{1,0:T(1,128)}', space=vmem, size = 0x9000, scoped, tag = 'internal scratch']
  #allocation2 [shape = 'f32[1,1]{1,0:T(1,128)S(1)}', space=vmem, size = 0x200, scoped, tag = 'scoped memory for _block_forward.1']
  %s0 = inlined_call_operand.vmem [shape: f32[2,16,32], index: 0, kind: input, shape index: {}]
  %s1 = inlined_call_operand.vmem [shape: bf16[2,8,256], index: 1, kind: input, shape index: {}]
  %s2 = inlined_call_operand.vmem [shape: bf16[2,80,16], index: 2, kind: input, shape index: {}]
  %s3 = inlined_call_operand.vmem [shape: bf16[2,80,16], index: 3, kind: input, shape index: {}]
  %s4 = inlined_call_operand.vmem [shape: f32[2,1,8], index: 4, kind: input, shape index: {}]
  %s5 = inlined_call_operand.vmem [shape: bf16[1104,128], index: 5, kind: input, shape index: {}]
  %s6 = inlined_call_operand.vmem [shape: bf16[1152,128], index: 6, kind: input, shape index: {}]
  %s7 = inlined_call_operand.vmem [shape: f32[9,128], index: 7, kind: input, shape index: {}]
  %s8 = inlined_call_operand.vmem [shape: f32[9,128], index: 8, kind: input, shape index: {}]
  %s9 = inlined_call_operand.vmem [shape: f32[1,128], index: 9, kind: input, shape index: {}]
  %s10 = inlined_call_operand.<no memory space> [shape: f32[1,1], index: 10, kind: input, shape index: {}]
  %s11 = inlined_call_operand.hbm [shape: f32[2,16,128], index: 11, kind: output, shape index: {0}]
  %s12 = inlined_call_operand.hbm [shape: f32[2,1,16], index: 12, kind: output, shape index: {1}]
  %13 = xla_tuple %s11, %s12
  %s14 = sld [smem:[#allocation0]]
  $region85: #{_block_forward.1} parent=0
    _
  %s16 = ssub.s32 1, %s14
  %s17 = scalar_select 0, %s16, %s14
  %v18 = vstv %s10
  %19 = vst [vmem:[#allocation2] sm:$0x1] %v18
  $region1: #{_block_forward.1} parent=0
    #allocation3 [shape = 'u8[16384]{0}', space=vmem, size = 0x4000, scoped, tag = 'output window, operand 0']
    #allocation4 [shape = 's32[2]{0}', space=sflag, size = 0x8, scoped, tag = 'scoped memory for _block_forward.1']
    #allocation5 [shape = 'u8[1024]{0}', space=vmem, size = 0x400, scoped, tag = 'output window, operand 1']
    #allocation6 [shape = 's32[2]{0}', space=sflag, size = 0x8, scoped, tag = 'scoped memory for _block_forward.1']
    %20 = vsyncpa [#allocation4], 0
    %s21 = scalar_lea.sflag [#allocation4], 1
    %22 = vsyncpa %s21, 0
    %23 = vsyncpa [#allocation6], 0
    %s24 = scalar_lea.sflag [#allocation6], 1
    %25 = vsyncpa %s24, 0
    loop: start=0, step=1, limit=4
    $region2: #{_block_forward.1} parent=1 // loop_pre_header
      _
    $region3: #{_block_forward.1} parent=1 // loop_header
      %s27 = sphi 0, %s31
      %p28 = scmp.ge.s32.totalorder %s27, 4
      %s37 = sphi 0, %s39
      %s40 = sphi 0, %s37
      %s41 = sphi 0, %s40
      %s57 = sphi 0, %s41
      %s63 = sphi 0, %s65
      %s66 = sphi 0, %s63
      %s67 = sphi 0, %s66
      %s83 = sphi 0, %s67
      %s89 = sphi 0, %s91
      %s92 = sphi 0, %s89
      %s93 = sphi 0, %s92
      %s109 = sphi 0, %s93
      %s115 = sphi 0, %s117
      %s118 = sphi 0, %s115
      %s119 = sphi 0, %s118
      %s135 = sphi 0, %s119
      %s141 = sphi 0, %s143
      %s144 = sphi 0, %s141
      %s145 = sphi 0, %s144
      %s161 = sphi 0, %s145
      %s165 = sphi 0, %s165
      %s167 = sphi 0, %s165
      %s168 = sphi 0, %s167
      %s182 = sphi 0, %s168
      %s186 = sphi 0, %s186
      %s188 = sphi 0, %s186
      %s189 = sphi 0, %s188
      %s203 = sphi 0, %s189
      %s207 = sphi 0, %s207
      %s209 = sphi 0, %s207
      %s210 = sphi 0, %s209
      %s224 = sphi 0, %s210
      %s228 = sphi 0, %s228
      %s230 = sphi 0, %s228
      %s231 = sphi 0, %s230
      %s245 = sphi 0, %s231
      %s249 = sphi 0, %s249
      %s251 = sphi 0, %s249
      %s252 = sphi 0, %s251
      %s266 = sphi 0, %s252
      %s270 = sphi 0, %s270
      %s272 = sphi 0, %s270
      %s273 = sphi 0, %s272
      %s287 = sphi 0, %s273
      %s293 = sphi 0, %s295
      %s296 = sphi 0, %s293
      %s297 = sphi 0, %s296
      %s313 = sphi 0, %s297
      %s319 = sphi 0, %s321
      %s322 = sphi 0, %s319
      %s323 = sphi 0, %s322
      %s339 = sphi 0, %s323
    $region4: #{_block_forward.1} parent=1 // loop_header_branch
      %30 = sbr.rel (%p28) target = $region8
    $region5: #{_block_forward.1} parent=1 // loop_body
      %s32 = ssub.s32 %s27, 1
      %s33 = ssub.s32 %s27, 2
      %s34 = sadd.s32 %s27, 1
      %s35 = ssub.s32 %s27, %s34
      %p36 = scmp.eq.s32.totalorder %s35, 0
      %s38 = sadd.s32 %s37, 1
      %s39 = scalar_select %p36, %s37, %s38
      %p42 = pneg %p36
      %p43 = scmp.eq.s32.totalorder %s27, 1
      %p44 = por %p42, %p43
      %p45 = scmp.ne.s32.totalorder %s37, %s40
      %p46 = scmp.eq.s32.totalorder %s27, 0
      %p47 = por %p45, %p46
      %p48 = scmp.ne.s32.totalorder %s37, %s40
      %p49 = scmp.eq.s32.totalorder %s32, 1
      %p50 = por %p48, %p49
      %p51 = scmp.ne.s32.totalorder %s40, %s41
      %p52 = scmp.eq.s32.totalorder %s32, 0
      %p53 = por %p51, %p52
      %p54 = scmp.ne.s32.totalorder %s40, %s41
      %p55 = scmp.eq.s32.totalorder %s33, 1
      %p56 = por %p54, %p55
      %p58 = scmp.ne.s32.totalorder %s41, %s57
      %p59 = scmp.eq.s32.totalorder %s33, 0
      %p60 = por %p58, %p59
      %s61 = ssub.s32 %s27, %s34
      %p62 = scmp.eq.s32.totalorder %s61, 0
      %s64 = sadd.s32 %s63, 1
      %s65 = scalar_select %p62, %s63, %s64
      %p68 = pneg %p62
      %p69 = scmp.eq.s32.totalorder %s27, 1
      %p70 = por %p68, %p69
      %p71 = scmp.ne.s32.totalorder %s63, %s66
      %p72 = scmp.eq.s32.totalorder %s27, 0
      %p73 = por %p71, %p72
      %p74 = scmp.ne.s32.totalorder %s63, %s66
      %p75 = scmp.eq.s32.totalorder %s32, 1
      %p76 = por %p74, %p75
      %p77 = scmp.ne.s32.totalorder %s66, %s67
      %p78 = scmp.eq.s32.totalorder %s32, 0
      %p79 = por %p77, %p78
      %p80 = scmp.ne.s32.totalorder %s66, %s67
      %p81 = scmp.eq.s32.totalorder %s33, 1
      %p82 = por %p80, %p81
      %p84 = scmp.ne.s32.totalorder %s67, %s83
      %p85 = scmp.eq.s32.totalorder %s33, 0
      %p86 = por %p84, %p85
      %s87 = ssub.s32 %s27, %s34
      %p88 = scmp.eq.s32.totalorder %s87, 0
      %s90 = sadd.s32 %s89, 1
      %s91 = scalar_select %p88, %s89, %s90
      %p94 = pneg %p88
      %p95 = scmp.eq.s32.totalorder %s27, 1
      %p96 = por %p94, %p95
      %p97 = scmp.ne.s32.totalorder %s89, %s92
      %p98 = scmp.eq.s32.totalorder %s27, 0
      %p99 = por %p97, %p98
      %p100 = scmp.ne.s32.totalorder %s89, %s92
      %p101 = scmp.eq.s32.totalorder %s32, 1
      %p102 = por %p100, %p101
      %p103 = scmp.ne.s32.totalorder %s92, %s93
      %p104 = scmp.eq.s32.totalorder %s32, 0
      %p105 = por %p103, %p104
      %p106 = scmp.ne.s32.totalorder %s92, %s93
      %p107 = scmp.eq.s32.totalorder %s33, 1
      %p108 = por %p106, %p107
      %p110 = scmp.ne.s32.totalorder %s93, %s109
      %p111 = scmp.eq.s32.totalorder %s33, 0
      %p112 = por %p110, %p111
      %s113 = ssub.s32 %s27, %s34
      %p114 = scmp.eq.s32.totalorder %s113, 0
      %s116 = sadd.s32 %s115, 1
      %s117 = scalar_select %p114, %s115, %s116
      %p120 = pneg %p114
      %p121 = scmp.eq.s32.totalorder %s27, 1
      %p122 = por %p120, %p121
      %p123 = scmp.ne.s32.totalorder %s115, %s118
      %p124 = scmp.eq.s32.totalorder %s27, 0
      %p125 = por %p123, %p124
      %p126 = scmp.ne.s32.totalorder %s115, %s118
      %p127 = scmp.eq.s32.totalorder %s32, 1
      %p128 = por %p126, %p127
      %p129 = scmp.ne.s32.totalorder %s118, %s119
      %p130 = scmp.eq.s32.totalorder %s32, 0
      %p131 = por %p129, %p130
      %p132 = scmp.ne.s32.totalorder %s118, %s119
      %p133 = scmp.eq.s32.totalorder %s33, 1
      %p134 = por %p132, %p133
      %p136 = scmp.ne.s32.totalorder %s119, %s135
      %p137 = scmp.eq.s32.totalorder %s33, 0
      %p138 = por %p136, %p137
      %s139 = ssub.s32 %s27, %s34
      %p140 = scmp.eq.s32.totalorder %s139, 0
      %s142 = sadd.s32 %s141, 1
      %s143 = scalar_select %p140, %s141, %s142
      %p146 = pneg %p140
      %p147 = scmp.eq.s32.totalorder %s27, 1
      %p148 = por %p146, %p147
      %p149 = scmp.ne.s32.totalorder %s141, %s144
      %p150 = scmp.eq.s32.totalorder %s27, 0
      %p151 = por %p149, %p150
      %p152 = scmp.ne.s32.totalorder %s141, %s144
      %p153 = scmp.eq.s32.totalorder %s32, 1
      %p154 = por %p152, %p153
      %p155 = scmp.ne.s32.totalorder %s144, %s145
      %p156 = scmp.eq.s32.totalorder %s32, 0
      %p157 = por %p155, %p156
      %p158 = scmp.ne.s32.totalorder %s144, %s145
      %p159 = scmp.eq.s32.totalorder %s33, 1
      %p160 = por %p158, %p159
      %p162 = scmp.ne.s32.totalorder %s145, %s161
      %p163 = scmp.eq.s32.totalorder %s33, 0
      %p164 = por %p162, %p163
      %s166 = sadd.s32 %s165, 1
      %p169 = scmp.eq.s32.totalorder %s27, 1
      %p170 = scmp.ne.s32.totalorder %s165, %s167
      %p171 = scmp.eq.s32.totalorder %s27, 0
      %p172 = por %p170, %p171
      %p173 = scmp.ne.s32.totalorder %s165, %s167
      %p174 = scmp.eq.s32.totalorder %s32, 1
      %p175 = por %p173, %p174
      %p176 = scmp.ne.s32.totalorder %s167, %s168
      %p177 = scmp.eq.s32.totalorder %s32, 0
      %p178 = por %p176, %p177
      %p179 = scmp.ne.s32.totalorder %s167, %s168
      %p180 = scmp.eq.s32.totalorder %s33, 1
      %p181 = por %p179, %p180
      %p183 = scmp.ne.s32.totalorder %s168, %s182
      %p184 = scmp.eq.s32.totalorder %s33, 0
      %p185 = por %p183, %p184
      %s187 = sadd.s32 %s186, 1
      %p190 = scmp.eq.s32.totalorder %s27, 1
      %p191 = scmp.ne.s32.totalorder %s186, %s188
      %p192 = scmp.eq.s32.totalorder %s27, 0
      %p193 = por %p191, %p192
      %p194 = scmp.ne.s32.totalorder %s186, %s188
      %p195 = scmp.eq.s32.totalorder %s32, 1
      %p196 = por %p194, %p195
      %p197 = scmp.ne.s32.totalorder %s188, %s189
      %p198 = scmp.eq.s32.totalorder %s32, 0
      %p199 = por %p197, %p198
      %p200 = scmp.ne.s32.totalorder %s188, %s189
      %p201 = scmp.eq.s32.totalorder %s33, 1
      %p202 = por %p200, %p201
      %p204 = scmp.ne.s32.totalorder %s189, %s203
      %p205 = scmp.eq.s32.totalorder %s33, 0
      %p206 = por %p204, %p205
      %s208 = sadd.s32 %s207, 1
      %p211 = scmp.eq.s32.totalorder %s27, 1
      %p212 = scmp.ne.s32.totalorder %s207, %s209
      %p213 = scmp.eq.s32.totalorder %s27, 0
      %p214 = por %p212, %p213
      %p215 = scmp.ne.s32.totalorder %s207, %s209
      %p216 = scmp.eq.s32.totalorder %s32, 1
      %p217 = por %p215, %p216
      %p218 = scmp.ne.s32.totalorder %s209, %s210
      %p219 = scmp.eq.s32.totalorder %s32, 0
      %p220 = por %p218, %p219
      %p221 = scmp.ne.s32.totalorder %s209, %s210
      %p222 = scmp.eq.s32.totalorder %s33, 1
      %p223 = por %p221, %p222
      %p225 = scmp.ne.s32.totalorder %s210, %s224
      %p226 = scmp.eq.s32.totalorder %s33, 0
      %p227 = por %p225, %p226
      %s229 = sadd.s32 %s228, 1
      %p232 = scmp.eq.s32.totalorder %s27, 1
      %p233 = scmp.ne.s32.totalorder %s228, %s230
      %p234 = scmp.eq.s32.totalorder %s27, 0
      %p235 = por %p233, %p234
      %p236 = scmp.ne.s32.totalorder %s228, %s230
      %p237 = scmp.eq.s32.totalorder %s32, 1
      %p238 = por %p236, %p237
      %p239 = scmp.ne.s32.totalorder %s230, %s231
      %p240 = scmp.eq.s32.totalorder %s32, 0
      %p241 = por %p239, %p240
      %p242 = scmp.ne.s32.totalorder %s230, %s231
      %p243 = scmp.eq.s32.totalorder %s33, 1
      %p244 = por %p242, %p243
      %p246 = scmp.ne.s32.totalorder %s231, %s245
      %p247 = scmp.eq.s32.totalorder %s33, 0
      %p248 = por %p246, %p247
      %s250 = sadd.s32 %s249, 1
      %p253 = scmp.eq.s32.totalorder %s27, 1
      %p254 = scmp.ne.s32.totalorder %s249, %s251
      %p255 = scmp.eq.s32.totalorder %s27, 0
      %p256 = por %p254, %p255
      %p257 = scmp.ne.s32.totalorder %s249, %s251
      %p258 = scmp.eq.s32.totalorder %s32, 1
      %p259 = por %p257, %p258
      %p260 = scmp.ne.s32.totalorder %s251, %s252
      %p261 = scmp.eq.s32.totalorder %s32, 0
      %p262 = por %p260, %p261
      %p263 = scmp.ne.s32.totalorder %s251, %s252
      %p264 = scmp.eq.s32.totalorder %s33, 1
      %p265 = por %p263, %p264
      %p267 = scmp.ne.s32.totalorder %s252, %s266
      %p268 = scmp.eq.s32.totalorder %s33, 0
      %p269 = por %p267, %p268
      %s271 = sadd.s32 %s270, 1
      %p274 = scmp.eq.s32.totalorder %s27, 1
      %p275 = scmp.ne.s32.totalorder %s270, %s272
      %p276 = scmp.eq.s32.totalorder %s27, 0
      %p277 = por %p275, %p276
      %p278 = scmp.ne.s32.totalorder %s270, %s272
      %p279 = scmp.eq.s32.totalorder %s32, 1
      %p280 = por %p278, %p279
      %p281 = scmp.ne.s32.totalorder %s272, %s273
      %p282 = scmp.eq.s32.totalorder %s32, 0
      %p283 = por %p281, %p282
      %p284 = scmp.ne.s32.totalorder %s272, %s273
      %p285 = scmp.eq.s32.totalorder %s33, 1
      %p286 = por %p284, %p285
      %p288 = scmp.ne.s32.totalorder %s273, %s287
      %p289 = scmp.eq.s32.totalorder %s33, 0
      %p290 = por %p288, %p289
      %s291 = ssub.s32 %s27, %s34
      %p292 = scmp.eq.s32.totalorder %s291, 0
      %s294 = sadd.s32 %s293, 1
      %s295 = scalar_select %p292, %s293, %s294
      %p298 = pneg %p292
      %p299 = scmp.eq.s32.totalorder %s27, 1
      %p300 = por %p298, %p299
      %p301 = scmp.ne.s32.totalorder %s293, %s296
      %p302 = scmp.eq.s32.totalorder %s27, 0
      %p303 = por %p301, %p302
      %p304 = scmp.ne.s32.totalorder %s293, %s296
      %p305 = scmp.eq.s32.totalorder %s32, 1
      %p306 = por %p304, %p305
      %p307 = scmp.ne.s32.totalorder %s296, %s297
      %p308 = scmp.eq.s32.totalorder %s32, 0
      %p309 = por %p307, %p308
      %p310 = scmp.ne.s32.totalorder %s296, %s297
      %p311 = scmp.eq.s32.totalorder %s33, 1
      %p312 = por %p310, %p311
      %p314 = scmp.ne.s32.totalorder %s297, %s313
      %p315 = scmp.eq.s32.totalorder %s33, 0
      %p316 = por %p314, %p315
      %s317 = ssub.s32 %s27, %s34
      %p318 = scmp.eq.s32.totalorder %s317, 0
      %s320 = sadd.s32 %s319, 1
      %s321 = scalar_select %p318, %s319, %s320
      %p324 = pneg %p318
      %p325 = scmp.eq.s32.totalorder %s27, 1
      %p326 = por %p324, %p325
      %p327 = scmp.ne.s32.totalorder %s319, %s322
      %p328 = scmp.eq.s32.totalorder %s27, 0
      %p329 = por %p327, %p328
      %p330 = scmp.ne.s32.totalorder %s319, %s322
      %p331 = scmp.eq.s32.totalorder %s32, 1
      %p332 = por %p330, %p331
      %p333 = scmp.ne.s32.totalorder %s322, %s323
      %p334 = scmp.eq.s32.totalorder %s32, 0
      %p335 = por %p333, %p334
      %p336 = scmp.ne.s32.totalorder %s322, %s323
      %p337 = scmp.eq.s32.totalorder %s33, 1
      %p338 = por %p336, %p337
      %p340 = scmp.ne.s32.totalorder %s323, %s339
      %p341 = scmp.eq.s32.totalorder %s33, 0
      %p342 = por %p340, %p341
      %p343 = scmp.le.s32.totalorder 1, %s27
      %p344 = scmp.lt.s32.totalorder %s27, 3
      %p345 = pnand %p343, %p344
      %p346 = pneg %p345
      // Predicated region
      $region9: #{_block_forward.1} parent=5 // pred_check
        _
      $region10: #{_block_forward.1} parent=5 // pred_check_branch
        %348 = sbr.rel (%p345) target = $region12
      $region11: #{_block_forward.1} parent=5 // pred_region
        %s349 = ssub.s32 %s27, 1
        // Predicated region
        $region13: #{_block_forward.1} parent=11 // pred_check
          %p350 = pneg %p178
        $region14: #{_block_forward.1} parent=11 // pred_check_branch
          %352 = sbr.rel (%p350) target = $region16
        $region15: #{_block_forward.1} parent=11 // pred_region
          _
        $region16: #{_block_forward.1} parent=11 // pred_fallthru
          _
        // Predicated region
        $region17: #{_block_forward.1} parent=11 // pred_check
          %p353 = pneg %p199
        $region18: #{_block_forward.1} parent=11 // pred_check_branch
          %355 = sbr.rel (%p353) target = $region20
        $region19: #{_block_forward.1} parent=11 // pred_region
          _
        $region20: #{_block_forward.1} parent=11 // pred_fallthru
          _
        // Predicated region
        $region21: #{_block_forward.1} parent=11 // pred_check
          %p356 = pneg %p220
        $region22: #{_block_forward.1} parent=11 // pred_check_branch
          %358 = sbr.rel (%p356) target = $region24
        $region23: #{_block_forward.1} parent=11 // pred_region
          _
        $region24: #{_block_forward.1} parent=11 // pred_fallthru
          _
        // Predicated region
        $region25: #{_block_forward.1} parent=11 // pred_check
          %p359 = pneg %p241
        $region26: #{_block_forward.1} parent=11 // pred_check_branch
          %361 = sbr.rel (%p359) target = $region28
        $region27: #{_block_forward.1} parent=11 // pred_region
          _
        $region28: #{_block_forward.1} parent=11 // pred_fallthru
          _
        // Predicated region
        $region29: #{_block_forward.1} parent=11 // pred_check
          %p362 = pneg %p262
        $region30: #{_block_forward.1} parent=11 // pred_check_branch
          %364 = sbr.rel (%p362) target = $region32
        $region31: #{_block_forward.1} parent=11 // pred_region
          _
        $region32: #{_block_forward.1} parent=11 // pred_fallthru
          _
        // Predicated region
        $region33: #{_block_forward.1} parent=11 // pred_check
          %p365 = pneg %p283
        $region34: #{_block_forward.1} parent=11 // pred_check_branch
          %367 = sbr.rel (%p365) target = $region36
        $region35: #{_block_forward.1} parent=11 // pred_region
          _
        $region36: #{_block_forward.1} parent=11 // pred_fallthru
          _
      $region12: #{_block_forward.1} parent=5 // pred_fallthru
        _
      %p368 = scmp.lt.s32.totalorder %s27, 2
      // Predicated region
      $region37: #{_block_forward.1} parent=5 // pred_check
        %p369 = pneg %p368
      $region38: #{_block_forward.1} parent=5 // pred_check_branch
        %371 = sbr.rel (%p369) target = $region40
      $region39: #{_block_forward.1} parent=5 // pred_region
        // Predicated region
        $region41: #{_block_forward.1} parent=39 // pred_check
          %p372 = pneg %p47
        $region42: #{_block_forward.1} parent=39 // pred_check_branch
          %374 = sbr.rel (%p372) target = $region44
        $region43: #{_block_forward.1} parent=39 // pred_region
          %p375 = scmp.lt.s32.totalorder %s27, 1
          %s376 = scalar_select %p375, %s27, 1
          %s377 = smul.addr %s376, 2
          %s378 = smul.addr %s377, 8
          %s379 = scalar_lea.vmem %s0, %s378
        $region44: #{_block_forward.1} parent=39 // pred_fallthru
          _
        // Predicated region
        $region45: #{_block_forward.1} parent=39 // pred_check
          %p380 = pneg %p73
        $region46: #{_block_forward.1} parent=39 // pred_check_branch
          %382 = sbr.rel (%p380) target = $region48
        $region47: #{_block_forward.1} parent=39 // pred_region
          %p383 = scmp.lt.s32.totalorder %s27, 1
          %s384 = scalar_select %p383, %s27, 1
          %s385 = smul.addr %s384, 2
          %s386 = smul.addr %s385, 4
          %s387 = scalar_lea.vmem %s1, %s386
        $region48: #{_block_forward.1} parent=39 // pred_fallthru
          _
        // Predicated region
        $region49: #{_block_forward.1} parent=39 // pred_check
          %p388 = pneg %p99
        $region50: #{_block_forward.1} parent=39 // pred_check_branch
          %390 = sbr.rel (%p388) target = $region52
        $region51: #{_block_forward.1} parent=39 // pred_region
          %p391 = scmp.lt.s32.totalorder %s27, 1
          %s392 = scalar_select %p391, %s27, 1
          %s393 = smul.addr %s392, 10
          %s394 = smul.addr %s393, 4
          %s395 = scalar_lea.vmem %s2, %s394
        $region52: #{_block_forward.1} parent=39 // pred_fallthru
          _
        // Predicated region
        $region53: #{_block_forward.1} parent=39 // pred_check
          %p396 = pneg %p125
        $region54: #{_block_forward.1} parent=39 // pred_check_branch
          %398 = sbr.rel (%p396) target = $region56
        $region55: #{_block_forward.1} parent=39 // pred_region
          %p399 = scmp.lt.s32.totalorder %s27, 1
          %s400 = scalar_select %p399, %s27, 1
          %s401 = smul.addr %s400, 10
          %s402 = smul.addr %s401, 4
          %s403 = scalar_lea.vmem %s3, %s402
        $region56: #{_block_forward.1} parent=39 // pred_fallthru
          _
        // Predicated region
        $region57: #{_block_forward.1} parent=39 // pred_check
          %p404 = pneg %p151
        $region58: #{_block_forward.1} parent=39 // pred_check_branch
          %406 = sbr.rel (%p404) target = $region60
        $region59: #{_block_forward.1} parent=39 // pred_region
          %p407 = scmp.lt.s32.totalorder %s27, 1
          %s408 = scalar_select %p407, %s27, 1
          %s409 = scalar_lea.vmem %s4, %s408
        $region60: #{_block_forward.1} parent=39 // pred_fallthru
          _
      $region40: #{_block_forward.1} parent=5 // pred_fallthru
        _
      %p410 = scmp.le.s32.totalorder 1, %s27
      %p411 = scmp.lt.s32.totalorder %s27, 3
      %p412 = pnand %p410, %p411
      %p413 = pneg %p412
      // Predicated region
      $region61: #{_block_forward.1} parent=5 // pred_check
        _
      $region62: #{_block_forward.1} parent=5 // pred_check_branch
        %415 = sbr.rel (%p412) target = $region64
      $region63: #{_block_forward.1} parent=5 // pred_region
        %s416 = ssub.s32 %s27, 1
        %p417 = scmp.lt.s32.totalorder %s32, 1
        %s418 = scalar_select %p417, %s32, 1
        %s419 = smul.addr %s418, 2
        %s420 = smul.addr %s419, 8
        %s421 = scalar_lea.vmem %s0, %s420
        %p422 = pneg %p53
        %p423 = pneg %p50
        %p424 = scmp.lt.s32.totalorder %s32, 1
        %s425 = scalar_select %p424, %s32, 1
        %s426 = smul.addr %s425, 2
        %s427 = smul.addr %s426, 4
        %s428 = scalar_lea.vmem %s1, %s427
        %p429 = pneg %p79
        %p430 = pneg %p76
        %p431 = scmp.lt.s32.totalorder %s32, 1
        %s432 = scalar_select %p431, %s32, 1
        %s433 = smul.addr %s432, 10
        %s434 = smul.addr %s433, 4
        %s435 = scalar_lea.vmem %s2, %s434
        %p436 = pneg %p105
        %p437 = pneg %p102
        %p438 = scmp.lt.s32.totalorder %s32, 1
        %s439 = scalar_select %p438, %s32, 1
        %s440 = smul.addr %s439, 10
        %s441 = smul.addr %s440, 4
        %s442 = scalar_lea.vmem %s3, %s441
        %p443 = pneg %p131
        %p444 = pneg %p128
        %p445 = scmp.lt.s32.totalorder %s32, 1
        %s446 = scalar_select %p445, %s32, 1
        %s447 = scalar_lea.vmem %s4, %s446
        %p448 = pneg %p157
        %p449 = pneg %p154
        %p450 = pneg %p178
        %p451 = pneg %p175
        %p452 = pneg %p199
        %p453 = pneg %p196
        %p454 = pneg %p220
        %p455 = pneg %p217
        %p456 = pneg %p241
        %p457 = pneg %p238
        %p458 = pneg %p262
        %p459 = pneg %p259
        %p460 = pneg %p283
        %p461 = pneg %p280
        %p462 = pneg %p309
        %p463 = pneg %p306
        %s464 = sand.u32 %s296, 1
        %s465 = scalar_lea.sflag [#allocation4], %s464
        %s466 = sand.u32 %s296, 1
        %s467 = smul.addr %s466, 16
        %s468 = scalar_lea.vmem [#allocation3], %s467
        %p469 = pneg %p335
        %p470 = pneg %p332
        %s471 = sand.u32 %s322, 1
        %s472 = scalar_lea.sflag [#allocation6], %s471
        %s473 = sand.u32 %s322, 1
        %s474 = scalar_lea.vmem [#allocation5], %s473
        %p475 = scmp.lt.s32.totalorder %s32, 1
        %s476 = scalar_select %p475, %s32, 1
        %s477 = smul.addr %s476, 2
        %s478 = smul.addr %s477, 8
        %s479 = scalar_lea.vmem %s0, %s478
        %p480 = scmp.lt.s32.totalorder %s32, 1
        %s481 = scalar_select %p480, %s32, 1
        %s482 = smul.addr %s481, 2
        %s483 = smul.addr %s482, 4
        %s484 = scalar_lea.vmem %s1, %s483
        %p485 = scmp.lt.s32.totalorder %s32, 1
        %s486 = scalar_select %p485, %s32, 1
        %s487 = smul.addr %s486, 10
        %s488 = smul.addr %s487, 4
        %s489 = scalar_lea.vmem %s2, %s488
        %p490 = scmp.lt.s32.totalorder %s32, 1
        %s491 = scalar_select %p490, %s32, 1
        %s492 = smul.addr %s491, 10
        %s493 = smul.addr %s492, 4
        %s494 = scalar_lea.vmem %s3, %s493
        %p495 = scmp.lt.s32.totalorder %s32, 1
        %s496 = scalar_select %p495, %s32, 1
        %s497 = scalar_lea.vmem %s4, %s496
        %v499 = vld [vmem:[%s484] sm:$0xff]
        %v500 = vld [vmem:[%s489] sm:$0xf]
        %v501 = vld [vmem:[%s489 + $0x4] sm:$0xf]
        %v502 = vld [vmem:[%s489 + $0x8] sm:$0xf]
        %v503 = vld [vmem:[%s489 + $0xc] sm:$0xf]
        %v504 = vld [vmem:[%s489 + $0x10] sm:$0xf]
        %v505 = vld [vmem:[%s489 + $0x14] sm:$0xf]
        %v506 = vld [vmem:[%s489 + $0x18] sm:$0xf]
        %v507 = vld [vmem:[%s489 + $0x1c] sm:$0xf]
        %v508 = vld [vmem:[%s489 + $0x20] sm:$0xf]
        %v509 = vld [vmem:[%s489 + $0x24] sm:$0xf]
        %v510 = vld [vmem:[%s494] sm:$0xf]
        %v511 = vld [vmem:[%s494 + $0x4] sm:$0xf]
        %v512 = vld [vmem:[%s494 + $0x8] sm:$0xf]
        %v513 = vld [vmem:[%s494 + $0xc] sm:$0xf]
        %v514 = vld [vmem:[%s494 + $0x10] sm:$0xf]
        %v515 = vld [vmem:[%s494 + $0x14] sm:$0xf]
        %v516 = vld [vmem:[%s494 + $0x18] sm:$0xf]
        %v517 = vld [vmem:[%s494 + $0x1c] sm:$0xf]
        %v518 = vld [vmem:[%s494 + $0x20] sm:$0xf]
        %v519 = vld [vmem:[%s494 + $0x24] sm:$0xf]
        %v520 = vld [vmem:[%s497] sm:$0x1]
        %v521 = vld [vmem:[%s479] sm:$0xff]
        %v522 = vld [vmem:[%s479 + $0x8] sm:$0xff]
        %v523 = vld [vmem:[%s5] sm:$0xf]
        %v524 = vld [vmem:[%s5 + $0x4] sm:$0xf]
        %v525 = vld [vmem:[%s5 + $0x8] sm:$0xf]
        %v526 = vld [vmem:[%s5 + $0xc] sm:$0xf]
        %v527 = vld [vmem:[%s6] sm:$0xf]
        %v528 = vld [vmem:[%s6 + $0x4] sm:$0xf]
        %v529 = vld [vmem:[%s6 + $0x8] sm:$0xf]
        %v530 = vld [vmem:[%s6 + $0xc] sm:$0xf]
        %v531 = vld [vmem:[%s6 + $0x10] sm:$0xf]
        %v532 = vld [vmem:[%s6 + $0x14] sm:$0xf]
        %v533 = vld [vmem:[%s6 + $0x18] sm:$0xf]
        %v534 = vld [vmem:[%s6 + $0x1c] sm:$0xf]
        %v535 = vld [vmem:[%s6 + $0x20] sm:$0xf]
        %v536 = vld [vmem:[%s6 + $0x24] sm:$0xf]
        %v537 = vld [vmem:[%s6 + $0x28] sm:$0xf]
        %v538 = vld [vmem:[%s6 + $0x2c] sm:$0xf]
        %v539 = vld [vmem:[%s6 + $0x30] sm:$0xf]
        %v540 = vld [vmem:[%s6 + $0x34] sm:$0xf]
        %v541 = vld [vmem:[%s6 + $0x38] sm:$0xf]
        %v542 = vld [vmem:[%s6 + $0x3c] sm:$0xf]
        %v543 = vpack.c.bf16 %v522, %v521
        %v544 = vld [vmem:[%s7] sm:$0x1]
        %v545 = vperm.slane %v544, 0
        %v550 = vunpack.c.l.b16 %v523
        %v551 = vunpack.c.l.b16 %v524
        %v552 = vunpack.c.l.b16 %v525
        %v553 = vunpack.c.l.b16 %v526
        %v554 = vpack.c.b16 %v551, %v550
        %v555 = vpack.c.b16 %v553, %v552
        %vm558 = vcmask 261120
        %v560 = vsel %vm558, %v543, 0
        %562 = vmatpush.bf16.msra.mxu0 0
        %563 = vmatpush.bf16.msra.mxu0 0
        %564 = vmatpush.bf16.msra.mxu0 0
        %565 = vmatpush.bf16.msra.mxu0 0
        %566 = vmatpush.bf16.msra.mxu0 0
        %567 = vmatpush.bf16.msra.mxu0 0
        %568 = vmatpush.bf16.msra.mxu0 %v555
        %569 = vmatpush.bf16.msra.mxu0 %v554
        %570 = vmatmul.bf16.gmra.mxu0 %v560
        %v571 = vpop.f32.mrf.mxu0
        %v572 = vadd.f32 %v545, %v571
        %v573 = vpop.f32.mrf.mxu0
        %v574 = vadd.f32 %v545, %v573
        %575 = vdwg.mxu0
        %v576 = vmax.f32 %v572, 0.0
        %v577 = vmax.f32 %v574, 0.0
        %v578 = vpack.c.bf16 %v577, %v576
        %v579 = vld [vmem:[%s8] sm:$0x1]
        %v580 = vperm.slane %v579, 0
        %v597 = vunpack.c.l.b16 %v527
        %v598 = vunpack.c.l.b16 %v528
        %v599 = vunpack.c.l.b16 %v529
        %v600 = vunpack.c.l.b16 %v530
        %v601 = vunpack.c.l.b16 %v531
        %v602 = vunpack.c.l.b16 %v532
        %v603 = vunpack.c.l.b16 %v533
        %v604 = vunpack.c.l.b16 %v534
        %v605 = vunpack.c.l.b16 %v535
        %v606 = vunpack.c.l.b16 %v536
        %v607 = vunpack.c.l.b16 %v537
        %v608 = vunpack.c.l.b16 %v538
        %v609 = vunpack.c.l.b16 %v539
        %v610 = vunpack.c.l.b16 %v540
        %v611 = vunpack.c.l.b16 %v541
        %v612 = vunpack.c.l.b16 %v542
        %v613 = vpack.c.b16 %v598, %v597
        %v614 = vpack.c.b16 %v600, %v599
        %v615 = vpack.c.b16 %v602, %v601
        %v616 = vpack.c.b16 %v604, %v603
        %v617 = vpack.c.b16 %v606, %v605
        %v618 = vpack.c.b16 %v608, %v607
        %v619 = vpack.c.b16 %v610, %v609
        %v620 = vpack.c.b16 %v612, %v611
        %629 = vmatpush.bf16.msra.mxu0 %v620
        %630 = vmatpush.bf16.msra.mxu0 %v619
        %631 = vmatpush.bf16.msra.mxu0 %v618
        %632 = vmatpush.bf16.msra.mxu0 %v617
        %633 = vmatpush.bf16.msra.mxu0 %v616
        %634 = vmatpush.bf16.msra.mxu0 %v615
        %635 = vmatpush.bf16.msra.mxu0 %v614
        %636 = vmatpush.bf16.msra.mxu0 %v613
        %637 = vmatmul.bf16.gmra.mxu0 %v578
        %v638 = vpop.f32.mrf.mxu0
        %v639 = vadd.f32 %v580, %v638
        %v640 = vpop.f32.mrf.mxu0
        %v641 = vadd.f32 %v580, %v640
        %642 = vdwg.mxu0
        %v643 = vld [vmem:[%s5 + $0x10] sm:$0xf]
        %v644 = vld [vmem:[%s5 + $0x14] sm:$0xf]
        %v645 = vld [vmem:[%s5 + $0x18] sm:$0xf]
        %v646 = vld [vmem:[%s5 + $0x1c] sm:$0xf]
        %v647 = vld [vmem:[%s5 + $0x20] sm:$0xf]
        %v648 = vld [vmem:[%s5 + $0x24] sm:$0xf]
        %v649 = vld [vmem:[%s5 + $0x28] sm:$0xf]
        %v650 = vld [vmem:[%s5 + $0x2c] sm:$0xf]
        %v651 = vld [vmem:[%s5 + $0x30] sm:$0xf]
        %v652 = vld [vmem:[%s5 + $0x34] sm:$0xf]
        %v653 = vld [vmem:[%s5 + $0x38] sm:$0xf]
        %v654 = vld [vmem:[%s5 + $0x3c] sm:$0xf]
        %v655 = vld [vmem:[%s5 + $0x40] sm:$0xf]
        %v656 = vld [vmem:[%s5 + $0x44] sm:$0xf]
        %v657 = vld [vmem:[%s5 + $0x48] sm:$0xf]
        %v658 = vld [vmem:[%s5 + $0x4c] sm:$0xf]
        %v659 = vld [vmem:[%s5 + $0x50] sm:$0xf]
        %v660 = vld [vmem:[%s5 + $0x54] sm:$0xf]
        %v661 = vld [vmem:[%s5 + $0x58] sm:$0xf]
        %v662 = vld [vmem:[%s5 + $0x5c] sm:$0xf]
        %v663 = vld [vmem:[%s5 + $0x60] sm:$0xf]
        %v664 = vld [vmem:[%s5 + $0x64] sm:$0xf]
        %v665 = vld [vmem:[%s5 + $0x68] sm:$0xf]
        %v666 = vld [vmem:[%s5 + $0x6c] sm:$0xf]
        %v667 = vld [vmem:[%s5 + $0x70] sm:$0xf]
        %v668 = vld [vmem:[%s5 + $0x74] sm:$0xf]
        %v669 = vld [vmem:[%s5 + $0x78] sm:$0xf]
        %v670 = vld [vmem:[%s5 + $0x7c] sm:$0xf]
        %v671 = vld [vmem:[%s5 + $0x80] sm:$0xf]
        %v672 = vld [vmem:[%s5 + $0x84] sm:$0xf]
        %v673 = vld [vmem:[%s5 + $0x88] sm:$0xf]
        %v674 = vld [vmem:[%s5 + $0x8c] sm:$0xf]
        %v675 = vld [vmem:[%s6 + $0x40] sm:$0xf]
        %v676 = vld [vmem:[%s6 + $0x44] sm:$0xf]
        %v677 = vld [vmem:[%s6 + $0x48] sm:$0xf]
        %v678 = vld [vmem:[%s6 + $0x4c] sm:$0xf]
        %v679 = vld [vmem:[%s6 + $0x50] sm:$0xf]
        %v680 = vld [vmem:[%s6 + $0x54] sm:$0xf]
        %v681 = vld [vmem:[%s6 + $0x58] sm:$0xf]
        %v682 = vld [vmem:[%s6 + $0x5c] sm:$0xf]
        %v683 = vld [vmem:[%s6 + $0x60] sm:$0xf]
        %v684 = vld [vmem:[%s6 + $0x64] sm:$0xf]
        %v685 = vld [vmem:[%s6 + $0x68] sm:$0xf]
        %v686 = vld [vmem:[%s6 + $0x6c] sm:$0xf]
        %v687 = vld [vmem:[%s6 + $0x70] sm:$0xf]
        %v688 = vld [vmem:[%s6 + $0x74] sm:$0xf]
        %v689 = vld [vmem:[%s6 + $0x78] sm:$0xf]
        %v690 = vld [vmem:[%s6 + $0x7c] sm:$0xf]
        %v691 = vld [vmem:[%s7 + $0x1] sm:$0x1]
        %v692 = vperm.slane %v691, 0
        %v694 = vunpack.c.l.b16 %v499
        %v695 = vunpack.c.h.b16 %v499
        %v696 = vpack.c.b16 %v694, %v694
        %v697 = vpack.c.b16 %v695, %v695
        %v732 = vunpack.c.l.b16 %v643
        %v733 = vunpack.c.l.b16 %v644
        %v734 = vunpack.c.l.b16 %v645
        %v735 = vunpack.c.l.b16 %v646
        %v736 = vunpack.c.l.b16 %v647
        %v737 = vunpack.c.l.b16 %v648
        %v738 = vunpack.c.l.b16 %v649
        %v739 = vunpack.c.l.b16 %v650
        %v740 = vunpack.c.l.b16 %v651
        %v741 = vunpack.c.l.b16 %v652
        %v742 = vunpack.c.l.b16 %v653
        %v743 = vunpack.c.l.b16 %v654
        %v744 = vunpack.c.l.b16 %v655
        %v745 = vunpack.c.l.b16 %v656
        %v746 = vunpack.c.l.b16 %v657
        %v747 = vunpack.c.l.b16 %v658
        %v748 = vunpack.c.l.b16 %v659
        %v749 = vunpack.c.l.b16 %v660
        %v750 = vunpack.c.l.b16 %v661
        %v751 = vunpack.c.l.b16 %v662
        %v752 = vunpack.c.l.b16 %v663
        %v753 = vunpack.c.l.b16 %v664
        %v754 = vunpack.c.l.b16 %v665
        %v755 = vunpack.c.l.b16 %v666
        %v756 = vunpack.c.l.b16 %v667
        %v757 = vunpack.c.l.b16 %v668
        %v758 = vunpack.c.l.b16 %v669
        %v759 = vunpack.c.l.b16 %v670
        %v760 = vunpack.c.l.b16 %v671
        %v761 = vunpack.c.l.b16 %v672
        %v762 = vunpack.c.l.b16 %v673
        %v763 = vunpack.c.l.b16 %v674
        %v764 = vpack.c.b16 %v733, %v732
        %v765 = vpack.c.b16 %v735, %v734
        %v766 = vpack.c.b16 %v737, %v736
        %v767 = vpack.c.b16 %v739, %v738
        %v768 = vpack.c.b16 %v741, %v740
        %v769 = vpack.c.b16 %v743, %v742
        %v770 = vpack.c.b16 %v745, %v744
        %v771 = vpack.c.b16 %v747, %v746
        %v772 = vpack.c.b16 %v749, %v748
        %v773 = vpack.c.b16 %v751, %v750
        %v774 = vpack.c.b16 %v753, %v752
        %v775 = vpack.c.b16 %v755, %v754
        %v776 = vpack.c.b16 %v757, %v756
        %v777 = vpack.c.b16 %v759, %v758
        %v778 = vpack.c.b16 %v761, %v760
        %v779 = vpack.c.b16 %v763, %v762
        %796 = vmatpush.bf16.msra.mxu0 %v771
        %797 = vmatpush.bf16.msra.mxu0 %v770
        %798 = vmatpush.bf16.msra.mxu0 %v769
        %799 = vmatpush.bf16.msra.mxu0 %v768
        %800 = vmatpush.bf16.msra.mxu0 %v767
        %801 = vmatpush.bf16.msra.mxu0 %v766
        %802 = vmatpush.bf16.msra.mxu0 %v765
        %803 = vmatpush.bf16.msra.mxu0 %v764
        %804 = vmatmul.bf16.gmra.mxu0 %v696
        %v805 = vpop.f32.mrf.mxu0
        %v806 = vadd.f32 %v692, %v805
        %v807 = vpop.f32.mrf.mxu0
        %808 = vdwg.mxu0
        %809 = vmatpush.bf16.msra.mxu0 %v779
        %810 = vmatpush.bf16.msra.mxu0 %v778
        %811 = vmatpush.bf16.msra.mxu0 %v777
        %812 = vmatpush.bf16.msra.mxu0 %v776
        %813 = vmatpush.bf16.msra.mxu0 %v775
        %814 = vmatpush.bf16.msra.mxu0 %v774
        %815 = vmatpush.bf16.msra.mxu0 %v773
        %816 = vmatpush.bf16.msra.mxu0 %v772
        %817 = vmatmul.bf16.gmra.mxu0 %v697
        %v818 = vpop.f32.mrf.mxu0
        %v819 = vadd.f32 %v806, %v818
        %v820 = vpop.f32.mrf.mxu0
        %821 = vdwg.mxu0
        %v822 = vmax.f32 %v819, 0.0
        %v823 = vpack.c.bf16 %v822, %v822
        %v824 = vld [vmem:[%s8 + $0x1] sm:$0x1]
        %v825 = vperm.slane %v824, 0
        %v842 = vunpack.c.l.b16 %v675
        %v843 = vunpack.c.l.b16 %v676
        %v844 = vunpack.c.l.b16 %v677
        %v845 = vunpack.c.l.b16 %v678
        %v846 = vunpack.c.l.b16 %v679
        %v847 = vunpack.c.l.b16 %v680
        %v848 = vunpack.c.l.b16 %v681
        %v849 = vunpack.c.l.b16 %v682
        %v850 = vunpack.c.l.b16 %v683
        %v851 = vunpack.c.l.b16 %v684
        %v852 = vunpack.c.l.b16 %v685
        %v853 = vunpack.c.l.b16 %v686
        %v854 = vunpack.c.l.b16 %v687
        %v855 = vunpack.c.l.b16 %v688
        %v856 = vunpack.c.l.b16 %v689
        %v857 = vunpack.c.l.b16 %v690
        %v858 = vpack.c.b16 %v843, %v842
        %v859 = vpack.c.b16 %v845, %v844
        %v860 = vpack.c.b16 %v847, %v846
        %v861 = vpack.c.b16 %v849, %v848
        %v862 = vpack.c.b16 %v851, %v850
        %v863 = vpack.c.b16 %v853, %v852
        %v864 = vpack.c.b16 %v855, %v854
        %v865 = vpack.c.b16 %v857, %v856
        %874 = vmatpush.bf16.msra.mxu0 %v865
        %875 = vmatpush.bf16.msra.mxu0 %v864
        %876 = vmatpush.bf16.msra.mxu0 %v863
        %877 = vmatpush.bf16.msra.mxu0 %v862
        %878 = vmatpush.bf16.msra.mxu0 %v861
        %879 = vmatpush.bf16.msra.mxu0 %v860
        %880 = vmatpush.bf16.msra.mxu0 %v859
        %881 = vmatpush.bf16.msra.mxu0 %v858
        %882 = vmatmul.bf16.gmra.mxu0 %v823
        %v883 = vpop.f32.mrf.mxu0
        %v884 = vadd.f32 %v825, %v883
        %v885 = vpop.f32.mrf.mxu0
        %886 = vdwg.mxu0
        %v887 = vld [vmem:[%s5 + $0x90] sm:$0xf]
        %v888 = vld [vmem:[%s5 + $0x94] sm:$0xf]
        %v889 = vld [vmem:[%s6 + $0x80] sm:$0xf]
        %v890 = vld [vmem:[%s6 + $0x84] sm:$0xf]
        %v891 = vld [vmem:[%s6 + $0x88] sm:$0xf]
        %v892 = vld [vmem:[%s6 + $0x8c] sm:$0xf]
        %v893 = vld [vmem:[%s6 + $0x90] sm:$0xf]
        %v894 = vld [vmem:[%s6 + $0x94] sm:$0xf]
        %v895 = vld [vmem:[%s6 + $0x98] sm:$0xf]
        %v896 = vld [vmem:[%s6 + $0x9c] sm:$0xf]
        %v897 = vld [vmem:[%s6 + $0xa0] sm:$0xf]
        %v898 = vld [vmem:[%s6 + $0xa4] sm:$0xf]
        %v899 = vld [vmem:[%s6 + $0xa8] sm:$0xf]
        %v900 = vld [vmem:[%s6 + $0xac] sm:$0xf]
        %v901 = vld [vmem:[%s6 + $0xb0] sm:$0xf]
        %v902 = vld [vmem:[%s6 + $0xb4] sm:$0xf]
        %v903 = vld [vmem:[%s6 + $0xb8] sm:$0xf]
        %v904 = vld [vmem:[%s6 + $0xbc] sm:$0xf]
        %v905 = vld [vmem:[%s7 + $0x2] sm:$0x1]
        %v906 = vperm.slane %v905, 0
        %v917 = vunpack.c.l.b16 %v500
        %v918 = vunpack.c.l.b16 %v501
        %v919 = vunpack.c.l.b16 %v502
        %v920 = vunpack.c.l.b16 %v503
        %v921 = vunpack.c.l.b16 %v504
        %v922 = vunpack.c.l.b16 %v505
        %v923 = vunpack.c.l.b16 %v506
        %v924 = vunpack.c.l.b16 %v507
        %v925 = vunpack.c.l.b16 %v508
        %v926 = vunpack.c.l.b16 %v509
        %v927 = vpack.c.b16 %v918, %v917
        %v928 = vpack.c.b16 %v920, %v919
        %v929 = vpack.c.b16 %v922, %v921
        %v930 = vpack.c.b16 %v924, %v923
        %v931 = vpack.c.b16 %v926, %v925
        %v934 = vunpack.c.l.b16 %v887
        %v935 = vunpack.c.l.b16 %v888
        %v936 = vpack.c.b16 %v935, %v934
        %vm938 = vcmask 130048
        %v940 = vsel %vm938, %v927, 0
        %v943 = vsel %vm938, %v928, 0
        %v946 = vsel %vm938, %v929, 0
        %v949 = vsel %vm938, %v930, 0
        %v952 = vsel %vm938, %v931, 0
        %954 = vmatpush.bf16.msra.mxu0 0
        %955 = vmatpush.bf16.msra.mxu0 0
        %956 = vmatpush.bf16.msra.mxu0 0
        %957 = vmatpush.bf16.msra.mxu0 0
        %958 = vmatpush.bf16.msra.mxu0 0
        %959 = vmatpush.bf16.msra.mxu0 0
        %960 = vmatpush.bf16.msra.mxu0 0
        %961 = vmatpush.bf16.msra.mxu0 %v936
        %962 = vmatmul.bf16.gmra.mxu0 %v940
        %v963 = vpop.f32.mrf.mxu0
        %v964 = vadd.f32 %v906, %v963
        %v965 = vpop.f32.mrf.mxu0
        %v966 = vadd.f32 %v906, %v965
        %967 = vmatmul.bf16.gmra.mxu0 %v943
        %v968 = vpop.f32.mrf.mxu0
        %v969 = vadd.f32 %v906, %v968
        %v970 = vpop.f32.mrf.mxu0
        %v971 = vadd.f32 %v906, %v970
        %972 = vmatmul.bf16.gmra.mxu0 %v946
        %v973 = vpop.f32.mrf.mxu0
        %v974 = vadd.f32 %v906, %v973
        %v975 = vpop.f32.mrf.mxu0
        %v976 = vadd.f32 %v906, %v975
        %977 = vmatmul.bf16.gmra.mxu0 %v949
        %v978 = vpop.f32.mrf.mxu0
        %v979 = vadd.f32 %v906, %v978
        %v980 = vpop.f32.mrf.mxu0
        %v981 = vadd.f32 %v906, %v980
        %982 = vmatmul.bf16.gmra.mxu0 %v952
        %v983 = vpop.f32.mrf.mxu0
        %v984 = vadd.f32 %v906, %v983
        %v985 = vpop.f32.mrf.mxu0
        %v986 = vadd.f32 %v906, %v985
        %987 = vdwg.mxu0
        %v988 = vmax.f32 %v964, 0.0
        %v989 = vmax.f32 %v966, 0.0
        %v990 = vmax.f32 %v969, 0.0
        %v991 = vmax.f32 %v971, 0.0
        %v992 = vmax.f32 %v974, 0.0
        %v993 = vmax.f32 %v976, 0.0
        %v994 = vmax.f32 %v979, 0.0
        %v995 = vmax.f32 %v981, 0.0
        %v996 = vmax.f32 %v984, 0.0
        %v997 = vmax.f32 %v986, 0.0
        %v998 = vpack.c.bf16 %v989, %v988
        %v999 = vpack.c.bf16 %v991, %v990
        %v1000 = vpack.c.bf16 %v993, %v992
        %v1001 = vpack.c.bf16 %v995, %v994
        %v1002 = vpack.c.bf16 %v997, %v996
        %v1003 = vld [vmem:[%s8 + $0x2] sm:$0x1]
        %v1004 = vperm.slane %v1003, 0
        %v1021 = vunpack.c.l.b16 %v889
        %v1022 = vunpack.c.l.b16 %v890
        %v1023 = vunpack.c.l.b16 %v891
        %v1024 = vunpack.c.l.b16 %v892
        %v1025 = vunpack.c.l.b16 %v893
        %v1026 = vunpack.c.l.b16 %v894
        %v1027 = vunpack.c.l.b16 %v895
        %v1028 = vunpack.c.l.b16 %v896
        %v1029 = vunpack.c.l.b16 %v897
        %v1030 = vunpack.c.l.b16 %v898
        %v1031 = vunpack.c.l.b16 %v899
        %v1032 = vunpack.c.l.b16 %v900
        %v1033 = vunpack.c.l.b16 %v901
        %v1034 = vunpack.c.l.b16 %v902
        %v1035 = vunpack.c.l.b16 %v903
        %v1036 = vunpack.c.l.b16 %v904
        %v1037 = vpack.c.b16 %v1022, %v1021
        %v1038 = vpack.c.b16 %v1024, %v1023
        %v1039 = vpack.c.b16 %v1026, %v1025
        %v1040 = vpack.c.b16 %v1028, %v1027
        %v1041 = vpack.c.b16 %v1030, %v1029
        %v1042 = vpack.c.b16 %v1032, %v1031
        %v1043 = vpack.c.b16 %v1034, %v1033
        %v1044 = vpack.c.b16 %v1036, %v1035
        %1053 = vmatpush.bf16.msra.mxu0 %v1044
        %1054 = vmatpush.bf16.msra.mxu0 %v1043
        %1055 = vmatpush.bf16.msra.mxu0 %v1042
        %1056 = vmatpush.bf16.msra.mxu0 %v1041
        %1057 = vmatpush.bf16.msra.mxu0 %v1040
        %1058 = vmatpush.bf16.msra.mxu0 %v1039
        %1059 = vmatpush.bf16.msra.mxu0 %v1038
        %1060 = vmatpush.bf16.msra.mxu0 %v1037
        %1061 = vmatmul.bf16.gmra.mxu0 %v998
        %v1062 = vpop.f32.mrf.mxu0
        %v1063 = vadd.f32 %v1004, %v1062
        %v1064 = vpop.f32.mrf.mxu0
        %v1065 = vadd.f32 %v1004, %v1064
        %1066 = vmatmul.bf16.gmra.mxu0 %v999
        %v1067 = vpop.f32.mrf.mxu0
        %v1068 = vadd.f32 %v1004, %v1067
        %v1069 = vpop.f32.mrf.mxu0
        %v1070 = vadd.f32 %v1004, %v1069
        %1071 = vmatmul.bf16.gmra.mxu0 %v1000
        %v1072 = vpop.f32.mrf.mxu0
        %v1073 = vadd.f32 %v1004, %v1072
        %v1074 = vpop.f32.mrf.mxu0
        %v1075 = vadd.f32 %v1004, %v1074
        %1076 = vmatmul.bf16.gmra.mxu0 %v1001
        %v1077 = vpop.f32.mrf.mxu0
        %v1078 = vadd.f32 %v1004, %v1077
        %v1079 = vpop.f32.mrf.mxu0
        %v1080 = vadd.f32 %v1004, %v1079
        %1081 = vmatmul.bf16.gmra.mxu0 %v1002
        %v1082 = vpop.f32.mrf.mxu0
        %v1083 = vadd.f32 %v1004, %v1082
        %v1084 = vpop.f32.mrf.mxu0
        %v1085 = vadd.f32 %v1004, %v1084
        %1086 = vdwg.mxu0
        %v1087 = vpack.c.bf16 %v639, %v639
        %v1088 = vpack.c.bf16 %v641, %v641
        %v1089 = vunpack.c.l.bf16 %v1087
        %v1090 = vunpack.c.l.bf16 %v1088
        %v1091 = vsub.f32 %v639, %v1089
        %v1092 = vsub.f32 %v641, %v1090
        %v1093 = vpack.c.bf16 %v1091, %v1091
        %v1094 = vpack.c.bf16 %v1092, %v1092
        %v1105 = vunpack.c.l.b16 %v510
        %v1106 = vunpack.c.l.b16 %v511
        %v1107 = vunpack.c.l.b16 %v512
        %v1108 = vunpack.c.l.b16 %v513
        %v1109 = vunpack.c.l.b16 %v514
        %v1110 = vunpack.c.l.b16 %v515
        %v1111 = vunpack.c.l.b16 %v516
        %v1112 = vunpack.c.l.b16 %v517
        %v1113 = vunpack.c.l.b16 %v518
        %v1114 = vunpack.c.l.b16 %v519
        %v1115 = vpack.c.b16 %v1106, %v1105
        %v1116 = vpack.c.b16 %v1108, %v1107
        %v1117 = vpack.c.b16 %v1110, %v1109
        %v1118 = vpack.c.b16 %v1112, %v1111
        %v1119 = vpack.c.b16 %v1114, %v1113
        %v1122 = vunpack.c.l.b16 %v1093
        %v1123 = vunpack.c.l.b16 %v1094
        %v1124 = vpack.c.b16 %v1123, %v1122
        %v1127 = vsel %vm938, %v1115, 0
        %v1130 = vsel %vm938, %v1116, 0
        %v1133 = vsel %vm938, %v1117, 0
        %v1136 = vsel %vm938, %v1118, 0
        %v1139 = vsel %vm938, %v1119, 0
        %1141 = vmatpush.bf16.msra.mxu0 0
        %1142 = vmatpush.bf16.msra.mxu0 0
        %1143 = vmatpush.bf16.msra.mxu0 0
        %1144 = vmatpush.bf16.msra.mxu0 0
        %1145 = vmatpush.bf16.msra.mxu0 0
        %1146 = vmatpush.bf16.msra.mxu0 0
        %1147 = vmatpush.bf16.msra.mxu0 0
        %1148 = vmatpush.bf16.msra.mxu0 %v1124
        %1149 = vmatmul.bf16.gmra.mxu0 %v1127
        %v1150 = vpop.f32.mrf.mxu0
        %v1151 = vadd.f32 0.0, %v1150
        %v1152 = vpop.f32.mrf.mxu0
        %v1153 = vadd.f32 0.0, %v1152
        %1154 = vmatmul.bf16.gmra.mxu0 %v1130
        %v1155 = vpop.f32.mrf.mxu0
        %v1156 = vadd.f32 0.0, %v1155
        %v1157 = vpop.f32.mrf.mxu0
        %v1158 = vadd.f32 0.0, %v1157
        %1159 = vmatmul.bf16.gmra.mxu0 %v1133
        %v1160 = vpop.f32.mrf.mxu0
        %v1161 = vadd.f32 0.0, %v1160
        %v1162 = vpop.f32.mrf.mxu0
        %v1163 = vadd.f32 0.0, %v1162
        %1164 = vmatmul.bf16.gmra.mxu0 %v1136
        %v1165 = vpop.f32.mrf.mxu0
        %v1166 = vadd.f32 0.0, %v1165
        %v1167 = vpop.f32.mrf.mxu0
        %v1168 = vadd.f32 0.0, %v1167
        %1169 = vmatmul.bf16.gmra.mxu0 %v1139
        %v1170 = vpop.f32.mrf.mxu0
        %v1171 = vadd.f32 0.0, %v1170
        %v1172 = vpop.f32.mrf.mxu0
        %v1173 = vadd.f32 0.0, %v1172
        %1174 = vdwg.mxu0
        %v1177 = vunpack.c.l.b16 %v1087
        %v1178 = vunpack.c.l.b16 %v1088
        %v1179 = vpack.c.b16 %v1178, %v1177
        %1181 = vmatpush.bf16.msra.mxu0 0
        %1182 = vmatpush.bf16.msra.mxu0 0
        %1183 = vmatpush.bf16.msra.mxu0 0
        %1184 = vmatpush.bf16.msra.mxu0 0
        %1185 = vmatpush.bf16.msra.mxu0 0
        %1186 = vmatpush.bf16.msra.mxu0 0
        %1187 = vmatpush.bf16.msra.mxu0 0
        %1188 = vmatpush.bf16.msra.mxu0 %v1179
        %1189 = vmatmul.bf16.gmra.mxu0 %v1127
        %v1190 = vpop.f32.mrf.mxu0
        %v1191 = vadd.f32 %v1151, %v1190
        %v1192 = vpop.f32.mrf.mxu0
        %v1193 = vadd.f32 %v1153, %v1192
        %1194 = vmatmul.bf16.gmra.mxu0 %v1130
        %v1195 = vpop.f32.mrf.mxu0
        %v1196 = vadd.f32 %v1156, %v1195
        %v1197 = vpop.f32.mrf.mxu0
        %v1198 = vadd.f32 %v1158, %v1197
        %1199 = vmatmul.bf16.gmra.mxu0 %v1133
        %v1200 = vpop.f32.mrf.mxu0
        %v1201 = vadd.f32 %v1161, %v1200
        %v1202 = vpop.f32.mrf.mxu0
        %v1203 = vadd.f32 %v1163, %v1202
        %1204 = vmatmul.bf16.gmra.mxu0 %v1136
        %v1205 = vpop.f32.mrf.mxu0
        %v1206 = vadd.f32 %v1166, %v1205
        %v1207 = vpop.f32.mrf.mxu0
        %v1208 = vadd.f32 %v1168, %v1207
        %1209 = vmatmul.bf16.gmra.mxu0 %v1139
        %v1210 = vpop.f32.mrf.mxu0
        %v1211 = vadd.f32 %v1171, %v1210
        %v1212 = vpop.f32.mrf.mxu0
        %v1213 = vadd.f32 %v1173, %v1212
        %1214 = vdwg.mxu0
        %v1215 = vpack.c.bf16 %v884, %v884
        %v1216 = vpack.c.bf16 %v1191, %v1191
        %v1217 = vpack.c.bf16 %v1193, %v1193
        %v1218 = vpack.c.bf16 %v1196, %v1196
        %v1219 = vpack.c.bf16 %v1198, %v1198
        %v1220 = vpack.c.bf16 %v1201, %v1201
        %v1221 = vpack.c.bf16 %v1203, %v1203
        %v1222 = vpack.c.bf16 %v1206, %v1206
        %v1223 = vpack.c.bf16 %v1208, %v1208
        %v1224 = vpack.c.bf16 %v1211, %v1211
        %v1225 = vpack.c.bf16 %v1213, %v1213
        %v1236 = vunpack.c.l.b16 %v1216
        %v1237 = vunpack.c.l.b16 %v1217
        %v1238 = vunpack.c.l.b16 %v1218
        %v1239 = vunpack.c.l.b16 %v1219
        %v1240 = vunpack.c.l.b16 %v1220
        %v1241 = vunpack.c.l.b16 %v1221
        %v1242 = vunpack.c.l.b16 %v1222
        %v1243 = vunpack.c.l.b16 %v1223
        %v1244 = vunpack.c.l.b16 %v1224
        %v1245 = vunpack.c.l.b16 %v1225
        %v1246 = vpack.c.b16 %v1237, %v1236
        %v1247 = vpack.c.b16 %v1239, %v1238
        %v1248 = vpack.c.b16 %v1241, %v1240
        %v1249 = vpack.c.b16 %v1243, %v1242
        %v1250 = vpack.c.b16 %v1245, %v1244
        %1256 = vmatpush.bf16.xpose.msra.mxu0 0
        %1257 = vmatpush.bf16.xpose.msra.mxu0 0
        %1258 = vmatpush.bf16.xpose.msra.mxu0 0
        %1259 = vmatpush.bf16.xpose.msra.mxu0 0
        %1260 = vmatpush.bf16.xpose.msra.mxu0 0
        %1261 = vmatpush.bf16.xpose.msra.mxu0 0
        %1262 = vmatpush.bf16.xpose.msra.mxu0 0
        %1263 = vmatpush.bf16.xpose.msra.mxu0 %v1215
        %1264 = vmatmul.bf16.gmra.mxu0 %v1246
        %v1265 = vpop.f32.mrf.mxu0
        %v1266 = vadd.f32 0.0, %v1265
        %v1267 = vpop.f32.mrf.mxu0
        %v1268 = vadd.f32 0.0, %v1267
        %1269 = vmatmul.bf16.gmra.mxu0 %v1247
        %v1270 = vpop.f32.mrf.mxu0
        %v1271 = vadd.f32 0.0, %v1270
        %v1272 = vpop.f32.mrf.mxu0
        %v1273 = vadd.f32 0.0, %v1272
        %1274 = vmatmul.bf16.gmra.mxu0 %v1248
        %v1275 = vpop.f32.mrf.mxu0
        %v1276 = vadd.f32 0.0, %v1275
        %v1277 = vpop.f32.mrf.mxu0
        %v1278 = vadd.f32 0.0, %v1277
        %1279 = vmatmul.bf16.gmra.mxu0 %v1249
        %v1280 = vpop.f32.mrf.mxu0
        %v1281 = vadd.f32 0.0, %v1280
        %v1282 = vpop.f32.mrf.mxu0
        %v1283 = vadd.f32 0.0, %v1282
        %1284 = vmatmul.bf16.gmra.mxu0 %v1250
        %v1285 = vpop.f32.mrf.mxu0
        %v1286 = vadd.f32 0.0, %v1285
        %v1287 = vpop.f32.mrf.mxu0
        %v1288 = vadd.f32 0.0, %v1287
        %1289 = vdwg.mxu0
        %vm1290 = vcmask 64512
        %v1291 = vsel %vm1290, %v1266, -inf
        %1292 = vmax.xlane.f32.xlu0 %v1291
        %v1293 = vpop.xlane.xlu0 %1292
        %v1294 = vsel %vm1290, %v1268, -inf
        %1295 = vmax.xlane.f32.xlu0 %v1294
        %v1296 = vpop.xlane.xlu0 %1295
        %v1297 = vsel %vm1290, %v1271, -inf
        %1298 = vmax.xlane.f32.xlu0 %v1297
        %v1299 = vpop.xlane.xlu0 %1298
        %v1300 = vsel %vm1290, %v1273, -inf
        %1301 = vmax.xlane.f32.xlu0 %v1300
        %v1302 = vpop.xlane.xlu0 %1301
        %v1303 = vsel %vm1290, %v1276, -inf
        %1304 = vmax.xlane.f32.xlu0 %v1303
        %v1305 = vpop.xlane.xlu0 %1304
        %v1306 = vsel %vm1290, %v1278, -inf
        %1307 = vmax.xlane.f32.xlu0 %v1306
        %v1308 = vpop.xlane.xlu0 %1307
        %v1309 = vsel %vm1290, %v1281, -inf
        %1310 = vmax.xlane.f32.xlu0 %v1309
        %v1311 = vpop.xlane.xlu0 %1310
        %v1312 = vsel %vm1290, %v1283, -inf
        %1313 = vmax.xlane.f32.xlu0 %v1312
        %v1314 = vpop.xlane.xlu0 %1313
        %v1315 = vsel %vm1290, %v1286, -inf
        %1316 = vmax.xlane.f32.xlu0 %v1315
        %v1317 = vpop.xlane.xlu0 %1316
        %v1318 = vsel %vm1290, %v1288, -inf
        %1319 = vmax.xlane.f32.xlu0 %v1318
        %v1320 = vpop.xlane.xlu0 %1319
        %v1321 = vsub.f32 %v1266, %v1293
        %v1322 = vsub.f32 %v1268, %v1296
        %v1323 = vsub.f32 %v1271, %v1299
        %v1324 = vsub.f32 %v1273, %v1302
        %v1325 = vsub.f32 %v1276, %v1305
        %v1326 = vsub.f32 %v1278, %v1308
        %v1327 = vsub.f32 %v1281, %v1311
        %v1328 = vsub.f32 %v1283, %v1314
        %v1329 = vsub.f32 %v1286, %v1317
        %v1330 = vsub.f32 %v1288, %v1320
        %v1331 = vmul.f32 %v1321, 1.442695
        %v1332 = vpow.pop %v1331
        %v1333 = vmul.f32 %v1322, 1.442695
        %v1334 = vpow.pop %v1333
        %v1335 = vmul.f32 %v1323, 1.442695
        %v1336 = vpow.pop %v1335
        %v1337 = vmul.f32 %v1324, 1.442695
        %v1338 = vpow.pop %v1337
        %v1339 = vmul.f32 %v1325, 1.442695
        %v1340 = vpow.pop %v1339
        %v1341 = vmul.f32 %v1326, 1.442695
        %v1342 = vpow.pop %v1341
        %v1343 = vmul.f32 %v1327, 1.442695
        %v1344 = vpow.pop %v1343
        %v1345 = vmul.f32 %v1328, 1.442695
        %v1346 = vpow.pop %v1345
        %v1347 = vmul.f32 %v1329, 1.442695
        %v1348 = vpow.pop %v1347
        %v1349 = vmul.f32 %v1330, 1.442695
        %v1350 = vpow.pop %v1349
        %v1351 = vsel %vm1290, %v1332, 0.0
        %1352 = vadd.xlane.f32.xlu0 %v1351
        %v1353 = vpop.xlane.xlu0 %1352
        %v1354 = vsel %vm1290, %v1334, 0.0
        %1355 = vadd.xlane.f32.xlu0 %v1354
        %v1356 = vpop.xlane.xlu0 %1355
        %v1357 = vsel %vm1290, %v1336, 0.0
        %1358 = vadd.xlane.f32.xlu0 %v1357
        %v1359 = vpop.xlane.xlu0 %1358
        %v1360 = vsel %vm1290, %v1338, 0.0
        %1361 = vadd.xlane.f32.xlu0 %v1360
        %v1362 = vpop.xlane.xlu0 %1361
        %v1363 = vsel %vm1290, %v1340, 0.0
        %1364 = vadd.xlane.f32.xlu0 %v1363
        %v1365 = vpop.xlane.xlu0 %1364
        %v1366 = vsel %vm1290, %v1342, 0.0
        %1367 = vadd.xlane.f32.xlu0 %v1366
        %v1368 = vpop.xlane.xlu0 %1367
        %v1369 = vsel %vm1290, %v1344, 0.0
        %1370 = vadd.xlane.f32.xlu0 %v1369
        %v1371 = vpop.xlane.xlu0 %1370
        %v1372 = vsel %vm1290, %v1346, 0.0
        %1373 = vadd.xlane.f32.xlu0 %v1372
        %v1374 = vpop.xlane.xlu0 %1373
        %v1375 = vsel %vm1290, %v1348, 0.0
        %1376 = vadd.xlane.f32.xlu0 %v1375
        %v1377 = vpop.xlane.xlu0 %1376
        %v1378 = vsel %vm1290, %v1350, 0.0
        %1379 = vadd.xlane.f32.xlu0 %v1378
        %v1380 = vpop.xlane.xlu0 %1379
        %v1382 = vperm.slane %v520, 0
        %v1384 = vmul.f32 %v1332, %v1382
        %v1385 = vmul.f32 %v1334, %v1382
        %v1386 = vmul.f32 %v1336, %v1382
        %v1387 = vmul.f32 %v1338, %v1382
        %v1388 = vmul.f32 %v1340, %v1382
        %v1389 = vmul.f32 %v1342, %v1382
        %v1390 = vmul.f32 %v1344, %v1382
        %v1391 = vmul.f32 %v1346, %v1382
        %v1392 = vmul.f32 %v1348, %v1382
        %v1393 = vmul.f32 %v1350, %v1382
        %v1394 = vsel %vm1290, %v1384, 0.0
        %1395 = vadd.xlane.f32.xlu0 %v1394
        %v1396 = vpop.xlane.xlu0 %1395
        %v1397 = vsel %vm1290, %v1385, 0.0
        %1398 = vadd.xlane.f32.xlu0 %v1397
        %v1399 = vpop.xlane.xlu0 %1398
        %v1400 = vsel %vm1290, %v1386, 0.0
        %1401 = vadd.xlane.f32.xlu0 %v1400
        %v1402 = vpop.xlane.xlu0 %1401
        %v1403 = vsel %vm1290, %v1387, 0.0
        %1404 = vadd.xlane.f32.xlu0 %v1403
        %v1405 = vpop.xlane.xlu0 %1404
        %v1406 = vsel %vm1290, %v1388, 0.0
        %1407 = vadd.xlane.f32.xlu0 %v1406
        %v1408 = vpop.xlane.xlu0 %1407
        %v1409 = vsel %vm1290, %v1389, 0.0
        %1410 = vadd.xlane.f32.xlu0 %v1409
        %v1411 = vpop.xlane.xlu0 %1410
        %v1412 = vsel %vm1290, %v1390, 0.0
        %1413 = vadd.xlane.f32.xlu0 %v1412
        %v1414 = vpop.xlane.xlu0 %1413
        %v1415 = vsel %vm1290, %v1391, 0.0
        %1416 = vadd.xlane.f32.xlu0 %v1415
        %v1417 = vpop.xlane.xlu0 %1416
        %v1418 = vsel %vm1290, %v1392, 0.0
        %1419 = vadd.xlane.f32.xlu0 %v1418
        %v1420 = vpop.xlane.xlu0 %1419
        %v1421 = vsel %vm1290, %v1393, 0.0
        %1422 = vadd.xlane.f32.xlu0 %v1421
        %v1423 = vpop.xlane.xlu0 %1422
        %v1424 = vmul.f32 %v1353, 1e-07
        %v1425 = vmul.f32 %v1356, 1e-07
        %v1426 = vmul.f32 %v1359, 1e-07
        %v1427 = vmul.f32 %v1362, 1e-07
        %v1428 = vmul.f32 %v1365, 1e-07
        %v1429 = vmul.f32 %v1368, 1e-07
        %v1430 = vmul.f32 %v1371, 1e-07
        %v1431 = vmul.f32 %v1374, 1e-07
        %v1432 = vmul.f32 %v1377, 1e-07
        %v1433 = vmul.f32 %v1380, 1e-07
        %v1434 = vadd.f32 %v1396, %v1424
        %v1435 = vadd.f32 %v1399, %v1425
        %v1436 = vadd.f32 %v1402, %v1426
        %v1437 = vadd.f32 %v1405, %v1427
        %v1438 = vadd.f32 %v1408, %v1428
        %v1439 = vadd.f32 %v1411, %v1429
        %v1440 = vadd.f32 %v1414, %v1430
        %v1441 = vadd.f32 %v1417, %v1431
        %v1442 = vadd.f32 %v1420, %v1432
        %v1443 = vadd.f32 %v1423, %v1433
        %v1444 = vrcp.pop %v1434
        %v1445 = vmul.f32 %v1434, %v1444
        %v1446 = vsub.f32 1.0, %v1445
        %v1447 = vmul.f32 %v1444, %v1446
        %v1448 = vadd.f32 %v1444, %v1447
        %vm1449 = vweird.f32 %v1434
        %vm1450 = vweird.f32 %v1444
        %vm1451 = vmor %vm1449, %vm1450
        %v1452 = vsel %vm1451, %v1444, %v1448
        %v1453 = vand.u32 2147483647, %v1434
        %vm1454 = vcmp.eq.f32.partialorder %v1453, 8.507059e+37
        %v1455 = vand.u32 %v1434, 2147483648
        %v1456 = vor.u32 1.1754944e-38, %v1455
        %v1457 = vsel %vm1454, %v1456, %v1452
        %v1458 = vrcp.pop %v1435
        %v1459 = vmul.f32 %v1435, %v1458
        %v1460 = vsub.f32 1.0, %v1459
        %v1461 = vmul.f32 %v1458, %v1460
        %v1462 = vadd.f32 %v1458, %v1461
        %vm1463 = vweird.f32 %v1435
        %vm1464 = vweird.f32 %v1458
        %vm1465 = vmor %vm1463, %vm1464
        %v1466 = vsel %vm1465, %v1458, %v1462
        %v1467 = vand.u32 2147483647, %v1435
        %vm1468 = vcmp.eq.f32.partialorder %v1467, 8.507059e+37
        %v1469 = vand.u32 %v1435, 2147483648
        %v1470 = vor.u32 1.1754944e-38, %v1469
        %v1471 = vsel %vm1468, %v1470, %v1466
        %v1472 = vrcp.pop %v1436
        %v1473 = vmul.f32 %v1436, %v1472
        %v1474 = vsub.f32 1.0, %v1473
        %v1475 = vmul.f32 %v1472, %v1474
        %v1476 = vadd.f32 %v1472, %v1475
        %vm1477 = vweird.f32 %v1436
        %vm1478 = vweird.f32 %v1472
        %vm1479 = vmor %vm1477, %vm1478
        %v1480 = vsel %vm1479, %v1472, %v1476
        %v1481 = vand.u32 2147483647, %v1436
        %vm1482 = vcmp.eq.f32.partialorder %v1481, 8.507059e+37
        %v1483 = vand.u32 %v1436, 2147483648
        %v1484 = vor.u32 1.1754944e-38, %v1483
        %v1485 = vsel %vm1482, %v1484, %v1480
        %v1486 = vrcp.pop %v1437
        %v1487 = vmul.f32 %v1437, %v1486
        %v1488 = vsub.f32 1.0, %v1487
        %v1489 = vmul.f32 %v1486, %v1488
        %v1490 = vadd.f32 %v1486, %v1489
        %vm1491 = vweird.f32 %v1437
        %vm1492 = vweird.f32 %v1486
        %vm1493 = vmor %vm1491, %vm1492
        %v1494 = vsel %vm1493, %v1486, %v1490
        %v1495 = vand.u32 2147483647, %v1437
        %vm1496 = vcmp.eq.f32.partialorder %v1495, 8.507059e+37
        %v1497 = vand.u32 %v1437, 2147483648
        %v1498 = vor.u32 1.1754944e-38, %v1497
        %v1499 = vsel %vm1496, %v1498, %v1494
        %v1500 = vrcp.pop %v1438
        %v1501 = vmul.f32 %v1438, %v1500
        %v1502 = vsub.f32 1.0, %v1501
        %v1503 = vmul.f32 %v1500, %v1502
        %v1504 = vadd.f32 %v1500, %v1503
        %vm1505 = vweird.f32 %v1438
        %vm1506 = vweird.f32 %v1500
        %vm1507 = vmor %vm1505, %vm1506
        %v1508 = vsel %vm1507, %v1500, %v1504
        %v1509 = vand.u32 2147483647, %v1438
        %vm1510 = vcmp.eq.f32.partialorder %v1509, 8.507059e+37
        %v1511 = vand.u32 %v1438, 2147483648
        %v1512 = vor.u32 1.1754944e-38, %v1511
        %v1513 = vsel %vm1510, %v1512, %v1508
        %v1514 = vrcp.pop %v1439
        %v1515 = vmul.f32 %v1439, %v1514
        %v1516 = vsub.f32 1.0, %v1515
        %v1517 = vmul.f32 %v1514, %v1516
        %v1518 = vadd.f32 %v1514, %v1517
        %vm1519 = vweird.f32 %v1439
        %vm1520 = vweird.f32 %v1514
        %vm1521 = vmor %vm1519, %vm1520
        %v1522 = vsel %vm1521, %v1514, %v1518
        %v1523 = vand.u32 2147483647, %v1439
        %vm1524 = vcmp.eq.f32.partialorder %v1523, 8.507059e+37
        %v1525 = vand.u32 %v1439, 2147483648
        %v1526 = vor.u32 1.1754944e-38, %v1525
        %v1527 = vsel %vm1524, %v1526, %v1522
        %v1528 = vrcp.pop %v1440
        %v1529 = vmul.f32 %v1440, %v1528
        %v1530 = vsub.f32 1.0, %v1529
        %v1531 = vmul.f32 %v1528, %v1530
        %v1532 = vadd.f32 %v1528, %v1531
        %vm1533 = vweird.f32 %v1440
        %vm1534 = vweird.f32 %v1528
        %vm1535 = vmor %vm1533, %vm1534
        %v1536 = vsel %vm1535, %v1528, %v1532
        %v1537 = vand.u32 2147483647, %v1440
        %vm1538 = vcmp.eq.f32.partialorder %v1537, 8.507059e+37
        %v1539 = vand.u32 %v1440, 2147483648
        %v1540 = vor.u32 1.1754944e-38, %v1539
        %v1541 = vsel %vm1538, %v1540, %v1536
        %v1542 = vrcp.pop %v1441
        %v1543 = vmul.f32 %v1441, %v1542
        %v1544 = vsub.f32 1.0, %v1543
        %v1545 = vmul.f32 %v1542, %v1544
        %v1546 = vadd.f32 %v1542, %v1545
        %vm1547 = vweird.f32 %v1441
        %vm1548 = vweird.f32 %v1542
        %vm1549 = vmor %vm1547, %vm1548
        %v1550 = vsel %vm1549, %v1542, %v1546
        %v1551 = vand.u32 2147483647, %v1441
        %vm1552 = vcmp.eq.f32.partialorder %v1551, 8.507059e+37
        %v1553 = vand.u32 %v1441, 2147483648
        %v1554 = vor.u32 1.1754944e-38, %v1553
        %v1555 = vsel %vm1552, %v1554, %v1550
        %v1556 = vrcp.pop %v1442
        %v1557 = vmul.f32 %v1442, %v1556
        %v1558 = vsub.f32 1.0, %v1557
        %v1559 = vmul.f32 %v1556, %v1558
        %v1560 = vadd.f32 %v1556, %v1559
        %vm1561 = vweird.f32 %v1442
        %vm1562 = vweird.f32 %v1556
        %vm1563 = vmor %vm1561, %vm1562
        %v1564 = vsel %vm1563, %v1556, %v1560
        %v1565 = vand.u32 2147483647, %v1442
        %vm1566 = vcmp.eq.f32.partialorder %v1565, 8.507059e+37
        %v1567 = vand.u32 %v1442, 2147483648
        %v1568 = vor.u32 1.1754944e-38, %v1567
        %v1569 = vsel %vm1566, %v1568, %v1564
        %v1570 = vrcp.pop %v1443
        %v1571 = vmul.f32 %v1443, %v1570
        %v1572 = vsub.f32 1.0, %v1571
        %v1573 = vmul.f32 %v1570, %v1572
        %v1574 = vadd.f32 %v1570, %v1573
        %vm1575 = vweird.f32 %v1443
        %vm1576 = vweird.f32 %v1570
        %vm1577 = vmor %vm1575, %vm1576
        %v1578 = vsel %vm1577, %v1570, %v1574
        %v1579 = vand.u32 2147483647, %v1443
        %vm1580 = vcmp.eq.f32.partialorder %v1579, 8.507059e+37
        %v1581 = vand.u32 %v1443, 2147483648
        %v1582 = vor.u32 1.1754944e-38, %v1581
        %v1583 = vsel %vm1580, %v1582, %v1578
        %v1584 = vmul.f32 %v1384, %v1457
        %v1585 = vmul.f32 %v1385, %v1471
        %v1586 = vmul.f32 %v1386, %v1485
        %v1587 = vmul.f32 %v1387, %v1499
        %v1588 = vmul.f32 %v1388, %v1513
        %v1589 = vmul.f32 %v1389, %v1527
        %v1590 = vmul.f32 %v1390, %v1541
        %v1591 = vmul.f32 %v1391, %v1555
        %v1592 = vmul.f32 %v1392, %v1569
        %v1593 = vmul.f32 %v1393, %v1583
        %v1594 = vpack.c.bf16 %v1584, %v1584
        %v1595 = vpack.c.bf16 %v1585, %v1585
        %v1596 = vpack.c.bf16 %v1586, %v1586
        %v1597 = vpack.c.bf16 %v1587, %v1587
        %v1598 = vpack.c.bf16 %v1588, %v1588
        %v1599 = vpack.c.bf16 %v1589, %v1589
        %v1600 = vpack.c.bf16 %v1590, %v1590
        %v1601 = vpack.c.bf16 %v1591, %v1591
        %v1602 = vpack.c.bf16 %v1592, %v1592
        %v1603 = vpack.c.bf16 %v1593, %v1593
        %v1614 = vunpack.c.l.b16 %v1594
        %v1615 = vunpack.c.l.b16 %v1595
        %v1616 = vunpack.c.l.b16 %v1596
        %v1617 = vunpack.c.l.b16 %v1597
        %v1618 = vunpack.c.l.b16 %v1598
        %v1619 = vunpack.c.l.b16 %v1599
        %v1620 = vunpack.c.l.b16 %v1600
        %v1621 = vunpack.c.l.b16 %v1601
        %v1622 = vunpack.c.l.b16 %v1602
        %v1623 = vunpack.c.l.b16 %v1603
        %v1624 = vpack.c.b16 %v1615, %v1614
        %v1625 = vpack.c.b16 %v1617, %v1616
        %v1626 = vpack.c.b16 %v1619, %v1618
        %v1627 = vpack.c.b16 %v1621, %v1620
        %v1628 = vpack.c.b16 %v1623, %v1622
        %v1630 = vsel %vm1290, %v1624, 0
        %v1633 = vsel %vm1290, %v1625, 0
        %v1636 = vsel %vm1290, %v1626, 0
        %v1639 = vsel %vm1290, %v1627, 0
        %v1642 = vsel %vm1290, %v1628, 0
        %vm1644 = vcmask 1043456
        %v1646 = vsel %vm1644, %v1215, 0
        %1648 = vmatpush.bf16.msra.mxu0 0
        %1649 = vmatpush.bf16.msra.mxu0 0
        %1650 = vmatpush.bf16.msra.mxu0 0
        %1651 = vmatpush.bf16.msra.mxu0 0
        %1652 = vmatpush.bf16.msra.mxu0 0
        %1653 = vmatpush.bf16.msra.mxu0 0
        %1654 = vmatpush.bf16.msra.mxu0 0
        %1655 = vmatpush.bf16.msra.mxu0 %v1646
        %1656 = vmatmul.bf16.gmra.mxu0 %v1630
        %v1657 = vpop.f32.mrf.mxu0
        %v1658 = vadd.f32 0.0, %v1657
        %v1659 = vpop.f32.mrf.mxu0
        %v1660 = vadd.f32 0.0, %v1659
        %1661 = vmatmul.bf16.gmra.mxu0 %v1633
        %v1662 = vpop.f32.mrf.mxu0
        %v1663 = vadd.f32 0.0, %v1662
        %v1664 = vpop.f32.mrf.mxu0
        %v1665 = vadd.f32 0.0, %v1664
        %1666 = vmatmul.bf16.gmra.mxu0 %v1636
        %v1667 = vpop.f32.mrf.mxu0
        %v1668 = vadd.f32 0.0, %v1667
        %v1669 = vpop.f32.mrf.mxu0
        %v1670 = vadd.f32 0.0, %v1669
        %1671 = vmatmul.bf16.gmra.mxu0 %v1639
        %v1672 = vpop.f32.mrf.mxu0
        %v1673 = vadd.f32 0.0, %v1672
        %v1674 = vpop.f32.mrf.mxu0
        %v1675 = vadd.f32 0.0, %v1674
        %1676 = vmatmul.bf16.gmra.mxu0 %v1642
        %v1677 = vpop.f32.mrf.mxu0
        %v1678 = vadd.f32 0.0, %v1677
        %v1679 = vpop.f32.mrf.mxu0
        %v1680 = vadd.f32 0.0, %v1679
        %1681 = vdwg.mxu0
        %v1682 = vmul.f32 %v1191, %v1658
        %v1683 = vmul.f32 %v1193, %v1660
        %v1684 = vmul.f32 %v1196, %v1663
        %v1685 = vmul.f32 %v1198, %v1665
        %v1686 = vmul.f32 %v1201, %v1668
        %v1687 = vmul.f32 %v1203, %v1670
        %v1688 = vmul.f32 %v1206, %v1673
        %v1689 = vmul.f32 %v1208, %v1675
        %v1690 = vmul.f32 %v1211, %v1678
        %v1691 = vmul.f32 %v1213, %v1680
        %v1692 = vmul.f32 %v1682, %v1063
        %v1693 = vmul.f32 %v1683, %v1065
        %v1694 = vmul.f32 %v1684, %v1068
        %v1695 = vmul.f32 %v1685, %v1070
        %v1696 = vmul.f32 %v1686, %v1073
        %v1697 = vmul.f32 %v1687, %v1075
        %v1698 = vmul.f32 %v1688, %v1078
        %v1699 = vmul.f32 %v1689, %v1080
        %v1700 = vmul.f32 %v1690, %v1083
        %v1701 = vmul.f32 %v1691, %v1085
        %v1702 = vadd.f32 %v639, %v1692
        %v1703 = vadd.f32 %v641, %v1693
        %v1704 = vadd.f32 %v1702, %v1694
        %v1705 = vadd.f32 %v1703, %v1695
        %v1706 = vadd.f32 %v1704, %v1696
        %v1707 = vadd.f32 %v1705, %v1697
        %v1708 = vadd.f32 %v1706, %v1698
        %v1709 = vadd.f32 %v1707, %v1699
        %v1710 = vadd.f32 %v1708, %v1700
        %v1711 = vadd.f32 %v1709, %v1701
        %v1712 = vmax.f32 %v1710, 0.0
        %v1713 = vmax.f32 %v1711, 0.0
        %v1714 = vld [vmem:[%s5 + $0x98] sm:$0xf]
        %v1715 = vld [vmem:[%s5 + $0x9c] sm:$0xf]
        %v1716 = vld [vmem:[%s5 + $0xa0] sm:$0xf]
        %v1717 = vld [vmem:[%s5 + $0xa4] sm:$0xf]
        %v1718 = vld [vmem:[%s5 + $0xa8] sm:$0xf]
        %v1719 = vld [vmem:[%s5 + $0xac] sm:$0xf]
        %v1720 = vld [vmem:[%s5 + $0xb0] sm:$0xf]
        %v1721 = vld [vmem:[%s5 + $0xb4] sm:$0xf]
        %v1722 = vld [vmem:[%s5 + $0xb8] sm:$0xf]
        %v1723 = vld [vmem:[%s5 + $0xbc] sm:$0xf]
        %v1724 = vld [vmem:[%s5 + $0xc0] sm:$0xf]
        %v1725 = vld [vmem:[%s5 + $0xc4] sm:$0xf]
        %v1726 = vld [vmem:[%s5 + $0xc8] sm:$0xf]
        %v1727 = vld [vmem:[%s5 + $0xcc] sm:$0xf]
        %v1728 = vld [vmem:[%s5 + $0xd0] sm:$0xf]
        %v1729 = vld [vmem:[%s5 + $0xd4] sm:$0xf]
        %v1730 = vld [vmem:[%s6 + $0xc0] sm:$0xf]
        %v1731 = vld [vmem:[%s6 + $0xc4] sm:$0xf]
        %v1732 = vld [vmem:[%s6 + $0xc8] sm:$0xf]
        %v1733 = vld [vmem:[%s6 + $0xcc] sm:$0xf]
        %v1734 = vld [vmem:[%s6 + $0xd0] sm:$0xf]
        %v1735 = vld [vmem:[%s6 + $0xd4] sm:$0xf]
        %v1736 = vld [vmem:[%s6 + $0xd8] sm:$0xf]
        %v1737 = vld [vmem:[%s6 + $0xdc] sm:$0xf]
        %v1738 = vld [vmem:[%s6 + $0xe0] sm:$0xf]
        %v1739 = vld [vmem:[%s6 + $0xe4] sm:$0xf]
        %v1740 = vld [vmem:[%s6 + $0xe8] sm:$0xf]
        %v1741 = vld [vmem:[%s6 + $0xec] sm:$0xf]
        %v1742 = vld [vmem:[%s6 + $0xf0] sm:$0xf]
        %v1743 = vld [vmem:[%s6 + $0xf4] sm:$0xf]
        %v1744 = vld [vmem:[%s6 + $0xf8] sm:$0xf]
        %v1745 = vld [vmem:[%s6 + $0xfc] sm:$0xf]
        %v1746 = vpack.c.bf16 %v1713, %v1712
        %v1747 = vld [vmem:[%s7 + $0x3] sm:$0x1]
        %v1748 = vperm.slane %v1747, 0
        %v1765 = vunpack.c.l.b16 %v1714
        %v1766 = vunpack.c.l.b16 %v1715
        %v1767 = vunpack.c.l.b16 %v1716
        %v1768 = vunpack.c.l.b16 %v1717
        %v1769 = vunpack.c.l.b16 %v1718
        %v1770 = vunpack.c.l.b16 %v1719
        %v1771 = vunpack.c.l.b16 %v1720
        %v1772 = vunpack.c.l.b16 %v1721
        %v1773 = vunpack.c.l.b16 %v1722
        %v1774 = vunpack.c.l.b16 %v1723
        %v1775 = vunpack.c.l.b16 %v1724
        %v1776 = vunpack.c.l.b16 %v1725
        %v1777 = vunpack.c.l.b16 %v1726
        %v1778 = vunpack.c.l.b16 %v1727
        %v1779 = vunpack.c.l.b16 %v1728
        %v1780 = vunpack.c.l.b16 %v1729
        %v1781 = vpack.c.b16 %v1766, %v1765
        %v1782 = vpack.c.b16 %v1768, %v1767
        %v1783 = vpack.c.b16 %v1770, %v1769
        %v1784 = vpack.c.b16 %v1772, %v1771
        %v1785 = vpack.c.b16 %v1774, %v1773
        %v1786 = vpack.c.b16 %v1776, %v1775
        %v1787 = vpack.c.b16 %v1778, %v1777
        %v1788 = vpack.c.b16 %v1780, %v1779
        %1797 = vmatpush.bf16.msra.mxu0 %v1788
        %1798 = vmatpush.bf16.msra.mxu0 %v1787
        %1799 = vmatpush.bf16.msra.mxu0 %v1786
        %1800 = vmatpush.bf16.msra.mxu0 %v1785
        %1801 = vmatpush.bf16.msra.mxu0 %v1784
        %1802 = vmatpush.bf16.msra.mxu0 %v1783
        %1803 = vmatpush.bf16.msra.mxu0 %v1782
        %1804 = vmatpush.bf16.msra.mxu0 %v1781
        %1805 = vmatmul.bf16.gmra.mxu0 %v1746
        %v1806 = vpop.f32.mrf.mxu0
        %v1807 = vadd.f32 %v1748, %v1806
        %v1808 = vpop.f32.mrf.mxu0
        %v1809 = vadd.f32 %v1748, %v1808
        %1810 = vdwg.mxu0
        %v1811 = vmax.f32 %v1807, 0.0
        %v1812 = vmax.f32 %v1809, 0.0
        %v1813 = vpack.c.bf16 %v1812, %v1811
        %v1814 = vld [vmem:[%s8 + $0x3] sm:$0x1]
        %v1815 = vperm.slane %v1814, 0
        %v1832 = vunpack.c.l.b16 %v1730
        %v1833 = vunpack.c.l.b16 %v1731
        %v1834 = vunpack.c.l.b16 %v1732
        %v1835 = vunpack.c.l.b16 %v1733
        %v1836 = vunpack.c.l.b16 %v1734
        %v1837 = vunpack.c.l.b16 %v1735
        %v1838 = vunpack.c.l.b16 %v1736
        %v1839 = vunpack.c.l.b16 %v1737
        %v1840 = vunpack.c.l.b16 %v1738
        %v1841 = vunpack.c.l.b16 %v1739
        %v1842 = vunpack.c.l.b16 %v1740
        %v1843 = vunpack.c.l.b16 %v1741
        %v1844 = vunpack.c.l.b16 %v1742
        %v1845 = vunpack.c.l.b16 %v1743
        %v1846 = vunpack.c.l.b16 %v1744
        %v1847 = vunpack.c.l.b16 %v1745
        %v1848 = vpack.c.b16 %v1833, %v1832
        %v1849 = vpack.c.b16 %v1835, %v1834
        %v1850 = vpack.c.b16 %v1837, %v1836
        %v1851 = vpack.c.b16 %v1839, %v1838
        %v1852 = vpack.c.b16 %v1841, %v1840
        %v1853 = vpack.c.b16 %v1843, %v1842
        %v1854 = vpack.c.b16 %v1845, %v1844
        %v1855 = vpack.c.b16 %v1847, %v1846
        %1864 = vmatpush.bf16.msra.mxu0 %v1855
        %1865 = vmatpush.bf16.msra.mxu0 %v1854
        %1866 = vmatpush.bf16.msra.mxu0 %v1853
        %1867 = vmatpush.bf16.msra.mxu0 %v1852
        %1868 = vmatpush.bf16.msra.mxu0 %v1851
        %1869 = vmatpush.bf16.msra.mxu0 %v1850
        %1870 = vmatpush.bf16.msra.mxu0 %v1849
        %1871 = vmatpush.bf16.msra.mxu0 %v1848
        %1872 = vmatmul.bf16.gmra.mxu0 %v1813
        %v1873 = vpop.f32.mrf.mxu0
        %v1874 = vadd.f32 %v1815, %v1873
        %v1875 = vpop.f32.mrf.mxu0
        %v1876 = vadd.f32 %v1815, %v1875
        %1877 = vdwg.mxu0
        %v1878 = vld [vmem:[%s5 + $0xd8] sm:$0xf]
        %v1879 = vld [vmem:[%s5 + $0xdc] sm:$0xf]
        %v1880 = vld [vmem:[%s5 + $0xe0] sm:$0xf]
        %v1881 = vld [vmem:[%s5 + $0xe4] sm:$0xf]
        %v1882 = vld [vmem:[%s5 + $0xe8] sm:$0xf]
        %v1883 = vld [vmem:[%s5 + $0xec] sm:$0xf]
        %v1884 = vld [vmem:[%s5 + $0xf0] sm:$0xf]
        %v1885 = vld [vmem:[%s5 + $0xf4] sm:$0xf]
        %v1886 = vld [vmem:[%s5 + $0xf8] sm:$0xf]
        %v1887 = vld [vmem:[%s5 + $0xfc] sm:$0xf]
        %v1888 = vld [vmem:[%s5 + $0x100] sm:$0xf]
        %v1889 = vld [vmem:[%s5 + $0x104] sm:$0xf]
        %v1890 = vld [vmem:[%s5 + $0x108] sm:$0xf]
        %v1891 = vld [vmem:[%s5 + $0x10c] sm:$0xf]
        %v1892 = vld [vmem:[%s5 + $0x110] sm:$0xf]
        %v1893 = vld [vmem:[%s5 + $0x114] sm:$0xf]
        %v1894 = vld [vmem:[%s5 + $0x118] sm:$0xf]
        %v1895 = vld [vmem:[%s5 + $0x11c] sm:$0xf]
        %v1896 = vld [vmem:[%s5 + $0x120] sm:$0xf]
        %v1897 = vld [vmem:[%s5 + $0x124] sm:$0xf]
        %v1898 = vld [vmem:[%s5 + $0x128] sm:$0xf]
        %v1899 = vld [vmem:[%s5 + $0x12c] sm:$0xf]
        %v1900 = vld [vmem:[%s5 + $0x130] sm:$0xf]
        %v1901 = vld [vmem:[%s5 + $0x134] sm:$0xf]
        %v1902 = vld [vmem:[%s5 + $0x138] sm:$0xf]
        %v1903 = vld [vmem:[%s5 + $0x13c] sm:$0xf]
        %v1904 = vld [vmem:[%s5 + $0x140] sm:$0xf]
        %v1905 = vld [vmem:[%s5 + $0x144] sm:$0xf]
        %v1906 = vld [vmem:[%s5 + $0x148] sm:$0xf]
        %v1907 = vld [vmem:[%s5 + $0x14c] sm:$0xf]
        %v1908 = vld [vmem:[%s5 + $0x150] sm:$0xf]
        %v1909 = vld [vmem:[%s5 + $0x154] sm:$0xf]
        %v1910 = vld [vmem:[%s6 + $0x100] sm:$0xf]
        %v1911 = vld [vmem:[%s6 + $0x104] sm:$0xf]
        %v1912 = vld [vmem:[%s6 + $0x108] sm:$0xf]
        %v1913 = vld [vmem:[%s6 + $0x10c] sm:$0xf]
        %v1914 = vld [vmem:[%s6 + $0x110] sm:$0xf]
        %v1915 = vld [vmem:[%s6 + $0x114] sm:$0xf]
        %v1916 = vld [vmem:[%s6 + $0x118] sm:$0xf]
        %v1917 = vld [vmem:[%s6 + $0x11c] sm:$0xf]
        %v1918 = vld [vmem:[%s6 + $0x120] sm:$0xf]
        %v1919 = vld [vmem:[%s6 + $0x124] sm:$0xf]
        %v1920 = vld [vmem:[%s6 + $0x128] sm:$0xf]
        %v1921 = vld [vmem:[%s6 + $0x12c] sm:$0xf]
        %v1922 = vld [vmem:[%s6 + $0x130] sm:$0xf]
        %v1923 = vld [vmem:[%s6 + $0x134] sm:$0xf]
        %v1924 = vld [vmem:[%s6 + $0x138] sm:$0xf]
        %v1925 = vld [vmem:[%s6 + $0x13c] sm:$0xf]
        %v1926 = vld [vmem:[%s7 + $0x4] sm:$0x1]
        %v1927 = vperm.slane %v1926, 0
        %v1960 = vunpack.c.l.b16 %v1878
        %v1961 = vunpack.c.l.b16 %v1879
        %v1962 = vunpack.c.l.b16 %v1880
        %v1963 = vunpack.c.l.b16 %v1881
        %v1964 = vunpack.c.l.b16 %v1882
        %v1965 = vunpack.c.l.b16 %v1883
        %v1966 = vunpack.c.l.b16 %v1884
        %v1967 = vunpack.c.l.b16 %v1885
        %v1968 = vunpack.c.l.b16 %v1886
        %v1969 = vunpack.c.l.b16 %v1887
        %v1970 = vunpack.c.l.b16 %v1888
        %v1971 = vunpack.c.l.b16 %v1889
        %v1972 = vunpack.c.l.b16 %v1890
        %v1973 = vunpack.c.l.b16 %v1891
        %v1974 = vunpack.c.l.b16 %v1892
        %v1975 = vunpack.c.l.b16 %v1893
        %v1976 = vunpack.c.l.b16 %v1894
        %v1977 = vunpack.c.l.b16 %v1895
        %v1978 = vunpack.c.l.b16 %v1896
        %v1979 = vunpack.c.l.b16 %v1897
        %v1980 = vunpack.c.l.b16 %v1898
        %v1981 = vunpack.c.l.b16 %v1899
        %v1982 = vunpack.c.l.b16 %v1900
        %v1983 = vunpack.c.l.b16 %v1901
        %v1984 = vunpack.c.l.b16 %v1902
        %v1985 = vunpack.c.l.b16 %v1903
        %v1986 = vunpack.c.l.b16 %v1904
        %v1987 = vunpack.c.l.b16 %v1905
        %v1988 = vunpack.c.l.b16 %v1906
        %v1989 = vunpack.c.l.b16 %v1907
        %v1990 = vunpack.c.l.b16 %v1908
        %v1991 = vunpack.c.l.b16 %v1909
        %v1992 = vpack.c.b16 %v1961, %v1960
        %v1993 = vpack.c.b16 %v1963, %v1962
        %v1994 = vpack.c.b16 %v1965, %v1964
        %v1995 = vpack.c.b16 %v1967, %v1966
        %v1996 = vpack.c.b16 %v1969, %v1968
        %v1997 = vpack.c.b16 %v1971, %v1970
        %v1998 = vpack.c.b16 %v1973, %v1972
        %v1999 = vpack.c.b16 %v1975, %v1974
        %v2000 = vpack.c.b16 %v1977, %v1976
        %v2001 = vpack.c.b16 %v1979, %v1978
        %v2002 = vpack.c.b16 %v1981, %v1980
        %v2003 = vpack.c.b16 %v1983, %v1982
        %v2004 = vpack.c.b16 %v1985, %v1984
        %v2005 = vpack.c.b16 %v1987, %v1986
        %v2006 = vpack.c.b16 %v1989, %v1988
        %v2007 = vpack.c.b16 %v1991, %v1990
        %2024 = vmatpush.bf16.msra.mxu0 %v1999
        %2025 = vmatpush.bf16.msra.mxu0 %v1998
        %2026 = vmatpush.bf16.msra.mxu0 %v1997
        %2027 = vmatpush.bf16.msra.mxu0 %v1996
        %2028 = vmatpush.bf16.msra.mxu0 %v1995
        %2029 = vmatpush.bf16.msra.mxu0 %v1994
        %2030 = vmatpush.bf16.msra.mxu0 %v1993
        %2031 = vmatpush.bf16.msra.mxu0 %v1992
        %2032 = vmatmul.bf16.gmra.mxu0 %v696
        %v2033 = vpop.f32.mrf.mxu0
        %v2034 = vadd.f32 %v1927, %v2033
        %v2035 = vpop.f32.mrf.mxu0
        %2036 = vdwg.mxu0
        %2037 = vmatpush.bf16.msra.mxu0 %v2007
        %2038 = vmatpush.bf16.msra.mxu0 %v2006
        %2039 = vmatpush.bf16.msra.mxu0 %v2005
        %2040 = vmatpush.bf16.msra.mxu0 %v2004
        %2041 = vmatpush.bf16.msra.mxu0 %v2003
        %2042 = vmatpush.bf16.msra.mxu0 %v2002
        %2043 = vmatpush.bf16.msra.mxu0 %v2001
        %2044 = vmatpush.bf16.msra.mxu0 %v2000
        %2045 = vmatmul.bf16.gmra.mxu0 %v697
        %v2046 = vpop.f32.mrf.mxu0
        %v2047 = vadd.f32 %v2034, %v2046
        %v2048 = vpop.f32.mrf.mxu0
        %2049 = vdwg.mxu0
        %v2050 = vmax.f32 %v2047, 0.0
        %v2051 = vpack.c.bf16 %v2050, %v2050
        %v2052 = vld [vmem:[%s8 + $0x4] sm:$0x1]
        %v2053 = vperm.slane %v2052, 0
        %v2070 = vunpack.c.l.b16 %v1910
        %v2071 = vunpack.c.l.b16 %v1911
        %v2072 = vunpack.c.l.b16 %v1912
        %v2073 = vunpack.c.l.b16 %v1913
        %v2074 = vunpack.c.l.b16 %v1914
        %v2075 = vunpack.c.l.b16 %v1915
        %v2076 = vunpack.c.l.b16 %v1916
        %v2077 = vunpack.c.l.b16 %v1917
        %v2078 = vunpack.c.l.b16 %v1918
        %v2079 = vunpack.c.l.b16 %v1919
        %v2080 = vunpack.c.l.b16 %v1920
        %v2081 = vunpack.c.l.b16 %v1921
        %v2082 = vunpack.c.l.b16 %v1922
        %v2083 = vunpack.c.l.b16 %v1923
        %v2084 = vunpack.c.l.b16 %v1924
        %v2085 = vunpack.c.l.b16 %v1925
        %v2086 = vpack.c.b16 %v2071, %v2070
        %v2087 = vpack.c.b16 %v2073, %v2072
        %v2088 = vpack.c.b16 %v2075, %v2074
        %v2089 = vpack.c.b16 %v2077, %v2076
        %v2090 = vpack.c.b16 %v2079, %v2078
        %v2091 = vpack.c.b16 %v2081, %v2080
        %v2092 = vpack.c.b16 %v2083, %v2082
        %v2093 = vpack.c.b16 %v2085, %v2084
        %2102 = vmatpush.bf16.msra.mxu0 %v2093
        %2103 = vmatpush.bf16.msra.mxu0 %v2092
        %2104 = vmatpush.bf16.msra.mxu0 %v2091
        %2105 = vmatpush.bf16.msra.mxu0 %v2090
        %2106 = vmatpush.bf16.msra.mxu0 %v2089
        %2107 = vmatpush.bf16.msra.mxu0 %v2088
        %2108 = vmatpush.bf16.msra.mxu0 %v2087
        %2109 = vmatpush.bf16.msra.mxu0 %v2086
        %2110 = vmatmul.bf16.gmra.mxu0 %v2051
        %v2111 = vpop.f32.mrf.mxu0
        %v2112 = vadd.f32 %v2053, %v2111
        %v2113 = vpop.f32.mrf.mxu0
        %2114 = vdwg.mxu0
        %v2115 = vld [vmem:[%s5 + $0x158] sm:$0xf]
        %v2116 = vld [vmem:[%s5 + $0x15c] sm:$0xf]
        %v2117 = vld [vmem:[%s6 + $0x140] sm:$0xf]
        %v2118 = vld [vmem:[%s6 + $0x144] sm:$0xf]
        %v2119 = vld [vmem:[%s6 + $0x148] sm:$0xf]
        %v2120 = vld [vmem:[%s6 + $0x14c] sm:$0xf]
        %v2121 = vld [vmem:[%s6 + $0x150] sm:$0xf]
        %v2122 = vld [vmem:[%s6 + $0x154] sm:$0xf]
        %v2123 = vld [vmem:[%s6 + $0x158] sm:$0xf]
        %v2124 = vld [vmem:[%s6 + $0x15c] sm:$0xf]
        %v2125 = vld [vmem:[%s6 + $0x160] sm:$0xf]
        %v2126 = vld [vmem:[%s6 + $0x164] sm:$0xf]
        %v2127 = vld [vmem:[%s6 + $0x168] sm:$0xf]
        %v2128 = vld [vmem:[%s6 + $0x16c] sm:$0xf]
        %v2129 = vld [vmem:[%s6 + $0x170] sm:$0xf]
        %v2130 = vld [vmem:[%s6 + $0x174] sm:$0xf]
        %v2131 = vld [vmem:[%s6 + $0x178] sm:$0xf]
        %v2132 = vld [vmem:[%s6 + $0x17c] sm:$0xf]
        %v2133 = vld [vmem:[%s7 + $0x5] sm:$0x1]
        %v2134 = vperm.slane %v2133, 0
        %v2137 = vunpack.c.l.b16 %v2115
        %v2138 = vunpack.c.l.b16 %v2116
        %v2139 = vpack.c.b16 %v2138, %v2137
        %2141 = vmatpush.bf16.msra.mxu0 0
        %2142 = vmatpush.bf16.msra.mxu0 0
        %2143 = vmatpush.bf16.msra.mxu0 0
        %2144 = vmatpush.bf16.msra.mxu0 0
        %2145 = vmatpush.bf16.msra.mxu0 0
        %2146 = vmatpush.bf16.msra.mxu0 0
        %2147 = vmatpush.bf16.msra.mxu0 0
        %2148 = vmatpush.bf16.msra.mxu0 %v2139
        %2149 = vmatmul.bf16.gmra.mxu0 %v940
        %v2150 = vpop.f32.mrf.mxu0
        %v2151 = vadd.f32 %v2134, %v2150
        %v2152 = vpop.f32.mrf.mxu0
        %v2153 = vadd.f32 %v2134, %v2152
        %2154 = vmatmul.bf16.gmra.mxu0 %v943
        %v2155 = vpop.f32.mrf.mxu0
        %v2156 = vadd.f32 %v2134, %v2155
        %v2157 = vpop.f32.mrf.mxu0
        %v2158 = vadd.f32 %v2134, %v2157
        %2159 = vmatmul.bf16.gmra.mxu0 %v946
        %v2160 = vpop.f32.mrf.mxu0
        %v2161 = vadd.f32 %v2134, %v2160
        %v2162 = vpop.f32.mrf.mxu0
        %v2163 = vadd.f32 %v2134, %v2162
        %2164 = vmatmul.bf16.gmra.mxu0 %v949
        %v2165 = vpop.f32.mrf.mxu0
        %v2166 = vadd.f32 %v2134, %v2165
        %v2167 = vpop.f32.mrf.mxu0
        %v2168 = vadd.f32 %v2134, %v2167
        %2169 = vmatmul.bf16.gmra.mxu0 %v952
        %v2170 = vpop.f32.mrf.mxu0
        %v2171 = vadd.f32 %v2134, %v2170
        %v2172 = vpop.f32.mrf.mxu0
        %v2173 = vadd.f32 %v2134, %v2172
        %2174 = vdwg.mxu0
        %v2175 = vmax.f32 %v2151, 0.0
        %v2176 = vmax.f32 %v2153, 0.0
        %v2177 = vmax.f32 %v2156, 0.0
        %v2178 = vmax.f32 %v2158, 0.0
        %v2179 = vmax.f32 %v2161, 0.0
        %v2180 = vmax.f32 %v2163, 0.0
        %v2181 = vmax.f32 %v2166, 0.0
        %v2182 = vmax.f32 %v2168, 0.0
        %v2183 = vmax.f32 %v2171, 0.0
        %v2184 = vmax.f32 %v2173, 0.0
        %v2185 = vpack.c.bf16 %v2176, %v2175
        %v2186 = vpack.c.bf16 %v2178, %v2177
        %v2187 = vpack.c.bf16 %v2180, %v2179
        %v2188 = vpack.c.bf16 %v2182, %v2181
        %v2189 = vpack.c.bf16 %v2184, %v2183
        %v2190 = vld [vmem:[%s8 + $0x5] sm:$0x1]
        %v2191 = vperm.slane %v2190, 0
        %v2208 = vunpack.c.l.b16 %v2117
        %v2209 = vunpack.c.l.b16 %v2118
        %v2210 = vunpack.c.l.b16 %v2119
        %v2211 = vunpack.c.l.b16 %v2120
        %v2212 = vunpack.c.l.b16 %v2121
        %v2213 = vunpack.c.l.b16 %v2122
        %v2214 = vunpack.c.l.b16 %v2123
        %v2215 = vunpack.c.l.b16 %v2124
        %v2216 = vunpack.c.l.b16 %v2125
        %v2217 = vunpack.c.l.b16 %v2126
        %v2218 = vunpack.c.l.b16 %v2127
        %v2219 = vunpack.c.l.b16 %v2128
        %v2220 = vunpack.c.l.b16 %v2129
        %v2221 = vunpack.c.l.b16 %v2130
        %v2222 = vunpack.c.l.b16 %v2131
        %v2223 = vunpack.c.l.b16 %v2132
        %v2224 = vpack.c.b16 %v2209, %v2208
        %v2225 = vpack.c.b16 %v2211, %v2210
        %v2226 = vpack.c.b16 %v2213, %v2212
        %v2227 = vpack.c.b16 %v2215, %v2214
        %v2228 = vpack.c.b16 %v2217, %v2216
        %v2229 = vpack.c.b16 %v2219, %v2218
        %v2230 = vpack.c.b16 %v2221, %v2220
        %v2231 = vpack.c.b16 %v2223, %v2222
        %2240 = vmatpush.bf16.msra.mxu0 %v2231
        %2241 = vmatpush.bf16.msra.mxu0 %v2230
        %2242 = vmatpush.bf16.msra.mxu0 %v2229
        %2243 = vmatpush.bf16.msra.mxu0 %v2228
        %2244 = vmatpush.bf16.msra.mxu0 %v2227
        %2245 = vmatpush.bf16.msra.mxu0 %v2226
        %2246 = vmatpush.bf16.msra.mxu0 %v2225
        %2247 = vmatpush.bf16.msra.mxu0 %v2224
        %2248 = vmatmul.bf16.gmra.mxu0 %v2185
        %v2249 = vpop.f32.mrf.mxu0
        %v2250 = vadd.f32 %v2191, %v2249
        %v2251 = vpop.f32.mrf.mxu0
        %v2252 = vadd.f32 %v2191, %v2251
        %2253 = vmatmul.bf16.gmra.mxu0 %v2186
        %v2254 = vpop.f32.mrf.mxu0
        %v2255 = vadd.f32 %v2191, %v2254
        %v2256 = vpop.f32.mrf.mxu0
        %v2257 = vadd.f32 %v2191, %v2256
        %2258 = vmatmul.bf16.gmra.mxu0 %v2187
        %v2259 = vpop.f32.mrf.mxu0
        %v2260 = vadd.f32 %v2191, %v2259
        %v2261 = vpop.f32.mrf.mxu0
        %v2262 = vadd.f32 %v2191, %v2261
        %2263 = vmatmul.bf16.gmra.mxu0 %v2188
        %v2264 = vpop.f32.mrf.mxu0
        %v2265 = vadd.f32 %v2191, %v2264
        %v2266 = vpop.f32.mrf.mxu0
        %v2267 = vadd.f32 %v2191, %v2266
        %2268 = vmatmul.bf16.gmra.mxu0 %v2189
        %v2269 = vpop.f32.mrf.mxu0
        %v2270 = vadd.f32 %v2191, %v2269
        %v2271 = vpop.f32.mrf.mxu0
        %v2272 = vadd.f32 %v2191, %v2271
        %2273 = vdwg.mxu0
        %v2274 = vpack.c.bf16 %v1874, %v1874
        %v2275 = vpack.c.bf16 %v1876, %v1876
        %v2276 = vunpack.c.l.bf16 %v2274
        %v2277 = vunpack.c.l.bf16 %v2275
        %v2278 = vsub.f32 %v1874, %v2276
        %v2279 = vsub.f32 %v1876, %v2277
        %v2280 = vpack.c.bf16 %v2278, %v2278
        %v2281 = vpack.c.bf16 %v2279, %v2279
        %v2284 = vunpack.c.l.b16 %v2280
        %v2285 = vunpack.c.l.b16 %v2281
        %v2286 = vpack.c.b16 %v2285, %v2284
        %2288 = vmatpush.bf16.msra.mxu0 0
        %2289 = vmatpush.bf16.msra.mxu0 0
        %2290 = vmatpush.bf16.msra.mxu0 0
        %2291 = vmatpush.bf16.msra.mxu0 0
        %2292 = vmatpush.bf16.msra.mxu0 0
        %2293 = vmatpush.bf16.msra.mxu0 0
        %2294 = vmatpush.bf16.msra.mxu0 0
        %2295 = vmatpush.bf16.msra.mxu0 %v2286
        %2296 = vmatmul.bf16.gmra.mxu0 %v1127
        %v2297 = vpop.f32.mrf.mxu0
        %v2298 = vadd.f32 0.0, %v2297
        %v2299 = vpop.f32.mrf.mxu0
        %v2300 = vadd.f32 0.0, %v2299
        %2301 = vmatmul.bf16.gmra.mxu0 %v1130
        %v2302 = vpop.f32.mrf.mxu0
        %v2303 = vadd.f32 0.0, %v2302
        %v2304 = vpop.f32.mrf.mxu0
        %v2305 = vadd.f32 0.0, %v2304
        %2306 = vmatmul.bf16.gmra.mxu0 %v1133
        %v2307 = vpop.f32.mrf.mxu0
        %v2308 = vadd.f32 0.0, %v2307
        %v2309 = vpop.f32.mrf.mxu0
        %v2310 = vadd.f32 0.0, %v2309
        %2311 = vmatmul.bf16.gmra.mxu0 %v1136
        %v2312 = vpop.f32.mrf.mxu0
        %v2313 = vadd.f32 0.0, %v2312
        %v2314 = vpop.f32.mrf.mxu0
        %v2315 = vadd.f32 0.0, %v2314
        %2316 = vmatmul.bf16.gmra.mxu0 %v1139
        %v2317 = vpop.f32.mrf.mxu0
        %v2318 = vadd.f32 0.0, %v2317
        %v2319 = vpop.f32.mrf.mxu0
        %v2320 = vadd.f32 0.0, %v2319
        %2321 = vdwg.mxu0
        %v2324 = vunpack.c.l.b16 %v2274
        %v2325 = vunpack.c.l.b16 %v2275
        %v2326 = vpack.c.b16 %v2325, %v2324
        %2328 = vmatpush.bf16.msra.mxu0 0
        %2329 = vmatpush.bf16.msra.mxu0 0
        %2330 = vmatpush.bf16.msra.mxu0 0
        %2331 = vmatpush.bf16.msra.mxu0 0
        %2332 = vmatpush.bf16.msra.mxu0 0
        %2333 = vmatpush.bf16.msra.mxu0 0
        %2334 = vmatpush.bf16.msra.mxu0 0
        %2335 = vmatpush.bf16.msra.mxu0 %v2326
        %2336 = vmatmul.bf16.gmra.mxu0 %v1127
        %v2337 = vpop.f32.mrf.mxu0
        %v2338 = vadd.f32 %v2298, %v2337
        %v2339 = vpop.f32.mrf.mxu0
        %v2340 = vadd.f32 %v2300, %v2339
        %2341 = vmatmul.bf16.gmra.mxu0 %v1130
        %v2342 = vpop.f32.mrf.mxu0
        %v2343 = vadd.f32 %v2303, %v2342
        %v2344 = vpop.f32.mrf.mxu0
        %v2345 = vadd.f32 %v2305, %v2344
        %2346 = vmatmul.bf16.gmra.mxu0 %v1133
        %v2347 = vpop.f32.mrf.mxu0
        %v2348 = vadd.f32 %v2308, %v2347
        %v2349 = vpop.f32.mrf.mxu0
        %v2350 = vadd.f32 %v2310, %v2349
        %2351 = vmatmul.bf16.gmra.mxu0 %v1136
        %v2352 = vpop.f32.mrf.mxu0
        %v2353 = vadd.f32 %v2313, %v2352
        %v2354 = vpop.f32.mrf.mxu0
        %v2355 = vadd.f32 %v2315, %v2354
        %2356 = vmatmul.bf16.gmra.mxu0 %v1139
        %v2357 = vpop.f32.mrf.mxu0
        %v2358 = vadd.f32 %v2318, %v2357
        %v2359 = vpop.f32.mrf.mxu0
        %v2360 = vadd.f32 %v2320, %v2359
        %2361 = vdwg.mxu0
        %v2362 = vpack.c.bf16 %v2112, %v2112
        %v2363 = vpack.c.bf16 %v2338, %v2338
        %v2364 = vpack.c.bf16 %v2340, %v2340
        %v2365 = vpack.c.bf16 %v2343, %v2343
        %v2366 = vpack.c.bf16 %v2345, %v2345
        %v2367 = vpack.c.bf16 %v2348, %v2348
        %v2368 = vpack.c.bf16 %v2350, %v2350
        %v2369 = vpack.c.bf16 %v2353, %v2353
        %v2370 = vpack.c.bf16 %v2355, %v2355
        %v2371 = vpack.c.bf16 %v2358, %v2358
        %v2372 = vpack.c.bf16 %v2360, %v2360
        %v2383 = vunpack.c.l.b16 %v2363
        %v2384 = vunpack.c.l.b16 %v2364
        %v2385 = vunpack.c.l.b16 %v2365
        %v2386 = vunpack.c.l.b16 %v2366
        %v2387 = vunpack.c.l.b16 %v2367
        %v2388 = vunpack.c.l.b16 %v2368
        %v2389 = vunpack.c.l.b16 %v2369
        %v2390 = vunpack.c.l.b16 %v2370
        %v2391 = vunpack.c.l.b16 %v2371
        %v2392 = vunpack.c.l.b16 %v2372
        %v2393 = vpack.c.b16 %v2384, %v2383
        %v2394 = vpack.c.b16 %v2386, %v2385
        %v2395 = vpack.c.b16 %v2388, %v2387
        %v2396 = vpack.c.b16 %v2390, %v2389
        %v2397 = vpack.c.b16 %v2392, %v2391
        %2403 = vmatpush.bf16.xpose.msra.mxu0 0
        %2404 = vmatpush.bf16.xpose.msra.mxu0 0
        %2405 = vmatpush.bf16.xpose.msra.mxu0 0
        %2406 = vmatpush.bf16.xpose.msra.mxu0 0
        %2407 = vmatpush.bf16.xpose.msra.mxu0 0
        %2408 = vmatpush.bf16.xpose.msra.mxu0 0
        %2409 = vmatpush.bf16.xpose.msra.mxu0 0
        %2410 = vmatpush.bf16.xpose.msra.mxu0 %v2362
        %2411 = vmatmul.bf16.gmra.mxu0 %v2393
        %v2412 = vpop.f32.mrf.mxu0
        %v2413 = vadd.f32 0.0, %v2412
        %v2414 = vpop.f32.mrf.mxu0
        %v2415 = vadd.f32 0.0, %v2414
        %2416 = vmatmul.bf16.gmra.mxu0 %v2394
        %v2417 = vpop.f32.mrf.mxu0
        %v2418 = vadd.f32 0.0, %v2417
        %v2419 = vpop.f32.mrf.mxu0
        %v2420 = vadd.f32 0.0, %v2419
        %2421 = vmatmul.bf16.gmra.mxu0 %v2395
        %v2422 = vpop.f32.mrf.mxu0
        %v2423 = vadd.f32 0.0, %v2422
        %v2424 = vpop.f32.mrf.mxu0
        %v2425 = vadd.f32 0.0, %v2424
        %2426 = vmatmul.bf16.gmra.mxu0 %v2396
        %v2427 = vpop.f32.mrf.mxu0
        %v2428 = vadd.f32 0.0, %v2427
        %v2429 = vpop.f32.mrf.mxu0
        %v2430 = vadd.f32 0.0, %v2429
        %2431 = vmatmul.bf16.gmra.mxu0 %v2397
        %v2432 = vpop.f32.mrf.mxu0
        %v2433 = vadd.f32 0.0, %v2432
        %v2434 = vpop.f32.mrf.mxu0
        %v2435 = vadd.f32 0.0, %v2434
        %2436 = vdwg.mxu0
        %v2437 = vsel %vm1290, %v2413, -inf
        %2438 = vmax.xlane.f32.xlu0 %v2437
        %v2439 = vpop.xlane.xlu0 %2438
        %v2440 = vsel %vm1290, %v2415, -inf
        %2441 = vmax.xlane.f32.xlu0 %v2440
        %v2442 = vpop.xlane.xlu0 %2441
        %v2443 = vsel %vm1290, %v2418, -inf
        %2444 = vmax.xlane.f32.xlu0 %v2443
        %v2445 = vpop.xlane.xlu0 %2444
        %v2446 = vsel %vm1290, %v2420, -inf
        %2447 = vmax.xlane.f32.xlu0 %v2446
        %v2448 = vpop.xlane.xlu0 %2447
        %v2449 = vsel %vm1290, %v2423, -inf
        %2450 = vmax.xlane.f32.xlu0 %v2449
        %v2451 = vpop.xlane.xlu0 %2450
        %v2452 = vsel %vm1290, %v2425, -inf
        %2453 = vmax.xlane.f32.xlu0 %v2452
        %v2454 = vpop.xlane.xlu0 %2453
        %v2455 = vsel %vm1290, %v2428, -inf
        %2456 = vmax.xlane.f32.xlu0 %v2455
        %v2457 = vpop.xlane.xlu0 %2456
        %v2458 = vsel %vm1290, %v2430, -inf
        %2459 = vmax.xlane.f32.xlu0 %v2458
        %v2460 = vpop.xlane.xlu0 %2459
        %v2461 = vsel %vm1290, %v2433, -inf
        %2462 = vmax.xlane.f32.xlu0 %v2461
        %v2463 = vpop.xlane.xlu0 %2462
        %v2464 = vsel %vm1290, %v2435, -inf
        %2465 = vmax.xlane.f32.xlu0 %v2464
        %v2466 = vpop.xlane.xlu0 %2465
        %v2467 = vsub.f32 %v2413, %v2439
        %v2468 = vsub.f32 %v2415, %v2442
        %v2469 = vsub.f32 %v2418, %v2445
        %v2470 = vsub.f32 %v2420, %v2448
        %v2471 = vsub.f32 %v2423, %v2451
        %v2472 = vsub.f32 %v2425, %v2454
        %v2473 = vsub.f32 %v2428, %v2457
        %v2474 = vsub.f32 %v2430, %v2460
        %v2475 = vsub.f32 %v2433, %v2463
        %v2476 = vsub.f32 %v2435, %v2466
        %v2477 = vmul.f32 %v2467, 1.442695
        %v2478 = vpow.pop %v2477
        %v2479 = vmul.f32 %v2468, 1.442695
        %v2480 = vpow.pop %v2479
        %v2481 = vmul.f32 %v2469, 1.442695
        %v2482 = vpow.pop %v2481
        %v2483 = vmul.f32 %v2470, 1.442695
        %v2484 = vpow.pop %v2483
        %v2485 = vmul.f32 %v2471, 1.442695
        %v2486 = vpow.pop %v2485
        %v2487 = vmul.f32 %v2472, 1.442695
        %v2488 = vpow.pop %v2487
        %v2489 = vmul.f32 %v2473, 1.442695
        %v2490 = vpow.pop %v2489
        %v2491 = vmul.f32 %v2474, 1.442695
        %v2492 = vpow.pop %v2491
        %v2493 = vmul.f32 %v2475, 1.442695
        %v2494 = vpow.pop %v2493
        %v2495 = vmul.f32 %v2476, 1.442695
        %v2496 = vpow.pop %v2495
        %v2497 = vsel %vm1290, %v2478, 0.0
        %2498 = vadd.xlane.f32.xlu0 %v2497
        %v2499 = vpop.xlane.xlu0 %2498
        %v2500 = vsel %vm1290, %v2480, 0.0
        %2501 = vadd.xlane.f32.xlu0 %v2500
        %v2502 = vpop.xlane.xlu0 %2501
        %v2503 = vsel %vm1290, %v2482, 0.0
        %2504 = vadd.xlane.f32.xlu0 %v2503
        %v2505 = vpop.xlane.xlu0 %2504
        %v2506 = vsel %vm1290, %v2484, 0.0
        %2507 = vadd.xlane.f32.xlu0 %v2506
        %v2508 = vpop.xlane.xlu0 %2507
        %v2509 = vsel %vm1290, %v2486, 0.0
        %2510 = vadd.xlane.f32.xlu0 %v2509
        %v2511 = vpop.xlane.xlu0 %2510
        %v2512 = vsel %vm1290, %v2488, 0.0
        %2513 = vadd.xlane.f32.xlu0 %v2512
        %v2514 = vpop.xlane.xlu0 %2513
        %v2515 = vsel %vm1290, %v2490, 0.0
        %2516 = vadd.xlane.f32.xlu0 %v2515
        %v2517 = vpop.xlane.xlu0 %2516
        %v2518 = vsel %vm1290, %v2492, 0.0
        %2519 = vadd.xlane.f32.xlu0 %v2518
        %v2520 = vpop.xlane.xlu0 %2519
        %v2521 = vsel %vm1290, %v2494, 0.0
        %2522 = vadd.xlane.f32.xlu0 %v2521
        %v2523 = vpop.xlane.xlu0 %2522
        %v2524 = vsel %vm1290, %v2496, 0.0
        %2525 = vadd.xlane.f32.xlu0 %v2524
        %v2526 = vpop.xlane.xlu0 %2525
        %v2527 = vmul.f32 %v2478, %v1382
        %v2528 = vmul.f32 %v2480, %v1382
        %v2529 = vmul.f32 %v2482, %v1382
        %v2530 = vmul.f32 %v2484, %v1382
        %v2531 = vmul.f32 %v2486, %v1382
        %v2532 = vmul.f32 %v2488, %v1382
        %v2533 = vmul.f32 %v2490, %v1382
        %v2534 = vmul.f32 %v2492, %v1382
        %v2535 = vmul.f32 %v2494, %v1382
        %v2536 = vmul.f32 %v2496, %v1382
        %v2537 = vsel %vm1290, %v2527, 0.0
        %2538 = vadd.xlane.f32.xlu0 %v2537
        %v2539 = vpop.xlane.xlu0 %2538
        %v2540 = vsel %vm1290, %v2528, 0.0
        %2541 = vadd.xlane.f32.xlu0 %v2540
        %v2542 = vpop.xlane.xlu0 %2541
        %v2543 = vsel %vm1290, %v2529, 0.0
        %2544 = vadd.xlane.f32.xlu0 %v2543
        %v2545 = vpop.xlane.xlu0 %2544
        %v2546 = vsel %vm1290, %v2530, 0.0
        %2547 = vadd.xlane.f32.xlu0 %v2546
        %v2548 = vpop.xlane.xlu0 %2547
        %v2549 = vsel %vm1290, %v2531, 0.0
        %2550 = vadd.xlane.f32.xlu0 %v2549
        %v2551 = vpop.xlane.xlu0 %2550
        %v2552 = vsel %vm1290, %v2532, 0.0
        %2553 = vadd.xlane.f32.xlu0 %v2552
        %v2554 = vpop.xlane.xlu0 %2553
        %v2555 = vsel %vm1290, %v2533, 0.0
        %2556 = vadd.xlane.f32.xlu0 %v2555
        %v2557 = vpop.xlane.xlu0 %2556
        %v2558 = vsel %vm1290, %v2534, 0.0
        %2559 = vadd.xlane.f32.xlu0 %v2558
        %v2560 = vpop.xlane.xlu0 %2559
        %v2561 = vsel %vm1290, %v2535, 0.0
        %2562 = vadd.xlane.f32.xlu0 %v2561
        %v2563 = vpop.xlane.xlu0 %2562
        %v2564 = vsel %vm1290, %v2536, 0.0
        %2565 = vadd.xlane.f32.xlu0 %v2564
        %v2566 = vpop.xlane.xlu0 %2565
        %v2567 = vmul.f32 %v2499, 1e-07
        %v2568 = vmul.f32 %v2502, 1e-07
        %v2569 = vmul.f32 %v2505, 1e-07
        %v2570 = vmul.f32 %v2508, 1e-07
        %v2571 = vmul.f32 %v2511, 1e-07
        %v2572 = vmul.f32 %v2514, 1e-07
        %v2573 = vmul.f32 %v2517, 1e-07
        %v2574 = vmul.f32 %v2520, 1e-07
        %v2575 = vmul.f32 %v2523, 1e-07
        %v2576 = vmul.f32 %v2526, 1e-07
        %v2577 = vadd.f32 %v2539, %v2567
        %v2578 = vadd.f32 %v2542, %v2568
        %v2579 = vadd.f32 %v2545, %v2569
        %v2580 = vadd.f32 %v2548, %v2570
        %v2581 = vadd.f32 %v2551, %v2571
        %v2582 = vadd.f32 %v2554, %v2572
        %v2583 = vadd.f32 %v2557, %v2573
        %v2584 = vadd.f32 %v2560, %v2574
        %v2585 = vadd.f32 %v2563, %v2575
        %v2586 = vadd.f32 %v2566, %v2576
        %v2587 = vrcp.pop %v2577
        %v2588 = vmul.f32 %v2577, %v2587
        %v2589 = vsub.f32 1.0, %v2588
        %v2590 = vmul.f32 %v2587, %v2589
        %v2591 = vadd.f32 %v2587, %v2590
        %vm2592 = vweird.f32 %v2577
        %vm2593 = vweird.f32 %v2587
        %vm2594 = vmor %vm2592, %vm2593
        %v2595 = vsel %vm2594, %v2587, %v2591
        %v2596 = vand.u32 2147483647, %v2577
        %vm2597 = vcmp.eq.f32.partialorder %v2596, 8.507059e+37
        %v2598 = vand.u32 %v2577, 2147483648
        %v2599 = vor.u32 1.1754944e-38, %v2598
        %v2600 = vsel %vm2597, %v2599, %v2595
        %v2601 = vrcp.pop %v2578
        %v2602 = vmul.f32 %v2578, %v2601
        %v2603 = vsub.f32 1.0, %v2602
        %v2604 = vmul.f32 %v2601, %v2603
        %v2605 = vadd.f32 %v2601, %v2604
        %vm2606 = vweird.f32 %v2578
        %vm2607 = vweird.f32 %v2601
        %vm2608 = vmor %vm2606, %vm2607
        %v2609 = vsel %vm2608, %v2601, %v2605
        %v2610 = vand.u32 2147483647, %v2578
        %vm2611 = vcmp.eq.f32.partialorder %v2610, 8.507059e+37
        %v2612 = vand.u32 %v2578, 2147483648
        %v2613 = vor.u32 1.1754944e-38, %v2612
        %v2614 = vsel %vm2611, %v2613, %v2609
        %v2615 = vrcp.pop %v2579
        %v2616 = vmul.f32 %v2579, %v2615
        %v2617 = vsub.f32 1.0, %v2616
        %v2618 = vmul.f32 %v2615, %v2617
        %v2619 = vadd.f32 %v2615, %v2618
        %vm2620 = vweird.f32 %v2579
        %vm2621 = vweird.f32 %v2615
        %vm2622 = vmor %vm2620, %vm2621
        %v2623 = vsel %vm2622, %v2615, %v2619
        %v2624 = vand.u32 2147483647, %v2579
        %vm2625 = vcmp.eq.f32.partialorder %v2624, 8.507059e+37
        %v2626 = vand.u32 %v2579, 2147483648
        %v2627 = vor.u32 1.1754944e-38, %v2626
        %v2628 = vsel %vm2625, %v2627, %v2623
        %v2629 = vrcp.pop %v2580
        %v2630 = vmul.f32 %v2580, %v2629
        %v2631 = vsub.f32 1.0, %v2630
        %v2632 = vmul.f32 %v2629, %v2631
        %v2633 = vadd.f32 %v2629, %v2632
        %vm2634 = vweird.f32 %v2580
        %vm2635 = vweird.f32 %v2629
        %vm2636 = vmor %vm2634, %vm2635
        %v2637 = vsel %vm2636, %v2629, %v2633
        %v2638 = vand.u32 2147483647, %v2580
        %vm2639 = vcmp.eq.f32.partialorder %v2638, 8.507059e+37
        %v2640 = vand.u32 %v2580, 2147483648
        %v2641 = vor.u32 1.1754944e-38, %v2640
        %v2642 = vsel %vm2639, %v2641, %v2637
        %v2643 = vrcp.pop %v2581
        %v2644 = vmul.f32 %v2581, %v2643
        %v2645 = vsub.f32 1.0, %v2644
        %v2646 = vmul.f32 %v2643, %v2645
        %v2647 = vadd.f32 %v2643, %v2646
        %vm2648 = vweird.f32 %v2581
        %vm2649 = vweird.f32 %v2643
        %vm2650 = vmor %vm2648, %vm2649
        %v2651 = vsel %vm2650, %v2643, %v2647
        %v2652 = vand.u32 2147483647, %v2581
        %vm2653 = vcmp.eq.f32.partialorder %v2652, 8.507059e+37
        %v2654 = vand.u32 %v2581, 2147483648
        %v2655 = vor.u32 1.1754944e-38, %v2654
        %v2656 = vsel %vm2653, %v2655, %v2651
        %v2657 = vrcp.pop %v2582
        %v2658 = vmul.f32 %v2582, %v2657
        %v2659 = vsub.f32 1.0, %v2658
        %v2660 = vmul.f32 %v2657, %v2659
        %v2661 = vadd.f32 %v2657, %v2660
        %vm2662 = vweird.f32 %v2582
        %vm2663 = vweird.f32 %v2657
        %vm2664 = vmor %vm2662, %vm2663
        %v2665 = vsel %vm2664, %v2657, %v2661
        %v2666 = vand.u32 2147483647, %v2582
        %vm2667 = vcmp.eq.f32.partialorder %v2666, 8.507059e+37
        %v2668 = vand.u32 %v2582, 2147483648
        %v2669 = vor.u32 1.1754944e-38, %v2668
        %v2670 = vsel %vm2667, %v2669, %v2665
        %v2671 = vrcp.pop %v2583
        %v2672 = vmul.f32 %v2583, %v2671
        %v2673 = vsub.f32 1.0, %v2672
        %v2674 = vmul.f32 %v2671, %v2673
        %v2675 = vadd.f32 %v2671, %v2674
        %vm2676 = vweird.f32 %v2583
        %vm2677 = vweird.f32 %v2671
        %vm2678 = vmor %vm2676, %vm2677
        %v2679 = vsel %vm2678, %v2671, %v2675
        %v2680 = vand.u32 2147483647, %v2583
        %vm2681 = vcmp.eq.f32.partialorder %v2680, 8.507059e+37
        %v2682 = vand.u32 %v2583, 2147483648
        %v2683 = vor.u32 1.1754944e-38, %v2682
        %v2684 = vsel %vm2681, %v2683, %v2679
        %v2685 = vrcp.pop %v2584
        %v2686 = vmul.f32 %v2584, %v2685
        %v2687 = vsub.f32 1.0, %v2686
        %v2688 = vmul.f32 %v2685, %v2687
        %v2689 = vadd.f32 %v2685, %v2688
        %vm2690 = vweird.f32 %v2584
        %vm2691 = vweird.f32 %v2685
        %vm2692 = vmor %vm2690, %vm2691
        %v2693 = vsel %vm2692, %v2685, %v2689
        %v2694 = vand.u32 2147483647, %v2584
        %vm2695 = vcmp.eq.f32.partialorder %v2694, 8.507059e+37
        %v2696 = vand.u32 %v2584, 2147483648
        %v2697 = vor.u32 1.1754944e-38, %v2696
        %v2698 = vsel %vm2695, %v2697, %v2693
        %v2699 = vrcp.pop %v2585
        %v2700 = vmul.f32 %v2585, %v2699
        %v2701 = vsub.f32 1.0, %v2700
        %v2702 = vmul.f32 %v2699, %v2701
        %v2703 = vadd.f32 %v2699, %v2702
        %vm2704 = vweird.f32 %v2585
        %vm2705 = vweird.f32 %v2699
        %vm2706 = vmor %vm2704, %vm2705
        %v2707 = vsel %vm2706, %v2699, %v2703
        %v2708 = vand.u32 2147483647, %v2585
        %vm2709 = vcmp.eq.f32.partialorder %v2708, 8.507059e+37
        %v2710 = vand.u32 %v2585, 2147483648
        %v2711 = vor.u32 1.1754944e-38, %v2710
        %v2712 = vsel %vm2709, %v2711, %v2707
        %v2713 = vrcp.pop %v2586
        %v2714 = vmul.f32 %v2586, %v2713
        %v2715 = vsub.f32 1.0, %v2714
        %v2716 = vmul.f32 %v2713, %v2715
        %v2717 = vadd.f32 %v2713, %v2716
        %vm2718 = vweird.f32 %v2586
        %vm2719 = vweird.f32 %v2713
        %vm2720 = vmor %vm2718, %vm2719
        %v2721 = vsel %vm2720, %v2713, %v2717
        %v2722 = vand.u32 2147483647, %v2586
        %vm2723 = vcmp.eq.f32.partialorder %v2722, 8.507059e+37
        %v2724 = vand.u32 %v2586, 2147483648
        %v2725 = vor.u32 1.1754944e-38, %v2724
        %v2726 = vsel %vm2723, %v2725, %v2721
        %v2727 = vmul.f32 %v2527, %v2600
        %v2728 = vmul.f32 %v2528, %v2614
        %v2729 = vmul.f32 %v2529, %v2628
        %v2730 = vmul.f32 %v2530, %v2642
        %v2731 = vmul.f32 %v2531, %v2656
        %v2732 = vmul.f32 %v2532, %v2670
        %v2733 = vmul.f32 %v2533, %v2684
        %v2734 = vmul.f32 %v2534, %v2698
        %v2735 = vmul.f32 %v2535, %v2712
        %v2736 = vmul.f32 %v2536, %v2726
        %v2737 = vpack.c.bf16 %v2727, %v2727
        %v2738 = vpack.c.bf16 %v2728, %v2728
        %v2739 = vpack.c.bf16 %v2729, %v2729
        %v2740 = vpack.c.bf16 %v2730, %v2730
        %v2741 = vpack.c.bf16 %v2731, %v2731
        %v2742 = vpack.c.bf16 %v2732, %v2732
        %v2743 = vpack.c.bf16 %v2733, %v2733
        %v2744 = vpack.c.bf16 %v2734, %v2734
        %v2745 = vpack.c.bf16 %v2735, %v2735
        %v2746 = vpack.c.bf16 %v2736, %v2736
        %v2757 = vunpack.c.l.b16 %v2737
        %v2758 = vunpack.c.l.b16 %v2738
        %v2759 = vunpack.c.l.b16 %v2739
        %v2760 = vunpack.c.l.b16 %v2740
        %v2761 = vunpack.c.l.b16 %v2741
        %v2762 = vunpack.c.l.b16 %v2742
        %v2763 = vunpack.c.l.b16 %v2743
        %v2764 = vunpack.c.l.b16 %v2744
        %v2765 = vunpack.c.l.b16 %v2745
        %v2766 = vunpack.c.l.b16 %v2746
        %v2767 = vpack.c.b16 %v2758, %v2757
        %v2768 = vpack.c.b16 %v2760, %v2759
        %v2769 = vpack.c.b16 %v2762, %v2761
        %v2770 = vpack.c.b16 %v2764, %v2763
        %v2771 = vpack.c.b16 %v2766, %v2765
        %v2773 = vsel %vm1290, %v2767, 0
        %v2776 = vsel %vm1290, %v2768, 0
        %v2779 = vsel %vm1290, %v2769, 0
        %v2782 = vsel %vm1290, %v2770, 0
        %v2785 = vsel %vm1290, %v2771, 0
        %v2788 = vsel %vm1644, %v2362, 0
        %2790 = vmatpush.bf16.msra.mxu0 0
        %2791 = vmatpush.bf16.msra.mxu0 0
        %2792 = vmatpush.bf16.msra.mxu0 0
        %2793 = vmatpush.bf16.msra.mxu0 0
        %2794 = vmatpush.bf16.msra.mxu0 0
        %2795 = vmatpush.bf16.msra.mxu0 0
        %2796 = vmatpush.bf16.msra.mxu0 0
        %2797 = vmatpush.bf16.msra.mxu0 %v2788
        %2798 = vmatmul.bf16.gmra.mxu0 %v2773
        %v2799 = vpop.f32.mrf.mxu0
        %v2800 = vadd.f32 0.0, %v2799
        %v2801 = vpop.f32.mrf.mxu0
        %v2802 = vadd.f32 0.0, %v2801
        %2803 = vmatmul.bf16.gmra.mxu0 %v2776
        %v2804 = vpop.f32.mrf.mxu0
        %v2805 = vadd.f32 0.0, %v2804
        %v2806 = vpop.f32.mrf.mxu0
        %v2807 = vadd.f32 0.0, %v2806
        %2808 = vmatmul.bf16.gmra.mxu0 %v2779
        %v2809 = vpop.f32.mrf.mxu0
        %v2810 = vadd.f32 0.0, %v2809
        %v2811 = vpop.f32.mrf.mxu0
        %v2812 = vadd.f32 0.0, %v2811
        %2813 = vmatmul.bf16.gmra.mxu0 %v2782
        %v2814 = vpop.f32.mrf.mxu0
        %v2815 = vadd.f32 0.0, %v2814
        %v2816 = vpop.f32.mrf.mxu0
        %v2817 = vadd.f32 0.0, %v2816
        %2818 = vmatmul.bf16.gmra.mxu0 %v2785
        %v2819 = vpop.f32.mrf.mxu0
        %v2820 = vadd.f32 0.0, %v2819
        %v2821 = vpop.f32.mrf.mxu0
        %v2822 = vadd.f32 0.0, %v2821
        %2823 = vdwg.mxu0
        %v2824 = vmul.f32 %v2338, %v2800
        %v2825 = vmul.f32 %v2340, %v2802
        %v2826 = vmul.f32 %v2343, %v2805
        %v2827 = vmul.f32 %v2345, %v2807
        %v2828 = vmul.f32 %v2348, %v2810
        %v2829 = vmul.f32 %v2350, %v2812
        %v2830 = vmul.f32 %v2353, %v2815
        %v2831 = vmul.f32 %v2355, %v2817
        %v2832 = vmul.f32 %v2358, %v2820
        %v2833 = vmul.f32 %v2360, %v2822
        %v2834 = vmul.f32 %v2824, %v2250
        %v2835 = vmul.f32 %v2825, %v2252
        %v2836 = vmul.f32 %v2826, %v2255
        %v2837 = vmul.f32 %v2827, %v2257
        %v2838 = vmul.f32 %v2828, %v2260
        %v2839 = vmul.f32 %v2829, %v2262
        %v2840 = vmul.f32 %v2830, %v2265
        %v2841 = vmul.f32 %v2831, %v2267
        %v2842 = vmul.f32 %v2832, %v2270
        %v2843 = vmul.f32 %v2833, %v2272
        %v2844 = vadd.f32 %v1874, %v2834
        %v2845 = vadd.f32 %v1876, %v2835
        %v2846 = vadd.f32 %v2844, %v2836
        %v2847 = vadd.f32 %v2845, %v2837
        %v2848 = vadd.f32 %v2846, %v2838
        %v2849 = vadd.f32 %v2847, %v2839
        %v2850 = vadd.f32 %v2848, %v2840
        %v2851 = vadd.f32 %v2849, %v2841
        %v2852 = vadd.f32 %v2850, %v2842
        %v2853 = vadd.f32 %v2851, %v2843
        %v2854 = vmax.f32 %v2852, 0.0
        %v2855 = vmax.f32 %v2853, 0.0
        %v2856 = vld [vmem:[%s5 + $0x160] sm:$0xf]
        %v2857 = vld [vmem:[%s5 + $0x164] sm:$0xf]
        %v2858 = vld [vmem:[%s5 + $0x168] sm:$0xf]
        %v2859 = vld [vmem:[%s5 + $0x16c] sm:$0xf]
        %v2860 = vld [vmem:[%s5 + $0x170] sm:$0xf]
        %v2861 = vld [vmem:[%s5 + $0x174] sm:$0xf]
        %v2862 = vld [vmem:[%s5 + $0x178] sm:$0xf]
        %v2863 = vld [vmem:[%s5 + $0x17c] sm:$0xf]
        %v2864 = vld [vmem:[%s5 + $0x180] sm:$0xf]
        %v2865 = vld [vmem:[%s5 + $0x184] sm:$0xf]
        %v2866 = vld [vmem:[%s5 + $0x188] sm:$0xf]
        %v2867 = vld [vmem:[%s5 + $0x18c] sm:$0xf]
        %v2868 = vld [vmem:[%s5 + $0x190] sm:$0xf]
        %v2869 = vld [vmem:[%s5 + $0x194] sm:$0xf]
        %v2870 = vld [vmem:[%s5 + $0x198] sm:$0xf]
        %v2871 = vld [vmem:[%s5 + $0x19c] sm:$0xf]
        %v2872 = vld [vmem:[%s6 + $0x180] sm:$0xf]
        %v2873 = vld [vmem:[%s6 + $0x184] sm:$0xf]
        %v2874 = vld [vmem:[%s6 + $0x188] sm:$0xf]
        %v2875 = vld [vmem:[%s6 + $0x18c] sm:$0xf]
        %v2876 = vld [vmem:[%s6 + $0x190] sm:$0xf]
        %v2877 = vld [vmem:[%s6 + $0x194] sm:$0xf]
        %v2878 = vld [vmem:[%s6 + $0x198] sm:$0xf]
        %v2879 = vld [vmem:[%s6 + $0x19c] sm:$0xf]
        %v2880 = vld [vmem:[%s6 + $0x1a0] sm:$0xf]
        %v2881 = vld [vmem:[%s6 + $0x1a4] sm:$0xf]
        %v2882 = vld [vmem:[%s6 + $0x1a8] sm:$0xf]
        %v2883 = vld [vmem:[%s6 + $0x1ac] sm:$0xf]
        %v2884 = vld [vmem:[%s6 + $0x1b0] sm:$0xf]
        %v2885 = vld [vmem:[%s6 + $0x1b4] sm:$0xf]
        %v2886 = vld [vmem:[%s6 + $0x1b8] sm:$0xf]
        %v2887 = vld [vmem:[%s6 + $0x1bc] sm:$0xf]
        %v2888 = vpack.c.bf16 %v2855, %v2854
        %v2889 = vld [vmem:[%s7 + $0x6] sm:$0x1]
        %v2890 = vperm.slane %v2889, 0
        %v2907 = vunpack.c.l.b16 %v2856
        %v2908 = vunpack.c.l.b16 %v2857
        %v2909 = vunpack.c.l.b16 %v2858
        %v2910 = vunpack.c.l.b16 %v2859
        %v2911 = vunpack.c.l.b16 %v2860
        %v2912 = vunpack.c.l.b16 %v2861
        %v2913 = vunpack.c.l.b16 %v2862
        %v2914 = vunpack.c.l.b16 %v2863
        %v2915 = vunpack.c.l.b16 %v2864
        %v2916 = vunpack.c.l.b16 %v2865
        %v2917 = vunpack.c.l.b16 %v2866
        %v2918 = vunpack.c.l.b16 %v2867
        %v2919 = vunpack.c.l.b16 %v2868
        %v2920 = vunpack.c.l.b16 %v2869
        %v2921 = vunpack.c.l.b16 %v2870
        %v2922 = vunpack.c.l.b16 %v2871
        %v2923 = vpack.c.b16 %v2908, %v2907
        %v2924 = vpack.c.b16 %v2910, %v2909
        %v2925 = vpack.c.b16 %v2912, %v2911
        %v2926 = vpack.c.b16 %v2914, %v2913
        %v2927 = vpack.c.b16 %v2916, %v2915
        %v2928 = vpack.c.b16 %v2918, %v2917
        %v2929 = vpack.c.b16 %v2920, %v2919
        %v2930 = vpack.c.b16 %v2922, %v2921
        %2939 = vmatpush.bf16.msra.mxu0 %v2930
        %2940 = vmatpush.bf16.msra.mxu0 %v2929
        %2941 = vmatpush.bf16.msra.mxu0 %v2928
        %2942 = vmatpush.bf16.msra.mxu0 %v2927
        %2943 = vmatpush.bf16.msra.mxu0 %v2926
        %2944 = vmatpush.bf16.msra.mxu0 %v2925
        %2945 = vmatpush.bf16.msra.mxu0 %v2924
        %2946 = vmatpush.bf16.msra.mxu0 %v2923
        %2947 = vmatmul.bf16.gmra.mxu0 %v2888
        %v2948 = vpop.f32.mrf.mxu0
        %v2949 = vadd.f32 %v2890, %v2948
        %v2950 = vpop.f32.mrf.mxu0
        %v2951 = vadd.f32 %v2890, %v2950
        %2952 = vdwg.mxu0
        %v2953 = vmax.f32 %v2949, 0.0
        %v2954 = vmax.f32 %v2951, 0.0
        %v2955 = vpack.c.bf16 %v2954, %v2953
        %v2956 = vld [vmem:[%s8 + $0x6] sm:$0x1]
        %v2957 = vperm.slane %v2956, 0
        %v2974 = vunpack.c.l.b16 %v2872
        %v2975 = vunpack.c.l.b16 %v2873
        %v2976 = vunpack.c.l.b16 %v2874
        %v2977 = vunpack.c.l.b16 %v2875
        %v2978 = vunpack.c.l.b16 %v2876
        %v2979 = vunpack.c.l.b16 %v2877
        %v2980 = vunpack.c.l.b16 %v2878
        %v2981 = vunpack.c.l.b16 %v2879
        %v2982 = vunpack.c.l.b16 %v2880
        %v2983 = vunpack.c.l.b16 %v2881
        %v2984 = vunpack.c.l.b16 %v2882
        %v2985 = vunpack.c.l.b16 %v2883
        %v2986 = vunpack.c.l.b16 %v2884
        %v2987 = vunpack.c.l.b16 %v2885
        %v2988 = vunpack.c.l.b16 %v2886
        %v2989 = vunpack.c.l.b16 %v2887
        %v2990 = vpack.c.b16 %v2975, %v2974
        %v2991 = vpack.c.b16 %v2977, %v2976
        %v2992 = vpack.c.b16 %v2979, %v2978
        %v2993 = vpack.c.b16 %v2981, %v2980
        %v2994 = vpack.c.b16 %v2983, %v2982
        %v2995 = vpack.c.b16 %v2985, %v2984
        %v2996 = vpack.c.b16 %v2987, %v2986
        %v2997 = vpack.c.b16 %v2989, %v2988
        %3006 = vmatpush.bf16.msra.mxu0 %v2997
        %3007 = vmatpush.bf16.msra.mxu0 %v2996
        %3008 = vmatpush.bf16.msra.mxu0 %v2995
        %3009 = vmatpush.bf16.msra.mxu0 %v2994
        %3010 = vmatpush.bf16.msra.mxu0 %v2993
        %3011 = vmatpush.bf16.msra.mxu0 %v2992
        %3012 = vmatpush.bf16.msra.mxu0 %v2991
        %3013 = vmatpush.bf16.msra.mxu0 %v2990
        %3014 = vmatmul.bf16.gmra.mxu0 %v2955
        %v3015 = vpop.f32.mrf.mxu0
        %v3016 = vadd.f32 %v2957, %v3015
        %v3017 = vpop.f32.mrf.mxu0
        %v3018 = vadd.f32 %v2957, %v3017
        %3019 = vdwg.mxu0
        %v3020 = vld [vmem:[%s5 + $0x1a0] sm:$0xf]
        %v3021 = vld [vmem:[%s5 + $0x1a4] sm:$0xf]
        %v3022 = vld [vmem:[%s5 + $0x1a8] sm:$0xf]
        %v3023 = vld [vmem:[%s5 + $0x1ac] sm:$0xf]
        %v3024 = vld [vmem:[%s5 + $0x1b0] sm:$0xf]
        %v3025 = vld [vmem:[%s5 + $0x1b4] sm:$0xf]
        %v3026 = vld [vmem:[%s5 + $0x1b8] sm:$0xf]
        %v3027 = vld [vmem:[%s5 + $0x1bc] sm:$0xf]
        %v3028 = vld [vmem:[%s5 + $0x1c0] sm:$0xf]
        %v3029 = vld [vmem:[%s5 + $0x1c4] sm:$0xf]
        %v3030 = vld [vmem:[%s5 + $0x1c8] sm:$0xf]
        %v3031 = vld [vmem:[%s5 + $0x1cc] sm:$0xf]
        %v3032 = vld [vmem:[%s5 + $0x1d0] sm:$0xf]
        %v3033 = vld [vmem:[%s5 + $0x1d4] sm:$0xf]
        %v3034 = vld [vmem:[%s5 + $0x1d8] sm:$0xf]
        %v3035 = vld [vmem:[%s5 + $0x1dc] sm:$0xf]
        %v3036 = vld [vmem:[%s5 + $0x1e0] sm:$0xf]
        %v3037 = vld [vmem:[%s5 + $0x1e4] sm:$0xf]
        %v3038 = vld [vmem:[%s5 + $0x1e8] sm:$0xf]
        %v3039 = vld [vmem:[%s5 + $0x1ec] sm:$0xf]
        %v3040 = vld [vmem:[%s5 + $0x1f0] sm:$0xf]
        %v3041 = vld [vmem:[%s5 + $0x1f4] sm:$0xf]
        %v3042 = vld [vmem:[%s5 + $0x1f8] sm:$0xf]
        %v3043 = vld [vmem:[%s5 + $0x1fc] sm:$0xf]
        %v3044 = vld [vmem:[%s5 + $0x200] sm:$0xf]
        %v3045 = vld [vmem:[%s5 + $0x204] sm:$0xf]
        %v3046 = vld [vmem:[%s5 + $0x208] sm:$0xf]
        %v3047 = vld [vmem:[%s5 + $0x20c] sm:$0xf]
        %v3048 = vld [vmem:[%s5 + $0x210] sm:$0xf]
        %v3049 = vld [vmem:[%s5 + $0x214] sm:$0xf]
        %v3050 = vld [vmem:[%s5 + $0x218] sm:$0xf]
        %v3051 = vld [vmem:[%s5 + $0x21c] sm:$0xf]
        %v3052 = vld [vmem:[%s6 + $0x1c0] sm:$0xf]
        %v3053 = vld [vmem:[%s6 + $0x1c4] sm:$0xf]
        %v3054 = vld [vmem:[%s6 + $0x1c8] sm:$0xf]
        %v3055 = vld [vmem:[%s6 + $0x1cc] sm:$0xf]
        %v3056 = vld [vmem:[%s6 + $0x1d0] sm:$0xf]
        %v3057 = vld [vmem:[%s6 + $0x1d4] sm:$0xf]
        %v3058 = vld [vmem:[%s6 + $0x1d8] sm:$0xf]
        %v3059 = vld [vmem:[%s6 + $0x1dc] sm:$0xf]
        %v3060 = vld [vmem:[%s6 + $0x1e0] sm:$0xf]
        %v3061 = vld [vmem:[%s6 + $0x1e4] sm:$0xf]
        %v3062 = vld [vmem:[%s6 + $0x1e8] sm:$0xf]
        %v3063 = vld [vmem:[%s6 + $0x1ec] sm:$0xf]
        %v3064 = vld [vmem:[%s6 + $0x1f0] sm:$0xf]
        %v3065 = vld [vmem:[%s6 + $0x1f4] sm:$0xf]
        %v3066 = vld [vmem:[%s6 + $0x1f8] sm:$0xf]
        %v3067 = vld [vmem:[%s6 + $0x1fc] sm:$0xf]
        %v3068 = vld [vmem:[%s7 + $0x7] sm:$0x1]
        %v3069 = vperm.slane %v3068, 0
        %v3102 = vunpack.c.l.b16 %v3020
        %v3103 = vunpack.c.l.b16 %v3021
        %v3104 = vunpack.c.l.b16 %v3022
        %v3105 = vunpack.c.l.b16 %v3023
        %v3106 = vunpack.c.l.b16 %v3024
        %v3107 = vunpack.c.l.b16 %v3025
        %v3108 = vunpack.c.l.b16 %v3026
        %v3109 = vunpack.c.l.b16 %v3027
        %v3110 = vunpack.c.l.b16 %v3028
        %v3111 = vunpack.c.l.b16 %v3029
        %v3112 = vunpack.c.l.b16 %v3030
        %v3113 = vunpack.c.l.b16 %v3031
        %v3114 = vunpack.c.l.b16 %v3032
        %v3115 = vunpack.c.l.b16 %v3033
        %v3116 = vunpack.c.l.b16 %v3034
        %v3117 = vunpack.c.l.b16 %v3035
        %v3118 = vunpack.c.l.b16 %v3036
        %v3119 = vunpack.c.l.b16 %v3037
        %v3120 = vunpack.c.l.b16 %v3038
        %v3121 = vunpack.c.l.b16 %v3039
        %v3122 = vunpack.c.l.b16 %v3040
        %v3123 = vunpack.c.l.b16 %v3041
        %v3124 = vunpack.c.l.b16 %v3042
        %v3125 = vunpack.c.l.b16 %v3043
        %v3126 = vunpack.c.l.b16 %v3044
        %v3127 = vunpack.c.l.b16 %v3045
        %v3128 = vunpack.c.l.b16 %v3046
        %v3129 = vunpack.c.l.b16 %v3047
        %v3130 = vunpack.c.l.b16 %v3048
        %v3131 = vunpack.c.l.b16 %v3049
        %v3132 = vunpack.c.l.b16 %v3050
        %v3133 = vunpack.c.l.b16 %v3051
        %v3134 = vpack.c.b16 %v3103, %v3102
        %v3135 = vpack.c.b16 %v3105, %v3104
        %v3136 = vpack.c.b16 %v3107, %v3106
        %v3137 = vpack.c.b16 %v3109, %v3108
        %v3138 = vpack.c.b16 %v3111, %v3110
        %v3139 = vpack.c.b16 %v3113, %v3112
        %v3140 = vpack.c.b16 %v3115, %v3114
        %v3141 = vpack.c.b16 %v3117, %v3116
        %v3142 = vpack.c.b16 %v3119, %v3118
        %v3143 = vpack.c.b16 %v3121, %v3120
        %v3144 = vpack.c.b16 %v3123, %v3122
        %v3145 = vpack.c.b16 %v3125, %v3124
        %v3146 = vpack.c.b16 %v3127, %v3126
        %v3147 = vpack.c.b16 %v3129, %v3128
        %v3148 = vpack.c.b16 %v3131, %v3130
        %v3149 = vpack.c.b16 %v3133, %v3132
        %3166 = vmatpush.bf16.msra.mxu0 %v3141
        %3167 = vmatpush.bf16.msra.mxu0 %v3140
        %3168 = vmatpush.bf16.msra.mxu0 %v3139
        %3169 = vmatpush.bf16.msra.mxu0 %v3138
        %3170 = vmatpush.bf16.msra.mxu0 %v3137
        %3171 = vmatpush.bf16.msra.mxu0 %v3136
        %3172 = vmatpush.bf16.msra.mxu0 %v3135
        %3173 = vmatpush.bf16.msra.mxu0 %v3134
        %3174 = vmatmul.bf16.gmra.mxu0 %v696
        %v3175 = vpop.f32.mrf.mxu0
        %v3176 = vadd.f32 %v3069, %v3175
        %v3177 = vpop.f32.mrf.mxu0
        %3178 = vdwg.mxu0
        %3179 = vmatpush.bf16.msra.mxu0 %v3149
        %3180 = vmatpush.bf16.msra.mxu0 %v3148
        %3181 = vmatpush.bf16.msra.mxu0 %v3147
        %3182 = vmatpush.bf16.msra.mxu0 %v3146
        %3183 = vmatpush.bf16.msra.mxu0 %v3145
        %3184 = vmatpush.bf16.msra.mxu0 %v3144
        %3185 = vmatpush.bf16.msra.mxu0 %v3143
        %3186 = vmatpush.bf16.msra.mxu0 %v3142
        %3187 = vmatmul.bf16.gmra.mxu0 %v697
        %v3188 = vpop.f32.mrf.mxu0
        %v3189 = vadd.f32 %v3176, %v3188
        %v3190 = vpop.f32.mrf.mxu0
        %3191 = vdwg.mxu0
        %v3192 = vmax.f32 %v3189, 0.0
        %v3193 = vpack.c.bf16 %v3192, %v3192
        %v3194 = vld [vmem:[%s8 + $0x7] sm:$0x1]
        %v3195 = vperm.slane %v3194, 0
        %v3212 = vunpack.c.l.b16 %v3052
        %v3213 = vunpack.c.l.b16 %v3053
        %v3214 = vunpack.c.l.b16 %v3054
        %v3215 = vunpack.c.l.b16 %v3055
        %v3216 = vunpack.c.l.b16 %v3056
        %v3217 = vunpack.c.l.b16 %v3057
        %v3218 = vunpack.c.l.b16 %v3058
        %v3219 = vunpack.c.l.b16 %v3059
        %v3220 = vunpack.c.l.b16 %v3060
        %v3221 = vunpack.c.l.b16 %v3061
        %v3222 = vunpack.c.l.b16 %v3062
        %v3223 = vunpack.c.l.b16 %v3063
        %v3224 = vunpack.c.l.b16 %v3064
        %v3225 = vunpack.c.l.b16 %v3065
        %v3226 = vunpack.c.l.b16 %v3066
        %v3227 = vunpack.c.l.b16 %v3067
        %v3228 = vpack.c.b16 %v3213, %v3212
        %v3229 = vpack.c.b16 %v3215, %v3214
        %v3230 = vpack.c.b16 %v3217, %v3216
        %v3231 = vpack.c.b16 %v3219, %v3218
        %v3232 = vpack.c.b16 %v3221, %v3220
        %v3233 = vpack.c.b16 %v3223, %v3222
        %v3234 = vpack.c.b16 %v3225, %v3224
        %v3235 = vpack.c.b16 %v3227, %v3226
        %3244 = vmatpush.bf16.msra.mxu0 %v3235
        %3245 = vmatpush.bf16.msra.mxu0 %v3234
        %3246 = vmatpush.bf16.msra.mxu0 %v3233
        %3247 = vmatpush.bf16.msra.mxu0 %v3232
        %3248 = vmatpush.bf16.msra.mxu0 %v3231
        %3249 = vmatpush.bf16.msra.mxu0 %v3230
        %3250 = vmatpush.bf16.msra.mxu0 %v3229
        %3251 = vmatpush.bf16.msra.mxu0 %v3228
        %3252 = vmatmul.bf16.gmra.mxu0 %v3193
        %v3253 = vpop.f32.mrf.mxu0
        %v3254 = vadd.f32 %v3195, %v3253
        %v3255 = vpop.f32.mrf.mxu0
        %3256 = vdwg.mxu0
        %v3257 = vld [vmem:[%s5 + $0x220] sm:$0xf]
        %v3258 = vld [vmem:[%s5 + $0x224] sm:$0xf]
        %v3259 = vld [vmem:[%s6 + $0x200] sm:$0xf]
        %v3260 = vld [vmem:[%s6 + $0x204] sm:$0xf]
        %v3261 = vld [vmem:[%s6 + $0x208] sm:$0xf]
        %v3262 = vld [vmem:[%s6 + $0x20c] sm:$0xf]
        %v3263 = vld [vmem:[%s6 + $0x210] sm:$0xf]
        %v3264 = vld [vmem:[%s6 + $0x214] sm:$0xf]
        %v3265 = vld [vmem:[%s6 + $0x218] sm:$0xf]
        %v3266 = vld [vmem:[%s6 + $0x21c] sm:$0xf]
        %v3267 = vld [vmem:[%s6 + $0x220] sm:$0xf]
        %v3268 = vld [vmem:[%s6 + $0x224] sm:$0xf]
        %v3269 = vld [vmem:[%s6 + $0x228] sm:$0xf]
        %v3270 = vld [vmem:[%s6 + $0x22c] sm:$0xf]
        %v3271 = vld [vmem:[%s6 + $0x230] sm:$0xf]
        %v3272 = vld [vmem:[%s6 + $0x234] sm:$0xf]
        %v3273 = vld [vmem:[%s6 + $0x238] sm:$0xf]
        %v3274 = vld [vmem:[%s6 + $0x23c] sm:$0xf]
        %v3275 = vld [vmem:[%s7 + $0x8] sm:$0x1]
        %v3276 = vperm.slane %v3275, 0
        %v3279 = vunpack.c.l.b16 %v3257
        %v3280 = vunpack.c.l.b16 %v3258
        %v3281 = vpack.c.b16 %v3280, %v3279
        %3283 = vmatpush.bf16.msra.mxu0 0
        %3284 = vmatpush.bf16.msra.mxu0 0
        %3285 = vmatpush.bf16.msra.mxu0 0
        %3286 = vmatpush.bf16.msra.mxu0 0
        %3287 = vmatpush.bf16.msra.mxu0 0
        %3288 = vmatpush.bf16.msra.mxu0 0
        %3289 = vmatpush.bf16.msra.mxu0 0
        %3290 = vmatpush.bf16.msra.mxu0 %v3281
        %3291 = vmatmul.bf16.gmra.mxu0 %v940
        %v3292 = vpop.f32.mrf.mxu0
        %v3293 = vadd.f32 %v3276, %v3292
        %v3294 = vpop.f32.mrf.mxu0
        %v3295 = vadd.f32 %v3276, %v3294
        %3296 = vmatmul.bf16.gmra.mxu0 %v943
        %v3297 = vpop.f32.mrf.mxu0
        %v3298 = vadd.f32 %v3276, %v3297
        %v3299 = vpop.f32.mrf.mxu0
        %v3300 = vadd.f32 %v3276, %v3299
        %3301 = vmatmul.bf16.gmra.mxu0 %v946
        %v3302 = vpop.f32.mrf.mxu0
        %v3303 = vadd.f32 %v3276, %v3302
        %v3304 = vpop.f32.mrf.mxu0
        %v3305 = vadd.f32 %v3276, %v3304
        %3306 = vmatmul.bf16.gmra.mxu0 %v949
        %v3307 = vpop.f32.mrf.mxu0
        %v3308 = vadd.f32 %v3276, %v3307
        %v3309 = vpop.f32.mrf.mxu0
        %v3310 = vadd.f32 %v3276, %v3309
        %3311 = vmatmul.bf16.gmra.mxu0 %v952
        %v3312 = vpop.f32.mrf.mxu0
        %v3313 = vadd.f32 %v3276, %v3312
        %v3314 = vpop.f32.mrf.mxu0
        %v3315 = vadd.f32 %v3276, %v3314
        %3316 = vdwg.mxu0
        %v3317 = vmax.f32 %v3293, 0.0
        %v3318 = vmax.f32 %v3295, 0.0
        %v3319 = vmax.f32 %v3298, 0.0
        %v3320 = vmax.f32 %v3300, 0.0
        %v3321 = vmax.f32 %v3303, 0.0
        %v3322 = vmax.f32 %v3305, 0.0
        %v3323 = vmax.f32 %v3308, 0.0
        %v3324 = vmax.f32 %v3310, 0.0
        %v3325 = vmax.f32 %v3313, 0.0
        %v3326 = vmax.f32 %v3315, 0.0
        %v3327 = vpack.c.bf16 %v3318, %v3317
        %v3328 = vpack.c.bf16 %v3320, %v3319
        %v3329 = vpack.c.bf16 %v3322, %v3321
        %v3330 = vpack.c.bf16 %v3324, %v3323
        %v3331 = vpack.c.bf16 %v3326, %v3325
        %v3332 = vld [vmem:[%s8 + $0x8] sm:$0x1]
        %v3333 = vperm.slane %v3332, 0
        %v3350 = vunpack.c.l.b16 %v3259
        %v3351 = vunpack.c.l.b16 %v3260
        %v3352 = vunpack.c.l.b16 %v3261
        %v3353 = vunpack.c.l.b16 %v3262
        %v3354 = vunpack.c.l.b16 %v3263
        %v3355 = vunpack.c.l.b16 %v3264
        %v3356 = vunpack.c.l.b16 %v3265
        %v3357 = vunpack.c.l.b16 %v3266
        %v3358 = vunpack.c.l.b16 %v3267
        %v3359 = vunpack.c.l.b16 %v3268
        %v3360 = vunpack.c.l.b16 %v3269
        %v3361 = vunpack.c.l.b16 %v3270
        %v3362 = vunpack.c.l.b16 %v3271
        %v3363 = vunpack.c.l.b16 %v3272
        %v3364 = vunpack.c.l.b16 %v3273
        %v3365 = vunpack.c.l.b16 %v3274
        %v3366 = vpack.c.b16 %v3351, %v3350
        %v3367 = vpack.c.b16 %v3353, %v3352
        %v3368 = vpack.c.b16 %v3355, %v3354
        %v3369 = vpack.c.b16 %v3357, %v3356
        %v3370 = vpack.c.b16 %v3359, %v3358
        %v3371 = vpack.c.b16 %v3361, %v3360
        %v3372 = vpack.c.b16 %v3363, %v3362
        %v3373 = vpack.c.b16 %v3365, %v3364
        %3382 = vmatpush.bf16.msra.mxu0 %v3373
        %3383 = vmatpush.bf16.msra.mxu0 %v3372
        %3384 = vmatpush.bf16.msra.mxu0 %v3371
        %3385 = vmatpush.bf16.msra.mxu0 %v3370
        %3386 = vmatpush.bf16.msra.mxu0 %v3369
        %3387 = vmatpush.bf16.msra.mxu0 %v3368
        %3388 = vmatpush.bf16.msra.mxu0 %v3367
        %3389 = vmatpush.bf16.msra.mxu0 %v3366
        %3390 = vmatmul.bf16.gmra.mxu0 %v3327
        %v3391 = vpop.f32.mrf.mxu0
        %v3392 = vadd.f32 %v3333, %v3391
        %v3393 = vpop.f32.mrf.mxu0
        %v3394 = vadd.f32 %v3333, %v3393
        %3395 = vmatmul.bf16.gmra.mxu0 %v3328
        %v3396 = vpop.f32.mrf.mxu0
        %v3397 = vadd.f32 %v3333, %v3396
        %v3398 = vpop.f32.mrf.mxu0
        %v3399 = vadd.f32 %v3333, %v3398
        %3400 = vmatmul.bf16.gmra.mxu0 %v3329
        %v3401 = vpop.f32.mrf.mxu0
        %v3402 = vadd.f32 %v3333, %v3401
        %v3403 = vpop.f32.mrf.mxu0
        %v3404 = vadd.f32 %v3333, %v3403
        %3405 = vmatmul.bf16.gmra.mxu0 %v3330
        %v3406 = vpop.f32.mrf.mxu0
        %v3407 = vadd.f32 %v3333, %v3406
        %v3408 = vpop.f32.mrf.mxu0
        %v3409 = vadd.f32 %v3333, %v3408
        %3410 = vmatmul.bf16.gmra.mxu0 %v3331
        %v3411 = vpop.f32.mrf.mxu0
        %v3412 = vadd.f32 %v3333, %v3411
        %v3413 = vpop.f32.mrf.mxu0
        %v3414 = vadd.f32 %v3333, %v3413
        %3415 = vdwg.mxu0
        %v3416 = vpack.c.bf16 %v3016, %v3016
        %v3417 = vpack.c.bf16 %v3018, %v3018
        %v3418 = vunpack.c.l.bf16 %v3416
        %v3419 = vunpack.c.l.bf16 %v3417
        %v3420 = vsub.f32 %v3016, %v3418
        %v3421 = vsub.f32 %v3018, %v3419
        %v3422 = vpack.c.bf16 %v3420, %v3420
        %v3423 = vpack.c.bf16 %v3421, %v3421
        %v3426 = vunpack.c.l.b16 %v3422
        %v3427 = vunpack.c.l.b16 %v3423
        %v3428 = vpack.c.b16 %v3427, %v3426
        %3430 = vmatpush.bf16.msra.mxu0 0
        %3431 = vmatpush.bf16.msra.mxu0 0
        %3432 = vmatpush.bf16.msra.mxu0 0
        %3433 = vmatpush.bf16.msra.mxu0 0
        %3434 = vmatpush.bf16.msra.mxu0 0
        %3435 = vmatpush.bf16.msra.mxu0 0
        %3436 = vmatpush.bf16.msra.mxu0 0
        %3437 = vmatpush.bf16.msra.mxu0 %v3428
        %3438 = vmatmul.bf16.gmra.mxu0 %v1127
        %v3439 = vpop.f32.mrf.mxu0
        %v3440 = vadd.f32 0.0, %v3439
        %v3441 = vpop.f32.mrf.mxu0
        %v3442 = vadd.f32 0.0, %v3441
        %3443 = vmatmul.bf16.gmra.mxu0 %v1130
        %v3444 = vpop.f32.mrf.mxu0
        %v3445 = vadd.f32 0.0, %v3444
        %v3446 = vpop.f32.mrf.mxu0
        %v3447 = vadd.f32 0.0, %v3446
        %3448 = vmatmul.bf16.gmra.mxu0 %v1133
        %v3449 = vpop.f32.mrf.mxu0
        %v3450 = vadd.f32 0.0, %v3449
        %v3451 = vpop.f32.mrf.mxu0
        %v3452 = vadd.f32 0.0, %v3451
        %3453 = vmatmul.bf16.gmra.mxu0 %v1136
        %v3454 = vpop.f32.mrf.mxu0
        %v3455 = vadd.f32 0.0, %v3454
        %v3456 = vpop.f32.mrf.mxu0
        %v3457 = vadd.f32 0.0, %v3456
        %3458 = vmatmul.bf16.gmra.mxu0 %v1139
        %v3459 = vpop.f32.mrf.mxu0
        %v3460 = vadd.f32 0.0, %v3459
        %v3461 = vpop.f32.mrf.mxu0
        %v3462 = vadd.f32 0.0, %v3461
        %3463 = vdwg.mxu0
        %v3466 = vunpack.c.l.b16 %v3416
        %v3467 = vunpack.c.l.b16 %v3417
        %v3468 = vpack.c.b16 %v3467, %v3466
        %3470 = vmatpush.bf16.msra.mxu0 0
        %3471 = vmatpush.bf16.msra.mxu0 0
        %3472 = vmatpush.bf16.msra.mxu0 0
        %3473 = vmatpush.bf16.msra.mxu0 0
        %3474 = vmatpush.bf16.msra.mxu0 0
        %3475 = vmatpush.bf16.msra.mxu0 0
        %3476 = vmatpush.bf16.msra.mxu0 0
        %3477 = vmatpush.bf16.msra.mxu0 %v3468
        %3478 = vmatmul.bf16.gmra.mxu0 %v1127
        %v3479 = vpop.f32.mrf.mxu0
        %v3480 = vadd.f32 %v3440, %v3479
        %v3481 = vpop.f32.mrf.mxu0
        %v3482 = vadd.f32 %v3442, %v3481
        %3483 = vmatmul.bf16.gmra.mxu0 %v1130
        %v3484 = vpop.f32.mrf.mxu0
        %v3485 = vadd.f32 %v3445, %v3484
        %v3486 = vpop.f32.mrf.mxu0
        %v3487 = vadd.f32 %v3447, %v3486
        %3488 = vmatmul.bf16.gmra.mxu0 %v1133
        %v3489 = vpop.f32.mrf.mxu0
        %v3490 = vadd.f32 %v3450, %v3489
        %v3491 = vpop.f32.mrf.mxu0
        %v3492 = vadd.f32 %v3452, %v3491
        %3493 = vmatmul.bf16.gmra.mxu0 %v1136
        %v3494 = vpop.f32.mrf.mxu0
        %v3495 = vadd.f32 %v3455, %v3494
        %v3496 = vpop.f32.mrf.mxu0
        %v3497 = vadd.f32 %v3457, %v3496
        %3498 = vmatmul.bf16.gmra.mxu0 %v1139
        %v3499 = vpop.f32.mrf.mxu0
        %v3500 = vadd.f32 %v3460, %v3499
        %v3501 = vpop.f32.mrf.mxu0
        %v3502 = vadd.f32 %v3462, %v3501
        %3503 = vdwg.mxu0
        %v3504 = vpack.c.bf16 %v3254, %v3254
        %v3505 = vpack.c.bf16 %v3480, %v3480
        %v3506 = vpack.c.bf16 %v3482, %v3482
        %v3507 = vpack.c.bf16 %v3485, %v3485
        %v3508 = vpack.c.bf16 %v3487, %v3487
        %v3509 = vpack.c.bf16 %v3490, %v3490
        %v3510 = vpack.c.bf16 %v3492, %v3492
        %v3511 = vpack.c.bf16 %v3495, %v3495
        %v3512 = vpack.c.bf16 %v3497, %v3497
        %v3513 = vpack.c.bf16 %v3500, %v3500
        %v3514 = vpack.c.bf16 %v3502, %v3502
        %v3525 = vunpack.c.l.b16 %v3505
        %v3526 = vunpack.c.l.b16 %v3506
        %v3527 = vunpack.c.l.b16 %v3507
        %v3528 = vunpack.c.l.b16 %v3508
        %v3529 = vunpack.c.l.b16 %v3509
        %v3530 = vunpack.c.l.b16 %v3510
        %v3531 = vunpack.c.l.b16 %v3511
        %v3532 = vunpack.c.l.b16 %v3512
        %v3533 = vunpack.c.l.b16 %v3513
        %v3534 = vunpack.c.l.b16 %v3514
        %v3535 = vpack.c.b16 %v3526, %v3525
        %v3536 = vpack.c.b16 %v3528, %v3527
        %v3537 = vpack.c.b16 %v3530, %v3529
        %v3538 = vpack.c.b16 %v3532, %v3531
        %v3539 = vpack.c.b16 %v3534, %v3533
        %3545 = vmatpush.bf16.xpose.msra.mxu0 0
        %3546 = vmatpush.bf16.xpose.msra.mxu0 0
        %3547 = vmatpush.bf16.xpose.msra.mxu0 0
        %3548 = vmatpush.bf16.xpose.msra.mxu0 0
        %3549 = vmatpush.bf16.xpose.msra.mxu0 0
        %3550 = vmatpush.bf16.xpose.msra.mxu0 0
        %3551 = vmatpush.bf16.xpose.msra.mxu0 0
        %3552 = vmatpush.bf16.xpose.msra.mxu0 %v3504
        %3553 = vmatmul.bf16.gmra.mxu0 %v3535
        %v3554 = vpop.f32.mrf.mxu0
        %v3555 = vadd.f32 0.0, %v3554
        %v3556 = vpop.f32.mrf.mxu0
        %v3557 = vadd.f32 0.0, %v3556
        %3558 = vmatmul.bf16.gmra.mxu0 %v3536
        %v3559 = vpop.f32.mrf.mxu0
        %v3560 = vadd.f32 0.0, %v3559
        %v3561 = vpop.f32.mrf.mxu0
        %v3562 = vadd.f32 0.0, %v3561
        %3563 = vmatmul.bf16.gmra.mxu0 %v3537
        %v3564 = vpop.f32.mrf.mxu0
        %v3565 = vadd.f32 0.0, %v3564
        %v3566 = vpop.f32.mrf.mxu0
        %v3567 = vadd.f32 0.0, %v3566
        %3568 = vmatmul.bf16.gmra.mxu0 %v3538
        %v3569 = vpop.f32.mrf.mxu0
        %v3570 = vadd.f32 0.0, %v3569
        %v3571 = vpop.f32.mrf.mxu0
        %v3572 = vadd.f32 0.0, %v3571
        %3573 = vmatmul.bf16.gmra.mxu0 %v3539
        %v3574 = vpop.f32.mrf.mxu0
        %v3575 = vadd.f32 0.0, %v3574
        %v3576 = vpop.f32.mrf.mxu0
        %v3577 = vadd.f32 0.0, %v3576
        %3578 = vdwg.mxu0
        %v3579 = vsel %vm1290, %v3555, -inf
        %3580 = vmax.xlane.f32.xlu0 %v3579
        %v3581 = vpop.xlane.xlu0 %3580
        %v3582 = vsel %vm1290, %v3557, -inf
        %3583 = vmax.xlane.f32.xlu0 %v3582
        %v3584 = vpop.xlane.xlu0 %3583
        %v3585 = vsel %vm1290, %v3560, -inf
        %3586 = vmax.xlane.f32.xlu0 %v3585
        %v3587 = vpop.xlane.xlu0 %3586
        %v3588 = vsel %vm1290, %v3562, -inf
        %3589 = vmax.xlane.f32.xlu0 %v3588
        %v3590 = vpop.xlane.xlu0 %3589
        %v3591 = vsel %vm1290, %v3565, -inf
        %3592 = vmax.xlane.f32.xlu0 %v3591
        %v3593 = vpop.xlane.xlu0 %3592
        %v3594 = vsel %vm1290, %v3567, -inf
        %3595 = vmax.xlane.f32.xlu0 %v3594
        %v3596 = vpop.xlane.xlu0 %3595
        %v3597 = vsel %vm1290, %v3570, -inf
        %3598 = vmax.xlane.f32.xlu0 %v3597
        %v3599 = vpop.xlane.xlu0 %3598
        %v3600 = vsel %vm1290, %v3572, -inf
        %3601 = vmax.xlane.f32.xlu0 %v3600
        %v3602 = vpop.xlane.xlu0 %3601
        %v3603 = vsel %vm1290, %v3575, -inf
        %3604 = vmax.xlane.f32.xlu0 %v3603
        %v3605 = vpop.xlane.xlu0 %3604
        %v3606 = vsel %vm1290, %v3577, -inf
        %3607 = vmax.xlane.f32.xlu0 %v3606
        %v3608 = vpop.xlane.xlu0 %3607
        %v3609 = vsub.f32 %v3555, %v3581
        %v3610 = vsub.f32 %v3557, %v3584
        %v3611 = vsub.f32 %v3560, %v3587
        %v3612 = vsub.f32 %v3562, %v3590
        %v3613 = vsub.f32 %v3565, %v3593
        %v3614 = vsub.f32 %v3567, %v3596
        %v3615 = vsub.f32 %v3570, %v3599
        %v3616 = vsub.f32 %v3572, %v3602
        %v3617 = vsub.f32 %v3575, %v3605
        %v3618 = vsub.f32 %v3577, %v3608
        %v3619 = vmul.f32 %v3609, 1.442695
        %v3620 = vpow.pop %v3619
        %v3621 = vmul.f32 %v3610, 1.442695
        %v3622 = vpow.pop %v3621
        %v3623 = vmul.f32 %v3611, 1.442695
        %v3624 = vpow.pop %v3623
        %v3625 = vmul.f32 %v3612, 1.442695
        %v3626 = vpow.pop %v3625
        %v3627 = vmul.f32 %v3613, 1.442695
        %v3628 = vpow.pop %v3627
        %v3629 = vmul.f32 %v3614, 1.442695
        %v3630 = vpow.pop %v3629
        %v3631 = vmul.f32 %v3615, 1.442695
        %v3632 = vpow.pop %v3631
        %v3633 = vmul.f32 %v3616, 1.442695
        %v3634 = vpow.pop %v3633
        %v3635 = vmul.f32 %v3617, 1.442695
        %v3636 = vpow.pop %v3635
        %v3637 = vmul.f32 %v3618, 1.442695
        %v3638 = vpow.pop %v3637
        %v3639 = vsel %vm1290, %v3620, 0.0
        %3640 = vadd.xlane.f32.xlu0 %v3639
        %v3641 = vpop.xlane.xlu0 %3640
        %v3642 = vsel %vm1290, %v3622, 0.0
        %3643 = vadd.xlane.f32.xlu0 %v3642
        %v3644 = vpop.xlane.xlu0 %3643
        %v3645 = vsel %vm1290, %v3624, 0.0
        %3646 = vadd.xlane.f32.xlu0 %v3645
        %v3647 = vpop.xlane.xlu0 %3646
        %v3648 = vsel %vm1290, %v3626, 0.0
        %3649 = vadd.xlane.f32.xlu0 %v3648
        %v3650 = vpop.xlane.xlu0 %3649
        %v3651 = vsel %vm1290, %v3628, 0.0
        %3652 = vadd.xlane.f32.xlu0 %v3651
        %v3653 = vpop.xlane.xlu0 %3652
        %v3654 = vsel %vm1290, %v3630, 0.0
        %3655 = vadd.xlane.f32.xlu0 %v3654
        %v3656 = vpop.xlane.xlu0 %3655
        %v3657 = vsel %vm1290, %v3632, 0.0
        %3658 = vadd.xlane.f32.xlu0 %v3657
        %v3659 = vpop.xlane.xlu0 %3658
        %v3660 = vsel %vm1290, %v3634, 0.0
        %3661 = vadd.xlane.f32.xlu0 %v3660
        %v3662 = vpop.xlane.xlu0 %3661
        %v3663 = vsel %vm1290, %v3636, 0.0
        %3664 = vadd.xlane.f32.xlu0 %v3663
        %v3665 = vpop.xlane.xlu0 %3664
        %v3666 = vsel %vm1290, %v3638, 0.0
        %3667 = vadd.xlane.f32.xlu0 %v3666
        %v3668 = vpop.xlane.xlu0 %3667
        %v3669 = vmul.f32 %v3620, %v1382
        %v3670 = vmul.f32 %v3622, %v1382
        %v3671 = vmul.f32 %v3624, %v1382
        %v3672 = vmul.f32 %v3626, %v1382
        %v3673 = vmul.f32 %v3628, %v1382
        %v3674 = vmul.f32 %v3630, %v1382
        %v3675 = vmul.f32 %v3632, %v1382
        %v3676 = vmul.f32 %v3634, %v1382
        %v3677 = vmul.f32 %v3636, %v1382
        %v3678 = vmul.f32 %v3638, %v1382
        %v3679 = vsel %vm1290, %v3669, 0.0
        %3680 = vadd.xlane.f32.xlu0 %v3679
        %v3681 = vpop.xlane.xlu0 %3680
        %v3682 = vsel %vm1290, %v3670, 0.0
        %3683 = vadd.xlane.f32.xlu0 %v3682
        %v3684 = vpop.xlane.xlu0 %3683
        %v3685 = vsel %vm1290, %v3671, 0.0
        %3686 = vadd.xlane.f32.xlu0 %v3685
        %v3687 = vpop.xlane.xlu0 %3686
        %v3688 = vsel %vm1290, %v3672, 0.0
        %3689 = vadd.xlane.f32.xlu0 %v3688
        %v3690 = vpop.xlane.xlu0 %3689
        %v3691 = vsel %vm1290, %v3673, 0.0
        %3692 = vadd.xlane.f32.xlu0 %v3691
        %v3693 = vpop.xlane.xlu0 %3692
        %v3694 = vsel %vm1290, %v3674, 0.0
        %3695 = vadd.xlane.f32.xlu0 %v3694
        %v3696 = vpop.xlane.xlu0 %3695
        %v3697 = vsel %vm1290, %v3675, 0.0
        %3698 = vadd.xlane.f32.xlu0 %v3697
        %v3699 = vpop.xlane.xlu0 %3698
        %v3700 = vsel %vm1290, %v3676, 0.0
        %3701 = vadd.xlane.f32.xlu0 %v3700
        %v3702 = vpop.xlane.xlu0 %3701
        %v3703 = vsel %vm1290, %v3677, 0.0
        %3704 = vadd.xlane.f32.xlu0 %v3703
        %v3705 = vpop.xlane.xlu0 %3704
        %v3706 = vsel %vm1290, %v3678, 0.0
        %3707 = vadd.xlane.f32.xlu0 %v3706
        %v3708 = vpop.xlane.xlu0 %3707
        %v3709 = vmul.f32 %v3641, 1e-07
        %v3710 = vmul.f32 %v3644, 1e-07
        %v3711 = vmul.f32 %v3647, 1e-07
        %v3712 = vmul.f32 %v3650, 1e-07
        %v3713 = vmul.f32 %v3653, 1e-07
        %v3714 = vmul.f32 %v3656, 1e-07
        %v3715 = vmul.f32 %v3659, 1e-07
        %v3716 = vmul.f32 %v3662, 1e-07
        %v3717 = vmul.f32 %v3665, 1e-07
        %v3718 = vmul.f32 %v3668, 1e-07
        %v3719 = vadd.f32 %v3681, %v3709
        %v3720 = vadd.f32 %v3684, %v3710
        %v3721 = vadd.f32 %v3687, %v3711
        %v3722 = vadd.f32 %v3690, %v3712
        %v3723 = vadd.f32 %v3693, %v3713
        %v3724 = vadd.f32 %v3696, %v3714
        %v3725 = vadd.f32 %v3699, %v3715
        %v3726 = vadd.f32 %v3702, %v3716
        %v3727 = vadd.f32 %v3705, %v3717
        %v3728 = vadd.f32 %v3708, %v3718
        %v3729 = vrcp.pop %v3719
        %v3730 = vmul.f32 %v3719, %v3729
        %v3731 = vsub.f32 1.0, %v3730
        %v3732 = vmul.f32 %v3729, %v3731
        %v3733 = vadd.f32 %v3729, %v3732
        %vm3734 = vweird.f32 %v3719
        %vm3735 = vweird.f32 %v3729
        %vm3736 = vmor %vm3734, %vm3735
        %v3737 = vsel %vm3736, %v3729, %v3733
        %v3738 = vand.u32 2147483647, %v3719
        %vm3739 = vcmp.eq.f32.partialorder %v3738, 8.507059e+37
        %v3740 = vand.u32 %v3719, 2147483648
        %v3741 = vor.u32 1.1754944e-38, %v3740
        %v3742 = vsel %vm3739, %v3741, %v3737
        %v3743 = vrcp.pop %v3720
        %v3744 = vmul.f32 %v3720, %v3743
        %v3745 = vsub.f32 1.0, %v3744
        %v3746 = vmul.f32 %v3743, %v3745
        %v3747 = vadd.f32 %v3743, %v3746
        %vm3748 = vweird.f32 %v3720
        %vm3749 = vweird.f32 %v3743
        %vm3750 = vmor %vm3748, %vm3749
        %v3751 = vsel %vm3750, %v3743, %v3747
        %v3752 = vand.u32 2147483647, %v3720
        %vm3753 = vcmp.eq.f32.partialorder %v3752, 8.507059e+37
        %v3754 = vand.u32 %v3720, 2147483648
        %v3755 = vor.u32 1.1754944e-38, %v3754
        %v3756 = vsel %vm3753, %v3755, %v3751
        %v3757 = vrcp.pop %v3721
        %v3758 = vmul.f32 %v3721, %v3757
        %v3759 = vsub.f32 1.0, %v3758
        %v3760 = vmul.f32 %v3757, %v3759
        %v3761 = vadd.f32 %v3757, %v3760
        %vm3762 = vweird.f32 %v3721
        %vm3763 = vweird.f32 %v3757
        %vm3764 = vmor %vm3762, %vm3763
        %v3765 = vsel %vm3764, %v3757, %v3761
        %v3766 = vand.u32 2147483647, %v3721
        %vm3767 = vcmp.eq.f32.partialorder %v3766, 8.507059e+37
        %v3768 = vand.u32 %v3721, 2147483648
        %v3769 = vor.u32 1.1754944e-38, %v3768
        %v3770 = vsel %vm3767, %v3769, %v3765
        %v3771 = vrcp.pop %v3722
        %v3772 = vmul.f32 %v3722, %v3771
        %v3773 = vsub.f32 1.0, %v3772
        %v3774 = vmul.f32 %v3771, %v3773
        %v3775 = vadd.f32 %v3771, %v3774
        %vm3776 = vweird.f32 %v3722
        %vm3777 = vweird.f32 %v3771
        %vm3778 = vmor %vm3776, %vm3777
        %v3779 = vsel %vm3778, %v3771, %v3775
        %v3780 = vand.u32 2147483647, %v3722
        %vm3781 = vcmp.eq.f32.partialorder %v3780, 8.507059e+37
        %v3782 = vand.u32 %v3722, 2147483648
        %v3783 = vor.u32 1.1754944e-38, %v3782
        %v3784 = vsel %vm3781, %v3783, %v3779
        %v3785 = vrcp.pop %v3723
        %v3786 = vmul.f32 %v3723, %v3785
        %v3787 = vsub.f32 1.0, %v3786
        %v3788 = vmul.f32 %v3785, %v3787
        %v3789 = vadd.f32 %v3785, %v3788
        %vm3790 = vweird.f32 %v3723
        %vm3791 = vweird.f32 %v3785
        %vm3792 = vmor %vm3790, %vm3791
        %v3793 = vsel %vm3792, %v3785, %v3789
        %v3794 = vand.u32 2147483647, %v3723
        %vm3795 = vcmp.eq.f32.partialorder %v3794, 8.507059e+37
        %v3796 = vand.u32 %v3723, 2147483648
        %v3797 = vor.u32 1.1754944e-38, %v3796
        %v3798 = vsel %vm3795, %v3797, %v3793
        %v3799 = vrcp.pop %v3724
        %v3800 = vmul.f32 %v3724, %v3799
        %v3801 = vsub.f32 1.0, %v3800
        %v3802 = vmul.f32 %v3799, %v3801
        %v3803 = vadd.f32 %v3799, %v3802
        %vm3804 = vweird.f32 %v3724
        %vm3805 = vweird.f32 %v3799
        %vm3806 = vmor %vm3804, %vm3805
        %v3807 = vsel %vm3806, %v3799, %v3803
        %v3808 = vand.u32 2147483647, %v3724
        %vm3809 = vcmp.eq.f32.partialorder %v3808, 8.507059e+37
        %v3810 = vand.u32 %v3724, 2147483648
        %v3811 = vor.u32 1.1754944e-38, %v3810
        %v3812 = vsel %vm3809, %v3811, %v3807
        %v3813 = vrcp.pop %v3725
        %v3814 = vmul.f32 %v3725, %v3813
        %v3815 = vsub.f32 1.0, %v3814
        %v3816 = vmul.f32 %v3813, %v3815
        %v3817 = vadd.f32 %v3813, %v3816
        %vm3818 = vweird.f32 %v3725
        %vm3819 = vweird.f32 %v3813
        %vm3820 = vmor %vm3818, %vm3819
        %v3821 = vsel %vm3820, %v3813, %v3817
        %v3822 = vand.u32 2147483647, %v3725
        %vm3823 = vcmp.eq.f32.partialorder %v3822, 8.507059e+37
        %v3824 = vand.u32 %v3725, 2147483648
        %v3825 = vor.u32 1.1754944e-38, %v3824
        %v3826 = vsel %vm3823, %v3825, %v3821
        %v3827 = vrcp.pop %v3726
        %v3828 = vmul.f32 %v3726, %v3827
        %v3829 = vsub.f32 1.0, %v3828
        %v3830 = vmul.f32 %v3827, %v3829
        %v3831 = vadd.f32 %v3827, %v3830
        %vm3832 = vweird.f32 %v3726
        %vm3833 = vweird.f32 %v3827
        %vm3834 = vmor %vm3832, %vm3833
        %v3835 = vsel %vm3834, %v3827, %v3831
        %v3836 = vand.u32 2147483647, %v3726
        %vm3837 = vcmp.eq.f32.partialorder %v3836, 8.507059e+37
        %v3838 = vand.u32 %v3726, 2147483648
        %v3839 = vor.u32 1.1754944e-38, %v3838
        %v3840 = vsel %vm3837, %v3839, %v3835
        %v3841 = vrcp.pop %v3727
        %v3842 = vmul.f32 %v3727, %v3841
        %v3843 = vsub.f32 1.0, %v3842
        %v3844 = vmul.f32 %v3841, %v3843
        %v3845 = vadd.f32 %v3841, %v3844
        %vm3846 = vweird.f32 %v3727
        %vm3847 = vweird.f32 %v3841
        %vm3848 = vmor %vm3846, %vm3847
        %v3849 = vsel %vm3848, %v3841, %v3845
        %v3850 = vand.u32 2147483647, %v3727
        %vm3851 = vcmp.eq.f32.partialorder %v3850, 8.507059e+37
        %v3852 = vand.u32 %v3727, 2147483648
        %v3853 = vor.u32 1.1754944e-38, %v3852
        %v3854 = vsel %vm3851, %v3853, %v3849
        %v3855 = vrcp.pop %v3728
        %v3856 = vmul.f32 %v3728, %v3855
        %v3857 = vsub.f32 1.0, %v3856
        %v3858 = vmul.f32 %v3855, %v3857
        %v3859 = vadd.f32 %v3855, %v3858
        %vm3860 = vweird.f32 %v3728
        %vm3861 = vweird.f32 %v3855
        %vm3862 = vmor %vm3860, %vm3861
        %v3863 = vsel %vm3862, %v3855, %v3859
        %v3864 = vand.u32 2147483647, %v3728
        %vm3865 = vcmp.eq.f32.partialorder %v3864, 8.507059e+37
        %v3866 = vand.u32 %v3728, 2147483648
        %v3867 = vor.u32 1.1754944e-38, %v3866
        %v3868 = vsel %vm3865, %v3867, %v3863
        %v3869 = vmul.f32 %v3669, %v3742
        %v3870 = vmul.f32 %v3670, %v3756
        %v3871 = vmul.f32 %v3671, %v3770
        %v3872 = vmul.f32 %v3672, %v3784
        %v3873 = vmul.f32 %v3673, %v3798
        %v3874 = vmul.f32 %v3674, %v3812
        %v3875 = vmul.f32 %v3675, %v3826
        %v3876 = vmul.f32 %v3676, %v3840
        %v3877 = vmul.f32 %v3677, %v3854
        %v3878 = vmul.f32 %v3678, %v3868
        %v3879 = vpack.c.bf16 %v3869, %v3869
        %v3880 = vpack.c.bf16 %v3870, %v3870
        %v3881 = vpack.c.bf16 %v3871, %v3871
        %v3882 = vpack.c.bf16 %v3872, %v3872
        %v3883 = vpack.c.bf16 %v3873, %v3873
        %v3884 = vpack.c.bf16 %v3874, %v3874
        %v3885 = vpack.c.bf16 %v3875, %v3875
        %v3886 = vpack.c.bf16 %v3876, %v3876
        %v3887 = vpack.c.bf16 %v3877, %v3877
        %v3888 = vpack.c.bf16 %v3878, %v3878
        %v3899 = vunpack.c.l.b16 %v3879
        %v3900 = vunpack.c.l.b16 %v3880
        %v3901 = vunpack.c.l.b16 %v3881
        %v3902 = vunpack.c.l.b16 %v3882
        %v3903 = vunpack.c.l.b16 %v3883
        %v3904 = vunpack.c.l.b16 %v3884
        %v3905 = vunpack.c.l.b16 %v3885
        %v3906 = vunpack.c.l.b16 %v3886
        %v3907 = vunpack.c.l.b16 %v3887
        %v3908 = vunpack.c.l.b16 %v3888
        %v3909 = vpack.c.b16 %v3900, %v3899
        %v3910 = vpack.c.b16 %v3902, %v3901
        %v3911 = vpack.c.b16 %v3904, %v3903
        %v3912 = vpack.c.b16 %v3906, %v3905
        %v3913 = vpack.c.b16 %v3908, %v3907
        %v3915 = vsel %vm1290, %v3909, 0
        %v3918 = vsel %vm1290, %v3910, 0
        %v3921 = vsel %vm1290, %v3911, 0
        %v3924 = vsel %vm1290, %v3912, 0
        %v3927 = vsel %vm1290, %v3913, 0
        %v3930 = vsel %vm1644, %v3504, 0
        %3932 = vmatpush.bf16.msra.mxu0 0
        %3933 = vmatpush.bf16.msra.mxu0 0
        %3934 = vmatpush.bf16.msra.mxu0 0
        %3935 = vmatpush.bf16.msra.mxu0 0
        %3936 = vmatpush.bf16.msra.mxu0 0
        %3937 = vmatpush.bf16.msra.mxu0 0
        %3938 = vmatpush.bf16.msra.mxu0 0
        %3939 = vmatpush.bf16.msra.mxu0 %v3930
        %3940 = vmatmul.bf16.gmra.mxu0 %v3915
        %v3941 = vpop.f32.mrf.mxu0
        %v3942 = vadd.f32 0.0, %v3941
        %v3943 = vpop.f32.mrf.mxu0
        %v3944 = vadd.f32 0.0, %v3943
        %3945 = vmatmul.bf16.gmra.mxu0 %v3918
        %v3946 = vpop.f32.mrf.mxu0
        %v3947 = vadd.f32 0.0, %v3946
        %v3948 = vpop.f32.mrf.mxu0
        %v3949 = vadd.f32 0.0, %v3948
        %3950 = vmatmul.bf16.gmra.mxu0 %v3921
        %v3951 = vpop.f32.mrf.mxu0
        %v3952 = vadd.f32 0.0, %v3951
        %v3953 = vpop.f32.mrf.mxu0
        %v3954 = vadd.f32 0.0, %v3953
        %3955 = vmatmul.bf16.gmra.mxu0 %v3924
        %v3956 = vpop.f32.mrf.mxu0
        %v3957 = vadd.f32 0.0, %v3956
        %v3958 = vpop.f32.mrf.mxu0
        %v3959 = vadd.f32 0.0, %v3958
        %3960 = vmatmul.bf16.gmra.mxu0 %v3927
        %v3961 = vpop.f32.mrf.mxu0
        %v3962 = vadd.f32 0.0, %v3961
        %v3963 = vpop.f32.mrf.mxu0
        %v3964 = vadd.f32 0.0, %v3963
        %3965 = vdwg.mxu0
        %v3966 = vmul.f32 %v3480, %v3942
        %v3967 = vmul.f32 %v3482, %v3944
        %v3968 = vmul.f32 %v3485, %v3947
        %v3969 = vmul.f32 %v3487, %v3949
        %v3970 = vmul.f32 %v3490, %v3952
        %v3971 = vmul.f32 %v3492, %v3954
        %v3972 = vmul.f32 %v3495, %v3957
        %v3973 = vmul.f32 %v3497, %v3959
        %v3974 = vmul.f32 %v3500, %v3962
        %v3975 = vmul.f32 %v3502, %v3964
        %v3976 = vmul.f32 %v3966, %v3392
        %v3977 = vmul.f32 %v3967, %v3394
        %v3978 = vmul.f32 %v3968, %v3397
        %v3979 = vmul.f32 %v3969, %v3399
        %v3980 = vmul.f32 %v3970, %v3402
        %v3981 = vmul.f32 %v3971, %v3404
        %v3982 = vmul.f32 %v3972, %v3407
        %v3983 = vmul.f32 %v3973, %v3409
        %v3984 = vmul.f32 %v3974, %v3412
        %v3985 = vmul.f32 %v3975, %v3414
        %v3986 = vadd.f32 %v3016, %v3976
        %v3987 = vadd.f32 %v3018, %v3977
        %v3988 = vadd.f32 %v3986, %v3978
        %v3989 = vadd.f32 %v3987, %v3979
        %v3990 = vadd.f32 %v3988, %v3980
        %v3991 = vadd.f32 %v3989, %v3981
        %v3992 = vadd.f32 %v3990, %v3982
        %v3993 = vadd.f32 %v3991, %v3983
        %v3994 = vadd.f32 %v3992, %v3984
        %v3995 = vadd.f32 %v3993, %v3985
        %v3996 = vmax.f32 %v3994, 0.0
        %v3997 = vmax.f32 %v3995, 0.0
        %3998 = vst [vmem:[%s468] sm:$0xff] %v3996
        %3999 = vst [vmem:[%s468 + $0x8] sm:$0xff] %v3997
        %v4000 = vld [vmem:[%s9] sm:$0x1]
        %v4002 = vperm.slane %v4000, 0
        %v4004 = vmul.f32 %v3996, %v4002
        %v4005 = vmul.f32 %v3997, %v4002
        %4006 = vadd.xlane.f32.xlu0 %v4004
        %v4007 = vpop.xlane.xlu0 %4006
        %4008 = vadd.xlane.f32.xlu0 %v4005
        %v4009 = vpop.xlane.xlu0 %4008
        %v4010 = vld [vmem:[#allocation2] sm:$0x1]
        %4012 = vset.pattern.permute.xlu0 0
        %4013 = vperm.xlu0 %4012, %v4010
        %v4014 = vpop.permute.xlu0 %4013
        %v4016 = vperm.slane %v4014, 0
        %v4017 = vadd.f32 %v4007, %v4016
        %v4018 = vadd.f32 %v4009, %v4016
        %v4021 = vlaneseq
        %v4022 = vand.u32 %v4021, 127
        %v4023 = vperm.slane %v4017, %v4022
        %v4024 = vadd.s32 %v4022, 4294967288
        %v4025 = vperm.slane %v4018, %v4024
        %vm4026 = vcmask 130112
        %v4027 = vsel %vm4026, %v4025, %v4023
        %vm4029 = vcmask 122880
        %4030 = vst.msk [vmem:[%s474] sm:$0x1] %vm4029, %v4027
        %s4031 = sand.u32 %s296, 1
        %s4032 = scalar_lea.sflag [#allocation4], %s4031
        %s4033 = sand.u32 %s296, 1
        %s4034 = smul.addr %s4033, 16
        %s4035 = scalar_lea.vmem [#allocation3], %s4034
        %s4036 = sand.u32 %s322, 1
        %s4037 = scalar_lea.sflag [#allocation6], %s4036
        %s4038 = sand.u32 %s322, 1
        %s4039 = scalar_lea.vmem [#allocation5], %s4038
        // Predicated region
        $region65: #{_block_forward.1} parent=63 // pred_check
          %p4040 = pneg %p306
        $region66: #{_block_forward.1} parent=63 // pred_check_branch
          %4042 = sbr.rel (%p4040) target = $region68
        $region67: #{_block_forward.1} parent=63 // pred_region
          %4044 = vsyncadd %s4032, 0
          %s4045 = smul.addr %s32, 2
          %s4046 = smul.addr %s4045, 8
          %s4047 = scalar_lea.hbm %s11, %s4046
          %s4048 = sshll.u32 %s4035, 4
          %s4049 = int_to_ptr.vmem [resolvable:$true] %s4048
          %s4050 = sshll.u32 %s4047, 4
          %s4051 = int_to_ptr.hbm [resolvable:$true] %s4050
          %4056 = dma.vmem_to_hbm [thread:$0]  %s4049, 256, %s4051, %s4032, 128, 128, 8
        $region68: #{_block_forward.1} parent=63 // pred_fallthru
          _
        // Predicated region
        $region69: #{_block_forward.1} parent=63 // pred_check
          %p4057 = pneg %p332
        $region70: #{_block_forward.1} parent=63 // pred_check_branch
          %4059 = sbr.rel (%p4057) target = $region72
        $region71: #{_block_forward.1} parent=63 // pred_region
          %4061 = vsyncadd %s4037, 0
          %s4062 = scalar_lea.hbm %s12, %s32
          %s4064 = sshll.u32 %s4039, 4
          %s4065 = int_to_ptr.vmem [resolvable:$true] %s4064
          %s4066 = sshll.u32 %s4062, 4
          %s4067 = int_to_ptr.hbm [resolvable:$true] %s4066
          %4069 = dma.vmem_to_hbm [thread:$0]  %s4065, 16, %s4067, %s4037
        $region72: #{_block_forward.1} parent=63 // pred_fallthru
          _
      $region64: #{_block_forward.1} parent=5 // pred_fallthru
        _
      %p4070 = scmp.le.s32.totalorder 2, %s27
      // Predicated region
      $region73: #{_block_forward.1} parent=5 // pred_check
        %p4071 = pneg %p4070
      $region74: #{_block_forward.1} parent=5 // pred_check_branch
        %4073 = sbr.rel (%p4071) target = $region76
      $region75: #{_block_forward.1} parent=5 // pred_region
        %s4074 = ssub.s32 %s27, 2
        // Predicated region
        $region77: #{_block_forward.1} parent=75 // pred_check
          %p4075 = pneg %p312
        $region78: #{_block_forward.1} parent=75 // pred_check_branch
          %4077 = sbr.rel (%p4075) target = $region80
        $region79: #{_block_forward.1} parent=75 // pred_region
          %s4078 = sand.u32 %s297, 1
          %s4079 = scalar_lea.sflag [#allocation4], %s4078
          %s4080 = sand.u32 %s297, 1
          %s4081 = smul.addr %s4080, 16
          %s4082 = scalar_lea.vmem [#allocation3], %s4081
          %4084 = dma.done %s4079, 256
        $region80: #{_block_forward.1} parent=75 // pred_fallthru
          _
        // Predicated region
        $region81: #{_block_forward.1} parent=75 // pred_check
          %p4085 = pneg %p338
        $region82: #{_block_forward.1} parent=75 // pred_check_branch
          %4087 = sbr.rel (%p4085) target = $region84
        $region83: #{_block_forward.1} parent=75 // pred_region
          %s4088 = sand.u32 %s323, 1
          %s4089 = scalar_lea.sflag [#allocation6], %s4088
          %s4090 = sand.u32 %s323, 1
          %s4091 = scalar_lea.vmem [#allocation5], %s4090
          %4093 = dma.done %s4089, 16
        $region84: #{_block_forward.1} parent=75 // pred_fallthru
          _
      $region76: #{_block_forward.1} parent=5 // pred_fallthru
        _
    $region6: #{_block_forward.1} parent=1 // loop_footer
      %s31 = sadd.s32 1, %s27
    $region7: #{_block_forward.1} parent=1 // loop_footer_branch
      %26 = sbr.rel target = $region3
    $region8: #{_block_forward.1} parent=1 // loop_exit
      _
    %4094 = vsyncpa [#allocation4], 1
    %s4095 = scalar_lea.sflag [#allocation4], 1
    %4096 = vsyncpa %s4095, 1
    %4097 = vsyncpa [#allocation6], 1
    %s4098 = scalar_lea.sflag [#allocation6], 1
    %4099 = vsyncpa %s4098, 1

</llo_original>
